<compile_context>
chip_gen: v7x
topology: tpu7x:2x2x1
jax: 0.10.0
libtpu: 0.0.40
codegen_flags: <defaults>
</compile_context>

<pallas_src>
import functools
import math

import jax
import jax.numpy as jnp
from jax import lax
from jax.experimental import pallas as pl
from jax.experimental.pallas import tpu as pltpu

# ----------------------------- model config (small) -----------------------------
BATCH = 2
SEQ = 8
HIDDEN = 32
NUM_HEADS = 2
HEAD_DIM = HIDDEN // NUM_HEADS
FFN = 128
VOCAB = 50
MAX_POS = 16
NUM_WRAPPED_LAYERS = 6          # q, k, v, o, ffn1, ffn2
DINT_TOTAL = 24                 # said=True  ->  dint_eff = DINT_TOTAL - NUM_WRAPPED_LAYERS
DINT = DINT_TOTAL - NUM_WRAPPED_LAYERS
LN_EPS = 1e-5

VMEM_SPEC = pl.BlockSpec(memory_space=pltpu.MemorySpace.VMEM)
SMEM_SPEC = pl.BlockSpec(memory_space=pltpu.MemorySpace.SMEM)


# ----------------------------- in-kernel helpers ---------------------------------
def _delta_wt(pw_ref, theta_ref):
    """sum_k theta[k] * Pw^T[k] via an accumulator loop (keeps a single (Din,Dout) value live)."""
    dint = pw_ref.shape[0]

    def body(k, acc):
        return acc + theta_ref[k] * pw_ref[k]

    return lax.fori_loop(0, dint, body,
                         jnp.zeros(pw_ref.shape[1:], jnp.float32),
                         unroll=True)


def _layernorm(x, g, b):
    mu = jnp.mean(x, axis=-1, keepdims=True)
    xc = x - mu
    var = jnp.mean(xc * xc, axis=-1, keepdims=True)
    return xc * lax.rsqrt(var + LN_EPS) * g + b


def _gelu(x):
    c = 0.7978845608028654
    return 0.5 * x * (1.0 + jnp.tanh(c * (x + 0.044715 * x * x * x)))


# ----------------------------- fused forward kernel ------------------------------
def _fused_forward_kernel(
    emb_ref, mask_ref,
    ln_emb_g_ref, ln_emb_b_ref, ln1_g_ref, ln1_b_ref, ln2_g_ref, ln2_b_ref,
    w_qkv_ref, b_qkv_ref, pw_qkv_ref, pb_qkv_ref,
    w_o_ref, b_o_ref, pw_o_ref, pb_o_ref,
    w_f1_ref, b_f1_ref, pw_f1_ref, pb_f1_ref,
    w_f2_ref, b_f2_ref, pw_f2_ref, pb_f2_ref,
    theta_row_ref,            # VMEM (1, dint)   — for the tiny bias-delta matmuls
    theta_ref, lam_ref,       # SMEM (dint,), (6,)
    out_ref,
):
    f32 = jnp.float32
    B, S = mask_ref.shape
    N, H = emb_ref.shape
    nh = NUM_HEADS
    hd = H // nh

    # ---- embedding LayerNorm ----
    x = _layernorm(emb_ref[...], ln_emb_g_ref[...], ln_emb_b_ref[...])          # (N, H)

    theta_row = theta_row_ref[...]                                              # (1, dint)
    lam_q, lam_k, lam_v = lam_ref[0], lam_ref[1], lam_ref[2]
    lam_o, lam_f1, lam_f2 = lam_ref[3], lam_ref[4], lam_ref[5]

    # ---- fused Q/K/V projection (Dout = 3H = 96, per-block SAID lambdas) ----
    ones_h = jnp.ones((1, H), f32)
    lam_row = jnp.concatenate(
        [lam_q * ones_h, lam_k * ones_h, lam_v * ones_h], axis=-1)              # (1, 3H)
    w_qkv = w_qkv_ref[...] + lam_row * _delta_wt(pw_qkv_ref, theta_ref)         # (H, 3H)
    b_qkv = b_qkv_ref[...] + lam_row * jnp.dot(
        theta_row, pb_qkv_ref[...], preferred_element_type=f32)                 # (1, 3H)
    qkv = jnp.dot(x, w_qkv, preferred_element_type=f32) + b_qkv                 # (N, 3H)
    q = qkv[:, 0:H]
    k = qkv[:, H:2 * H]
    v = qkv[:, 2 * H:3 * H]

    # ---- attention: all heads in-kernel; additive bias built from the (B,S) mask ----
    scale = 1.0 / math.sqrt(hd)
    m = mask_ref[...]                                                           # (B, S)
    rows = []
    for b in range(B):
        bias_row = (1.0 - m[b:b + 1, :]) * -1e9                                 # (1, S)
        r0, r1 = b * S, (b + 1) * S
        heads = []
        for h in range(nh):
            c0, c1 = h * hd, (h + 1) * hd
            qh = q[r0:r1, c0:c1]
            kh = k[r0:r1, c0:c1]
            vh = v[r0:r1, c0:c1]
            s = lax.dot_general(qh, kh, (((1,), (1,)), ((), ())),
                                preferred_element_type=f32)                     # (S, S)
            s = s * scale + bias_row
            smax = jnp.max(s, axis=-1, keepdims=True)
            p = jnp.exp(s - smax)
            p = p * pl.reciprocal(jnp.sum(p, axis=-1, keepdims=True), approx=True)
            heads.append(jnp.dot(p, vh, preferred_element_type=f32))            # (S, hd)
        rows.append(jnp.concatenate(heads, axis=-1))                            # (S, H)
    attn = jnp.concatenate(rows, axis=0)                                        # (N, H)

    # ---- output projection + residual + LN (fused) ----
    w_o = w_o_ref[...] + lam_o * _delta_wt(pw_o_ref, theta_ref)
    b_o = b_o_ref[...] + lam_o * jnp.dot(theta_row, pb_o_ref[...],
                                         preferred_element_type=f32)
    o = jnp.dot(attn, w_o, preferred_element_type=f32) + b_o
    h1 = _layernorm(x + o, ln1_g_ref[...], ln1_b_ref[...])

    # ---- FFN (GELU) + residual + LN (fused) ----
    w_f1 = w_f1_ref[...] + lam_f1 * _delta_wt(pw_f1_ref, theta_ref)
    b_f1 = b_f1_ref[...] + lam_f1 * jnp.dot(theta_row, pb_f1_ref[...],
                                            preferred_element_type=f32)
    f = _gelu(jnp.dot(h1, w_f1, preferred_element_type=f32) + b_f1)             # (N, FFN)

    w_f2 = w_f2_ref[...] + lam_f2 * _delta_wt(pw_f2_ref, theta_ref)
    b_f2 = b_f2_ref[...] + lam_f2 * jnp.dot(theta_row, pb_f2_ref[...],
                                            preferred_element_type=f32)
    f2 = jnp.dot(f, w_f2, preferred_element_type=f32) + b_f2                    # (N, H)

    out_ref[...] = _layernorm(h1 + f2, ln2_g_ref[...], ln2_b_ref[...])


# ----------------------------- wrapped forward (Pallas) --------------------------
def transformer_subspace_forward(kparams, theta, lam, input_ids, attention_mask):
    B, S = input_ids.shape
    H = HIDDEN

    # TODO(synk): embedding gather (data-dependent lookup) stays in plain JAX glue.
    emb = kparams["word_emb"][input_ids] + kparams["pos_emb"][jnp.arange(S)][None, :, :]
    emb = emb.reshape(B * S, H)
    mask = attention_mask.astype(jnp.float32)
    theta_row = theta.reshape(1, -1).astype(jnp.float32)

    out = pl.pallas_call(
        _fused_forward_kernel,
        out_shape=jax.ShapeDtypeStruct((B * S, H), jnp.float32),
        in_specs=[VMEM_SPEC] * 25 + [SMEM_SPEC] * 2,
        out_specs=VMEM_SPEC,
    )(
        emb, mask,
        kparams["ln_emb_g"], kparams["ln_emb_b"],
        kparams["ln1_g"], kparams["ln1_b"],
        kparams["ln2_g"], kparams["ln2_b"],
        kparams["qkv"]["w"], kparams["qkv"]["b"], kparams["qkv"]["pw"], kparams["qkv"]["pb"],
        kparams["o"]["w"], kparams["o"]["b"], kparams["o"]["pw"], kparams["o"]["pb"],
        kparams["ffn1"]["w"], kparams["ffn1"]["b"], kparams["ffn1"]["pw"], kparams["ffn1"]["pb"],
        kparams["ffn2"]["w"], kparams["ffn2"]["b"], kparams["ffn2"]["pw"], kparams["ffn2"]["pb"],
        theta_row, theta.astype(jnp.float32), lam.astype(jnp.float32),
    )
    return out.reshape(B, S, H)


# ----------------------------- one-time kernel-layout prep -----------------------
def prepare_kernel_params(params):
    """Pre-transpose weights to [Din,Dout] / [dint,Din,Dout] and fuse Q/K/V along Dout."""
    def prep(p):
        return dict(
            w=jnp.transpose(p["w"]),                # (Din, Dout)
            b=p["b"].reshape(1, -1),                # (1, Dout)
            pw=jnp.transpose(p["pw"], (0, 2, 1)),   # (dint, Din, Dout)
            pb=p["pb"],                             # (dint, Dout)
        )

    q, k, v = prep(params["q"]), prep(params["k"]), prep(params["v"])
    qkv = dict(
        w=jnp.concatenate([q["w"], k["w"], v["w"]], axis=1),       # (H, 3H)
        b=jnp.concatenate([q["b"], k["b"], v["b"]], axis=1),       # (1, 3H)
        pw=jnp.concatenate([q["pw"], k["pw"], v["pw"]], axis=2),   # (dint, H, 3H)
        pb=jnp.concatenate([q["pb"], k["pb"], v["pb"]], axis=1),   # (dint, 3H)
    )
    return dict(
        word_emb=params["word_emb"],
        pos_emb=params["pos_emb"],
        ln_emb_g=params["ln_emb_g"].reshape(1, -1),
        ln_emb_b=params["ln_emb_b"].reshape(1, -1),
        ln1_g=params["ln1_g"].reshape(1, -1),
        ln1_b=params["ln1_b"].reshape(1, -1),
        ln2_g=params["ln2_g"].reshape(1, -1),
        ln2_b=params["ln2_b"].reshape(1, -1),
        qkv=qkv,
        o=prep(params["o"]),
        ffn1=prep(params["ffn1"]),
        ffn2=prep(params["ffn2"]),
    )


# ----------------------------- pure-JAX reference --------------------------------
def reference_forward(params, theta, lam, input_ids, attention_mask):
    B, S = input_ids.shape
    H, nh, hd = HIDDEN, NUM_HEADS, HEAD_DIM

    def lin(name, xx, lam_i):
        p = params[name]
        w = p["w"] + lam_i * jnp.einsum("k,koi->oi", theta, p["pw"])
        b = p["b"] + lam_i * jnp.einsum("k,ko->o", theta, p["pb"])
        return xx @ w.T + b

    def ln(xx, g, b):
        mu = xx.mean(-1, keepdims=True)
        xc = xx - mu
        var = (xc * xc).mean(-1, keepdims=True)
        return xc * jax.lax.rsqrt(var + LN_EPS) * g + b

    def gelu(xx):
        c = 0.7978845608028654
        return 0.5 * xx * (1.0 + jnp.tanh(c * (xx + 0.044715 * xx ** 3)))

    emb = params["word_emb"][input_ids] + params["pos_emb"][jnp.arange(S)][None, :, :]
    x = ln(emb.reshape(B * S, H), params["ln_emb_g"], params["ln_emb_b"])

    q, k, v = lin("q", x, lam[0]), lin("k", x, lam[1]), lin("v", x, lam[2])
    sh = lambda t: t.reshape(B, S, nh, hd).transpose(0, 2, 1, 3)
    qh, kh, vh = sh(q), sh(k), sh(v)
    bias = (1.0 - attention_mask.astype(jnp.float32))[:, None, None, :] * -1e9
    s = jnp.einsum("bhqd,bhkd->bhqk", qh, kh) / math.sqrt(hd) + bias
    p = jax.nn.softmax(s, axis=-1)
    a = jnp.einsum("bhqk,bhkd->bhqd", p, vh).transpose(0, 2, 1, 3).reshape(B * S, H)

    o = lin("o", a, lam[3])
    h1 = ln(x + o, params["ln1_g"], params["ln1_b"])
    f = gelu(lin("ffn1", h1, lam[4]))
    f = lin("ffn2", f, lam[5])
    out = ln(h1 + f, params["ln2_g"], params["ln2_b"])
    return out.reshape(B, S, H)


# ----------------------------- deterministic init --------------------------------
def make_linear(key, dout, din, dint):
    k1, k2, k3, k4 = jax.random.split(key, 4)
    scale_p = 1.0 / math.sqrt(dint)
    return dict(
        w=0.02 * jax.random.normal(k1, (dout, din), jnp.float32),
        b=0.02 * jax.random.normal(k2, (dout,), jnp.float32),
        pw=scale_p * jax.random.normal(k3, (dint, dout, din), jnp.float32),
        pb=scale_p * jax.random.normal(k4, (dint, dout), jnp.float32),
    )


def init_params(key):
    keys = jax.random.split(key, 8)
    params = {
        "word_emb": 0.02 * jax.random.normal(keys[0], (VOCAB, HIDDEN), jnp.float32),
        "pos_emb": 0.02 * jax.random.normal(keys[1], (MAX_POS, HIDDEN), jnp.float32),
        "ln_emb_g": jnp.ones((HIDDEN,), jnp.float32),
        "ln_emb_b": jnp.zeros((HIDDEN,), jnp.float32),
        "ln1_g": jnp.ones((HIDDEN,), jnp.float32),
        "ln1_b": jnp.zeros((HIDDEN,), jnp.float32),
        "ln2_g": jnp.ones((HIDDEN,), jnp.float32),
        "ln2_b": jnp.zeros((HIDDEN,), jnp.float32),
        "q": make_linear(keys[2], HIDDEN, HIDDEN, DINT),
        "k": make_linear(keys[3], HIDDEN, HIDDEN, DINT),
        "v": make_linear(keys[4], HIDDEN, HIDDEN, DINT),
        "o": make_linear(keys[5], HIDDEN, HIDDEN, DINT),
        "ffn1": make_linear(keys[6], FFN, HIDDEN, DINT),
        "ffn2": make_linear(keys[7], HIDDEN, FFN, DINT),
    }
    return params


# ----------------------------- main -----------------------------------------------
if __name__ == "__main__":
    key = jax.random.PRNGKey(0)
    k_param, k_ids, k_theta = jax.random.split(key, 3)

    params = init_params(k_param)
    # One-time layout prep: pre-transposed / QKV-fused weights for the kernel.
    kparams = jax.tree_util.tree_map(lambda a: a, prepare_kernel_params(params))

    input_ids = jax.random.randint(k_ids, (BATCH, SEQ), 0, VOCAB, dtype=jnp.int32)
    attention_mask = jnp.array(
        [[1, 1, 1, 1, 1, 1, 1, 1],
         [1, 1, 1, 1, 1, 0, 0, 0]], dtype=jnp.int32)

    # Module init: theta = zeros, lambda = ones (SAID).
    theta_init = jnp.zeros((DINT,), jnp.float32)
    lam = jnp.ones((NUM_WRAPPED_LAYERS,), jnp.float32)
    # A nonzero theta to exercise the subspace reparameterization path.
    theta_test = 0.05 * jax.random.normal(k_theta, (DINT,), jnp.float32)

    fwd = jax.jit(transformer_subspace_forward)

    ok = True
    for theta in (theta_init, theta_test):
        out = jax.block_until_ready(fwd(kparams, theta, lam, input_ids, attention_mask))
        ref = reference_forward(params, theta, lam, input_ids, attention_mask)
        if not jnp.allclose(out, ref, rtol=2e-3, atol=2e-3):
            ok = False
            print("MISMATCH max abs err:", float(jnp.max(jnp.abs(out - ref))))

    if ok:
        print("KERNEL_OK")
</pallas_src>

<mosaic_0001>
module attributes {stable_mosaic.version = 11 : i64} {
  func.func @_fused_forward_kernel(%arg0: memref<16x32xf32, #tpu.memory_space<vmem>>, %arg1: memref<2x8xf32, #tpu.memory_space<vmem>>, %arg2: memref<1x32xf32, #tpu.memory_space<vmem>>, %arg3: memref<1x32xf32, #tpu.memory_space<vmem>>, %arg4: memref<1x32xf32, #tpu.memory_space<vmem>>, %arg5: memref<1x32xf32, #tpu.memory_space<vmem>>, %arg6: memref<1x32xf32, #tpu.memory_space<vmem>>, %arg7: memref<1x32xf32, #tpu.memory_space<vmem>>, %arg8: memref<32x96xf32, #tpu.memory_space<vmem>>, %arg9: memref<1x96xf32, #tpu.memory_space<vmem>>, %arg10: memref<18x32x96xf32, #tpu.memory_space<vmem>>, %arg11: memref<18x96xf32, #tpu.memory_space<vmem>>, %arg12: memref<32x32xf32, #tpu.memory_space<vmem>>, %arg13: memref<1x32xf32, #tpu.memory_space<vmem>>, %arg14: memref<18x32x32xf32, #tpu.memory_space<vmem>>, %arg15: memref<18x32xf32, #tpu.memory_space<vmem>>, %arg16: memref<32x128xf32, #tpu.memory_space<vmem>>, %arg17: memref<1x128xf32, #tpu.memory_space<vmem>>, %arg18: memref<18x32x128xf32, #tpu.memory_space<vmem>>, %arg19: memref<18x128xf32, #tpu.memory_space<vmem>>, %arg20: memref<128x32xf32, #tpu.memory_space<vmem>>, %arg21: memref<1x32xf32, #tpu.memory_space<vmem>>, %arg22: memref<18x128x32xf32, #tpu.memory_space<vmem>>, %arg23: memref<18x32xf32, #tpu.memory_space<vmem>>, %arg24: memref<1x18xf32, #tpu.memory_space<vmem>>, %arg25: memref<18xf32, #tpu.memory_space<smem>>, %arg26: memref<6xf32, #tpu.memory_space<smem>>, %arg27: memref<16x32xf32, #tpu.memory_space<vmem>>) attributes {dimension_semantics = [], scalar_prefetch = 0 : i64, scratch_operands = 0 : i64, tpu.core_type = #tpu.core_type<tc>} {
    %c0 = arith.constant 0 : index
    %c0_0 = arith.constant 0 : index
    %0 = vector.load %arg0[%c0, %c0_0] : memref<16x32xf32, #tpu.memory_space<vmem>>, vector<16x32xf32>
    %c0_1 = arith.constant 0 : index
    %c0_2 = arith.constant 0 : index
    %1 = vector.load %arg2[%c0_1, %c0_2] : memref<1x32xf32, #tpu.memory_space<vmem>>, vector<1x32xf32>
    %c0_3 = arith.constant 0 : index
    %c0_4 = arith.constant 0 : index
    %2 = vector.load %arg3[%c0_3, %c0_4] : memref<1x32xf32, #tpu.memory_space<vmem>>, vector<1x32xf32>
    %cst = arith.constant dense<0.000000e+00> : vector<16xf32>
    %3 = vector.multi_reduction <add>, %0, %cst [1] : vector<16x32xf32> to vector<16xf32>
    %4 = vector.shape_cast %3 : vector<16xf32> to vector<16x1xf32>
    %cst_5 = arith.constant 3.200000e+01 : f32
    %5 = vector.broadcast %cst_5 : f32 to vector<16x1xf32>
    %6 = arith.divf %4, %5 : vector<16x1xf32>
    %7 = vector.broadcast %6 : vector<16x1xf32> to vector<16x32xf32>
    %8 = arith.subf %0, %7 : vector<16x32xf32>
    %9 = arith.mulf %8, %8 : vector<16x32xf32>
    %cst_6 = arith.constant dense<0.000000e+00> : vector<16xf32>
    %10 = vector.multi_reduction <add>, %9, %cst_6 [1] : vector<16x32xf32> to vector<16xf32>
    %11 = vector.shape_cast %10 : vector<16xf32> to vector<16x1xf32>
    %cst_7 = arith.constant 3.200000e+01 : f32
    %12 = vector.broadcast %cst_7 : f32 to vector<16x1xf32>
    %13 = arith.divf %11, %12 : vector<16x1xf32>
    %cst_8 = arith.constant 9.99999974E-6 : f32
    %14 = vector.broadcast %cst_8 : f32 to vector<16x1xf32>
    %15 = arith.addf %13, %14 : vector<16x1xf32>
    %16 = math.rsqrt %15 : vector<16x1xf32>
    %17 = vector.broadcast %16 : vector<16x1xf32> to vector<16x32xf32>
    %18 = arith.mulf %8, %17 : vector<16x32xf32>
    %19 = vector.broadcast %1 : vector<1x32xf32> to vector<16x32xf32>
    %20 = arith.mulf %18, %19 : vector<16x32xf32>
    %21 = vector.broadcast %2 : vector<1x32xf32> to vector<16x32xf32>
    %22 = arith.addf %20, %21 : vector<16x32xf32>
    %c0_9 = arith.constant 0 : index
    %c0_10 = arith.constant 0 : index
    %23 = vector.load %arg24[%c0_9, %c0_10] : memref<1x18xf32, #tpu.memory_space<vmem>>, vector<1x18xf32>
    %c0_11 = arith.constant 0 : index
    %24 = memref.load %arg26[%c0_11] : memref<6xf32, #tpu.memory_space<smem>>
    %c1 = arith.constant 1 : index
    %25 = memref.load %arg26[%c1] : memref<6xf32, #tpu.memory_space<smem>>
    %c2 = arith.constant 2 : index
    %26 = memref.load %arg26[%c2] : memref<6xf32, #tpu.memory_space<smem>>
    %c3 = arith.constant 3 : index
    %27 = memref.load %arg26[%c3] : memref<6xf32, #tpu.memory_space<smem>>
    %c4 = arith.constant 4 : index
    %28 = memref.load %arg26[%c4] : memref<6xf32, #tpu.memory_space<smem>>
    %c5 = arith.constant 5 : index
    %29 = memref.load %arg26[%c5] : memref<6xf32, #tpu.memory_space<smem>>
    %cst_12 = arith.constant 1.000000e+00 : f32
    %30 = vector.broadcast %cst_12 : f32 to vector<1x32xf32>
    %31 = vector.broadcast %24 : f32 to vector<1x32xf32>
    %32 = arith.mulf %31, %30 : vector<1x32xf32>
    %33 = vector.broadcast %25 : f32 to vector<1x32xf32>
    %34 = arith.mulf %33, %30 : vector<1x32xf32>
    %35 = vector.broadcast %26 : f32 to vector<1x32xf32>
    %36 = arith.mulf %35, %30 : vector<1x32xf32>
    %37 = tpu.concatenate %32, %34, %36 in 1 : vector<1x32xf32>, vector<1x32xf32>, vector<1x32xf32> -> vector<1x96xf32>
    %c0_13 = arith.constant 0 : index
    %c0_14 = arith.constant 0 : index
    %38 = vector.load %arg8[%c0_13, %c0_14] : memref<32x96xf32, #tpu.memory_space<vmem>>, vector<32x96xf32>
    %cst_15 = arith.constant 0.000000e+00 : f32
    %39 = vector.broadcast %cst_15 : f32 to vector<32x96xf32>
    %c0_i32 = arith.constant 0 : i32
    %40 = arith.index_cast %c0_i32 : i32 to index
    %41 = memref.load %arg25[%40] : memref<18xf32, #tpu.memory_space<smem>>
    %42 = arith.index_cast %c0_i32 : i32 to index
    %c0_16 = arith.constant 0 : index
    %c0_17 = arith.constant 0 : index
    %43 = vector.load %arg10[%42, %c0_16, %c0_17] : memref<18x32x96xf32, #tpu.memory_space<vmem>>, vector<1x32x96xf32>
    %44 = vector.shape_cast %43 : vector<1x32x96xf32> to vector<32x96xf32>
    %45 = vector.broadcast %41 : f32 to vector<32x96xf32>
    %46 = arith.mulf %45, %44 : vector<32x96xf32>
    %47 = arith.addf %39, %46 : vector<32x96xf32>
    %c1_i32 = arith.constant 1 : i32
    %48 = arith.index_cast %c1_i32 : i32 to index
    %49 = memref.load %arg25[%48] : memref<18xf32, #tpu.memory_space<smem>>
    %50 = arith.index_cast %c1_i32 : i32 to index
    %c0_18 = arith.constant 0 : index
    %c0_19 = arith.constant 0 : index
    %51 = vector.load %arg10[%50, %c0_18, %c0_19] : memref<18x32x96xf32, #tpu.memory_space<vmem>>, vector<1x32x96xf32>
    %52 = vector.shape_cast %51 : vector<1x32x96xf32> to vector<32x96xf32>
    %53 = vector.broadcast %49 : f32 to vector<32x96xf32>
    %54 = arith.mulf %53, %52 : vector<32x96xf32>
    %55 = arith.addf %47, %54 : vector<32x96xf32>
    %c2_i32 = arith.constant 2 : i32
    %56 = arith.index_cast %c2_i32 : i32 to index
    %57 = memref.load %arg25[%56] : memref<18xf32, #tpu.memory_space<smem>>
    %58 = arith.index_cast %c2_i32 : i32 to index
    %c0_20 = arith.constant 0 : index
    %c0_21 = arith.constant 0 : index
    %59 = vector.load %arg10[%58, %c0_20, %c0_21] : memref<18x32x96xf32, #tpu.memory_space<vmem>>, vector<1x32x96xf32>
    %60 = vector.shape_cast %59 : vector<1x32x96xf32> to vector<32x96xf32>
    %61 = vector.broadcast %57 : f32 to vector<32x96xf32>
    %62 = arith.mulf %61, %60 : vector<32x96xf32>
    %63 = arith.addf %55, %62 : vector<32x96xf32>
    %c3_i32 = arith.constant 3 : i32
    %64 = arith.index_cast %c3_i32 : i32 to index
    %65 = memref.load %arg25[%64] : memref<18xf32, #tpu.memory_space<smem>>
    %66 = arith.index_cast %c3_i32 : i32 to index
    %c0_22 = arith.constant 0 : index
    %c0_23 = arith.constant 0 : index
    %67 = vector.load %arg10[%66, %c0_22, %c0_23] : memref<18x32x96xf32, #tpu.memory_space<vmem>>, vector<1x32x96xf32>
    %68 = vector.shape_cast %67 : vector<1x32x96xf32> to vector<32x96xf32>
    %69 = vector.broadcast %65 : f32 to vector<32x96xf32>
    %70 = arith.mulf %69, %68 : vector<32x96xf32>
    %71 = arith.addf %63, %70 : vector<32x96xf32>
    %c4_i32 = arith.constant 4 : i32
    %72 = arith.index_cast %c4_i32 : i32 to index
    %73 = memref.load %arg25[%72] : memref<18xf32, #tpu.memory_space<smem>>
    %74 = arith.index_cast %c4_i32 : i32 to index
    %c0_24 = arith.constant 0 : index
    %c0_25 = arith.constant 0 : index
    %75 = vector.load %arg10[%74, %c0_24, %c0_25] : memref<18x32x96xf32, #tpu.memory_space<vmem>>, vector<1x32x96xf32>
    %76 = vector.shape_cast %75 : vector<1x32x96xf32> to vector<32x96xf32>
    %77 = vector.broadcast %73 : f32 to vector<32x96xf32>
    %78 = arith.mulf %77, %76 : vector<32x96xf32>
    %79 = arith.addf %71, %78 : vector<32x96xf32>
    %c5_i32 = arith.constant 5 : i32
    %80 = arith.index_cast %c5_i32 : i32 to index
    %81 = memref.load %arg25[%80] : memref<18xf32, #tpu.memory_space<smem>>
    %82 = arith.index_cast %c5_i32 : i32 to index
    %c0_26 = arith.constant 0 : index
    %c0_27 = arith.constant 0 : index
    %83 = vector.load %arg10[%82, %c0_26, %c0_27] : memref<18x32x96xf32, #tpu.memory_space<vmem>>, vector<1x32x96xf32>
    %84 = vector.shape_cast %83 : vector<1x32x96xf32> to vector<32x96xf32>
    %85 = vector.broadcast %81 : f32 to vector<32x96xf32>
    %86 = arith.mulf %85, %84 : vector<32x96xf32>
    %87 = arith.addf %79, %86 : vector<32x96xf32>
    %c6_i32 = arith.constant 6 : i32
    %88 = arith.index_cast %c6_i32 : i32 to index
    %89 = memref.load %arg25[%88] : memref<18xf32, #tpu.memory_space<smem>>
    %90 = arith.index_cast %c6_i32 : i32 to index
    %c0_28 = arith.constant 0 : index
    %c0_29 = arith.constant 0 : index
    %91 = vector.load %arg10[%90, %c0_28, %c0_29] : memref<18x32x96xf32, #tpu.memory_space<vmem>>, vector<1x32x96xf32>
    %92 = vector.shape_cast %91 : vector<1x32x96xf32> to vector<32x96xf32>
    %93 = vector.broadcast %89 : f32 to vector<32x96xf32>
    %94 = arith.mulf %93, %92 : vector<32x96xf32>
    %95 = arith.addf %87, %94 : vector<32x96xf32>
    %c7_i32 = arith.constant 7 : i32
    %96 = arith.index_cast %c7_i32 : i32 to index
    %97 = memref.load %arg25[%96] : memref<18xf32, #tpu.memory_space<smem>>
    %98 = arith.index_cast %c7_i32 : i32 to index
    %c0_30 = arith.constant 0 : index
    %c0_31 = arith.constant 0 : index
    %99 = vector.load %arg10[%98, %c0_30, %c0_31] : memref<18x32x96xf32, #tpu.memory_space<vmem>>, vector<1x32x96xf32>
    %100 = vector.shape_cast %99 : vector<1x32x96xf32> to vector<32x96xf32>
    %101 = vector.broadcast %97 : f32 to vector<32x96xf32>
    %102 = arith.mulf %101, %100 : vector<32x96xf32>
    %103 = arith.addf %95, %102 : vector<32x96xf32>
    %c8_i32 = arith.constant 8 : i32
    %104 = arith.index_cast %c8_i32 : i32 to index
    %105 = memref.load %arg25[%104] : memref<18xf32, #tpu.memory_space<smem>>
    %106 = arith.index_cast %c8_i32 : i32 to index
    %c0_32 = arith.constant 0 : index
    %c0_33 = arith.constant 0 : index
    %107 = vector.load %arg10[%106, %c0_32, %c0_33] : memref<18x32x96xf32, #tpu.memory_space<vmem>>, vector<1x32x96xf32>
    %108 = vector.shape_cast %107 : vector<1x32x96xf32> to vector<32x96xf32>
    %109 = vector.broadcast %105 : f32 to vector<32x96xf32>
    %110 = arith.mulf %109, %108 : vector<32x96xf32>
    %111 = arith.addf %103, %110 : vector<32x96xf32>
    %c9_i32 = arith.constant 9 : i32
    %112 = arith.index_cast %c9_i32 : i32 to index
    %113 = memref.load %arg25[%112] : memref<18xf32, #tpu.memory_space<smem>>
    %114 = arith.index_cast %c9_i32 : i32 to index
    %c0_34 = arith.constant 0 : index
    %c0_35 = arith.constant 0 : index
    %115 = vector.load %arg10[%114, %c0_34, %c0_35] : memref<18x32x96xf32, #tpu.memory_space<vmem>>, vector<1x32x96xf32>
    %116 = vector.shape_cast %115 : vector<1x32x96xf32> to vector<32x96xf32>
    %117 = vector.broadcast %113 : f32 to vector<32x96xf32>
    %118 = arith.mulf %117, %116 : vector<32x96xf32>
    %119 = arith.addf %111, %118 : vector<32x96xf32>
    %c10_i32 = arith.constant 10 : i32
    %120 = arith.index_cast %c10_i32 : i32 to index
    %121 = memref.load %arg25[%120] : memref<18xf32, #tpu.memory_space<smem>>
    %122 = arith.index_cast %c10_i32 : i32 to index
    %c0_36 = arith.constant 0 : index
    %c0_37 = arith.constant 0 : index
    %123 = vector.load %arg10[%122, %c0_36, %c0_37] : memref<18x32x96xf32, #tpu.memory_space<vmem>>, vector<1x32x96xf32>
    %124 = vector.shape_cast %123 : vector<1x32x96xf32> to vector<32x96xf32>
    %125 = vector.broadcast %121 : f32 to vector<32x96xf32>
    %126 = arith.mulf %125, %124 : vector<32x96xf32>
    %127 = arith.addf %119, %126 : vector<32x96xf32>
    %c11_i32 = arith.constant 11 : i32
    %128 = arith.index_cast %c11_i32 : i32 to index
    %129 = memref.load %arg25[%128] : memref<18xf32, #tpu.memory_space<smem>>
    %130 = arith.index_cast %c11_i32 : i32 to index
    %c0_38 = arith.constant 0 : index
    %c0_39 = arith.constant 0 : index
    %131 = vector.load %arg10[%130, %c0_38, %c0_39] : memref<18x32x96xf32, #tpu.memory_space<vmem>>, vector<1x32x96xf32>
    %132 = vector.shape_cast %131 : vector<1x32x96xf32> to vector<32x96xf32>
    %133 = vector.broadcast %129 : f32 to vector<32x96xf32>
    %134 = arith.mulf %133, %132 : vector<32x96xf32>
    %135 = arith.addf %127, %134 : vector<32x96xf32>
    %c12_i32 = arith.constant 12 : i32
    %136 = arith.index_cast %c12_i32 : i32 to index
    %137 = memref.load %arg25[%136] : memref<18xf32, #tpu.memory_space<smem>>
    %138 = arith.index_cast %c12_i32 : i32 to index
    %c0_40 = arith.constant 0 : index
    %c0_41 = arith.constant 0 : index
    %139 = vector.load %arg10[%138, %c0_40, %c0_41] : memref<18x32x96xf32, #tpu.memory_space<vmem>>, vector<1x32x96xf32>
    %140 = vector.shape_cast %139 : vector<1x32x96xf32> to vector<32x96xf32>
    %141 = vector.broadcast %137 : f32 to vector<32x96xf32>
    %142 = arith.mulf %141, %140 : vector<32x96xf32>
    %143 = arith.addf %135, %142 : vector<32x96xf32>
    %c13_i32 = arith.constant 13 : i32
    %144 = arith.index_cast %c13_i32 : i32 to index
    %145 = memref.load %arg25[%144] : memref<18xf32, #tpu.memory_space<smem>>
    %146 = arith.index_cast %c13_i32 : i32 to index
    %c0_42 = arith.constant 0 : index
    %c0_43 = arith.constant 0 : index
    %147 = vector.load %arg10[%146, %c0_42, %c0_43] : memref<18x32x96xf32, #tpu.memory_space<vmem>>, vector<1x32x96xf32>
    %148 = vector.shape_cast %147 : vector<1x32x96xf32> to vector<32x96xf32>
    %149 = vector.broadcast %145 : f32 to vector<32x96xf32>
    %150 = arith.mulf %149, %148 : vector<32x96xf32>
    %151 = arith.addf %143, %150 : vector<32x96xf32>
    %c14_i32 = arith.constant 14 : i32
    %152 = arith.index_cast %c14_i32 : i32 to index
    %153 = memref.load %arg25[%152] : memref<18xf32, #tpu.memory_space<smem>>
    %154 = arith.index_cast %c14_i32 : i32 to index
    %c0_44 = arith.constant 0 : index
    %c0_45 = arith.constant 0 : index
    %155 = vector.load %arg10[%154, %c0_44, %c0_45] : memref<18x32x96xf32, #tpu.memory_space<vmem>>, vector<1x32x96xf32>
    %156 = vector.shape_cast %155 : vector<1x32x96xf32> to vector<32x96xf32>
    %157 = vector.broadcast %153 : f32 to vector<32x96xf32>
    %158 = arith.mulf %157, %156 : vector<32x96xf32>
    %159 = arith.addf %151, %158 : vector<32x96xf32>
    %c15_i32 = arith.constant 15 : i32
    %160 = arith.index_cast %c15_i32 : i32 to index
    %161 = memref.load %arg25[%160] : memref<18xf32, #tpu.memory_space<smem>>
    %162 = arith.index_cast %c15_i32 : i32 to index
    %c0_46 = arith.constant 0 : index
    %c0_47 = arith.constant 0 : index
    %163 = vector.load %arg10[%162, %c0_46, %c0_47] : memref<18x32x96xf32, #tpu.memory_space<vmem>>, vector<1x32x96xf32>
    %164 = vector.shape_cast %163 : vector<1x32x96xf32> to vector<32x96xf32>
    %165 = vector.broadcast %161 : f32 to vector<32x96xf32>
    %166 = arith.mulf %165, %164 : vector<32x96xf32>
    %167 = arith.addf %159, %166 : vector<32x96xf32>
    %c16_i32 = arith.constant 16 : i32
    %168 = arith.index_cast %c16_i32 : i32 to index
    %169 = memref.load %arg25[%168] : memref<18xf32, #tpu.memory_space<smem>>
    %170 = arith.index_cast %c16_i32 : i32 to index
    %c0_48 = arith.constant 0 : index
    %c0_49 = arith.constant 0 : index
    %171 = vector.load %arg10[%170, %c0_48, %c0_49] : memref<18x32x96xf32, #tpu.memory_space<vmem>>, vector<1x32x96xf32>
    %172 = vector.shape_cast %171 : vector<1x32x96xf32> to vector<32x96xf32>
    %173 = vector.broadcast %169 : f32 to vector<32x96xf32>
    %174 = arith.mulf %173, %172 : vector<32x96xf32>
    %175 = arith.addf %167, %174 : vector<32x96xf32>
    %c17_i32 = arith.constant 17 : i32
    %176 = arith.index_cast %c17_i32 : i32 to index
    %177 = memref.load %arg25[%176] : memref<18xf32, #tpu.memory_space<smem>>
    %178 = arith.index_cast %c17_i32 : i32 to index
    %c0_50 = arith.constant 0 : index
    %c0_51 = arith.constant 0 : index
    %179 = vector.load %arg10[%178, %c0_50, %c0_51] : memref<18x32x96xf32, #tpu.memory_space<vmem>>, vector<1x32x96xf32>
    %180 = vector.shape_cast %179 : vector<1x32x96xf32> to vector<32x96xf32>
    %181 = vector.broadcast %177 : f32 to vector<32x96xf32>
    %182 = arith.mulf %181, %180 : vector<32x96xf32>
    %183 = arith.addf %175, %182 : vector<32x96xf32>
    %c18_i32 = arith.constant 18 : i32
    %184 = vector.broadcast %37 : vector<1x96xf32> to vector<32x96xf32>
    %185 = arith.mulf %184, %183 : vector<32x96xf32>
    %186 = arith.addf %38, %185 : vector<32x96xf32>
    %c0_52 = arith.constant 0 : index
    %c0_53 = arith.constant 0 : index
    %187 = vector.load %arg9[%c0_52, %c0_53] : memref<1x96xf32, #tpu.memory_space<vmem>>, vector<1x96xf32>
    %c0_54 = arith.constant 0 : index
    %c0_55 = arith.constant 0 : index
    %188 = vector.load %arg11[%c0_54, %c0_55] : memref<18x96xf32, #tpu.memory_space<vmem>>, vector<18x96xf32>
    %cst_56 = arith.constant dense<0.000000e+00> : vector<1x96xf32>
    %189 = tpu.matmul %23, %188, %cst_56 {dimension_numbers = #tpu.dot_dimension_numbers<[1], [0], [0], [1], [0, 0, 1, 1], [], []>} : vector<1x18xf32>, vector<18x96xf32>, vector<1x96xf32> -> vector<1x96xf32>
    %190 = arith.mulf %37, %189 : vector<1x96xf32>
    %191 = arith.addf %187, %190 : vector<1x96xf32>
    %cst_57 = arith.constant dense<0.000000e+00> : vector<16x96xf32>
    %192 = tpu.matmul %22, %186, %cst_57 {dimension_numbers = #tpu.dot_dimension_numbers<[1], [0], [0], [1], [0, 0, 1, 1], [], []>} : vector<16x32xf32>, vector<32x96xf32>, vector<16x96xf32> -> vector<16x96xf32>
    %193 = vector.broadcast %191 : vector<1x96xf32> to vector<16x96xf32>
    %194 = arith.addf %192, %193 : vector<16x96xf32>
    %195 = vector.extract_strided_slice %194 {offsets = [0, 0], sizes = [16, 32], strides = [1, 1]} : vector<16x96xf32> to vector<16x32xf32>
    %196 = vector.extract_strided_slice %194 {offsets = [0, 32], sizes = [16, 32], strides = [1, 1]} : vector<16x96xf32> to vector<16x32xf32>
    %197 = vector.extract_strided_slice %194 {offsets = [0, 64], sizes = [16, 32], strides = [1, 1]} : vector<16x96xf32> to vector<16x32xf32>
    %c0_58 = arith.constant 0 : index
    %c0_59 = arith.constant 0 : index
    %198 = vector.load %arg1[%c0_58, %c0_59] : memref<2x8xf32, #tpu.memory_space<vmem>>, vector<2x8xf32>
    %199 = vector.extract_strided_slice %198 {offsets = [0, 0], sizes = [1, 8], strides = [1, 1]} : vector<2x8xf32> to vector<1x8xf32>
    %cst_60 = arith.constant 1.000000e+00 : f32
    %200 = vector.broadcast %cst_60 : f32 to vector<1x8xf32>
    %201 = arith.subf %200, %199 : vector<1x8xf32>
    %cst_61 = arith.constant -1.000000e+09 : f32
    %202 = vector.broadcast %cst_61 : f32 to vector<1x8xf32>
    %203 = arith.mulf %201, %202 : vector<1x8xf32>
    %204 = vector.extract_strided_slice %195 {offsets = [0, 0], sizes = [8, 16], strides = [1, 1]} : vector<16x32xf32> to vector<8x16xf32>
    %205 = vector.extract_strided_slice %196 {offsets = [0, 0], sizes = [8, 16], strides = [1, 1]} : vector<16x32xf32> to vector<8x16xf32>
    %206 = vector.extract_strided_slice %197 {offsets = [0, 0], sizes = [8, 16], strides = [1, 1]} : vector<16x32xf32> to vector<8x16xf32>
    %cst_62 = arith.constant dense<0.000000e+00> : vector<8x8xf32>
    %207 = tpu.matmul %204, %205, %cst_62 {dimension_numbers = #tpu.dot_dimension_numbers<[1], [1], [0], [0], [0, 0, 1, 0], [], []>} : vector<8x16xf32>, vector<8x16xf32>, vector<8x8xf32> -> vector<8x8xf32>
    %cst_63 = arith.constant 2.500000e-01 : f32
    %208 = vector.broadcast %cst_63 : f32 to vector<8x8xf32>
    %209 = arith.mulf %207, %208 : vector<8x8xf32>
    %210 = vector.broadcast %203 : vector<1x8xf32> to vector<8x8xf32>
    %211 = arith.addf %209, %210 : vector<8x8xf32>
    %cst_64 = arith.constant dense<0xFF800000> : vector<8xf32>
    %212 = vector.multi_reduction <maximumf>, %211, %cst_64 [1] : vector<8x8xf32> to vector<8xf32>
    %213 = vector.shape_cast %212 : vector<8xf32> to vector<8x1xf32>
    %214 = vector.broadcast %213 : vector<8x1xf32> to vector<8x8xf32>
    %215 = arith.subf %211, %214 : vector<8x8xf32>
    %216 = math.exp %215 : vector<8x8xf32>
    %cst_65 = arith.constant dense<0.000000e+00> : vector<8xf32>
    %217 = vector.multi_reduction <add>, %216, %cst_65 [1] : vector<8x8xf32> to vector<8xf32>
    %218 = vector.shape_cast %217 : vector<8xf32> to vector<8x1xf32>
    %219 = tpu.reciprocal %218 {approx = true} : vector<8x1xf32> -> vector<8x1xf32>
    %220 = vector.broadcast %219 : vector<8x1xf32> to vector<8x8xf32>
    %221 = arith.mulf %216, %220 : vector<8x8xf32>
    %cst_66 = arith.constant dense<0.000000e+00> : vector<8x16xf32>
    %222 = tpu.matmul %221, %206, %cst_66 {dimension_numbers = #tpu.dot_dimension_numbers<[1], [0], [0], [1], [0, 0, 1, 1], [], []>} : vector<8x8xf32>, vector<8x16xf32>, vector<8x16xf32> -> vector<8x16xf32>
    %223 = vector.extract_strided_slice %195 {offsets = [0, 16], sizes = [8, 16], strides = [1, 1]} : vector<16x32xf32> to vector<8x16xf32>
    %224 = vector.extract_strided_slice %196 {offsets = [0, 16], sizes = [8, 16], strides = [1, 1]} : vector<16x32xf32> to vector<8x16xf32>
    %225 = vector.extract_strided_slice %197 {offsets = [0, 16], sizes = [8, 16], strides = [1, 1]} : vector<16x32xf32> to vector<8x16xf32>
    %cst_67 = arith.constant dense<0.000000e+00> : vector<8x8xf32>
    %226 = tpu.matmul %223, %224, %cst_67 {dimension_numbers = #tpu.dot_dimension_numbers<[1], [1], [0], [0], [0, 0, 1, 0], [], []>} : vector<8x16xf32>, vector<8x16xf32>, vector<8x8xf32> -> vector<8x8xf32>
    %cst_68 = arith.constant 2.500000e-01 : f32
    %227 = vector.broadcast %cst_68 : f32 to vector<8x8xf32>
    %228 = arith.mulf %226, %227 : vector<8x8xf32>
    %229 = vector.broadcast %203 : vector<1x8xf32> to vector<8x8xf32>
    %230 = arith.addf %228, %229 : vector<8x8xf32>
    %cst_69 = arith.constant dense<0xFF800000> : vector<8xf32>
    %231 = vector.multi_reduction <maximumf>, %230, %cst_69 [1] : vector<8x8xf32> to vector<8xf32>
    %232 = vector.shape_cast %231 : vector<8xf32> to vector<8x1xf32>
    %233 = vector.broadcast %232 : vector<8x1xf32> to vector<8x8xf32>
    %234 = arith.subf %230, %233 : vector<8x8xf32>
    %235 = math.exp %234 : vector<8x8xf32>
    %cst_70 = arith.constant dense<0.000000e+00> : vector<8xf32>
    %236 = vector.multi_reduction <add>, %235, %cst_70 [1] : vector<8x8xf32> to vector<8xf32>
    %237 = vector.shape_cast %236 : vector<8xf32> to vector<8x1xf32>
    %238 = tpu.reciprocal %237 {approx = true} : vector<8x1xf32> -> vector<8x1xf32>
    %239 = vector.broadcast %238 : vector<8x1xf32> to vector<8x8xf32>
    %240 = arith.mulf %235, %239 : vector<8x8xf32>
    %cst_71 = arith.constant dense<0.000000e+00> : vector<8x16xf32>
    %241 = tpu.matmul %240, %225, %cst_71 {dimension_numbers = #tpu.dot_dimension_numbers<[1], [0], [0], [1], [0, 0, 1, 1], [], []>} : vector<8x8xf32>, vector<8x16xf32>, vector<8x16xf32> -> vector<8x16xf32>
    %242 = tpu.concatenate %222, %241 in 1 : vector<8x16xf32>, vector<8x16xf32> -> vector<8x32xf32>
    %243 = vector.extract_strided_slice %198 {offsets = [1, 0], sizes = [1, 8], strides = [1, 1]} : vector<2x8xf32> to vector<1x8xf32>
    %cst_72 = arith.constant 1.000000e+00 : f32
    %244 = vector.broadcast %cst_72 : f32 to vector<1x8xf32>
    %245 = arith.subf %244, %243 : vector<1x8xf32>
    %cst_73 = arith.constant -1.000000e+09 : f32
    %246 = vector.broadcast %cst_73 : f32 to vector<1x8xf32>
    %247 = arith.mulf %245, %246 : vector<1x8xf32>
    %248 = vector.extract_strided_slice %195 {offsets = [8, 0], sizes = [8, 16], strides = [1, 1]} : vector<16x32xf32> to vector<8x16xf32>
    %249 = vector.extract_strided_slice %196 {offsets = [8, 0], sizes = [8, 16], strides = [1, 1]} : vector<16x32xf32> to vector<8x16xf32>
    %250 = vector.extract_strided_slice %197 {offsets = [8, 0], sizes = [8, 16], strides = [1, 1]} : vector<16x32xf32> to vector<8x16xf32>
    %cst_74 = arith.constant dense<0.000000e+00> : vector<8x8xf32>
    %251 = tpu.matmul %248, %249, %cst_74 {dimension_numbers = #tpu.dot_dimension_numbers<[1], [1], [0], [0], [0, 0, 1, 0], [], []>} : vector<8x16xf32>, vector<8x16xf32>, vector<8x8xf32> -> vector<8x8xf32>
    %cst_75 = arith.constant 2.500000e-01 : f32
    %252 = vector.broadcast %cst_75 : f32 to vector<8x8xf32>
    %253 = arith.mulf %251, %252 : vector<8x8xf32>
    %254 = vector.broadcast %247 : vector<1x8xf32> to vector<8x8xf32>
    %255 = arith.addf %253, %254 : vector<8x8xf32>
    %cst_76 = arith.constant dense<0xFF800000> : vector<8xf32>
    %256 = vector.multi_reduction <maximumf>, %255, %cst_76 [1] : vector<8x8xf32> to vector<8xf32>
    %257 = vector.shape_cast %256 : vector<8xf32> to vector<8x1xf32>
    %258 = vector.broadcast %257 : vector<8x1xf32> to vector<8x8xf32>
    %259 = arith.subf %255, %258 : vector<8x8xf32>
    %260 = math.exp %259 : vector<8x8xf32>
    %cst_77 = arith.constant dense<0.000000e+00> : vector<8xf32>
    %261 = vector.multi_reduction <add>, %260, %cst_77 [1] : vector<8x8xf32> to vector<8xf32>
    %262 = vector.shape_cast %261 : vector<8xf32> to vector<8x1xf32>
    %263 = tpu.reciprocal %262 {approx = true} : vector<8x1xf32> -> vector<8x1xf32>
    %264 = vector.broadcast %263 : vector<8x1xf32> to vector<8x8xf32>
    %265 = arith.mulf %260, %264 : vector<8x8xf32>
    %cst_78 = arith.constant dense<0.000000e+00> : vector<8x16xf32>
    %266 = tpu.matmul %265, %250, %cst_78 {dimension_numbers = #tpu.dot_dimension_numbers<[1], [0], [0], [1], [0, 0, 1, 1], [], []>} : vector<8x8xf32>, vector<8x16xf32>, vector<8x16xf32> -> vector<8x16xf32>
    %267 = vector.extract_strided_slice %195 {offsets = [8, 16], sizes = [8, 16], strides = [1, 1]} : vector<16x32xf32> to vector<8x16xf32>
    %268 = vector.extract_strided_slice %196 {offsets = [8, 16], sizes = [8, 16], strides = [1, 1]} : vector<16x32xf32> to vector<8x16xf32>
    %269 = vector.extract_strided_slice %197 {offsets = [8, 16], sizes = [8, 16], strides = [1, 1]} : vector<16x32xf32> to vector<8x16xf32>
    %cst_79 = arith.constant dense<0.000000e+00> : vector<8x8xf32>
    %270 = tpu.matmul %267, %268, %cst_79 {dimension_numbers = #tpu.dot_dimension_numbers<[1], [1], [0], [0], [0, 0, 1, 0], [], []>} : vector<8x16xf32>, vector<8x16xf32>, vector<8x8xf32> -> vector<8x8xf32>
    %cst_80 = arith.constant 2.500000e-01 : f32
    %271 = vector.broadcast %cst_80 : f32 to vector<8x8xf32>
    %272 = arith.mulf %270, %271 : vector<8x8xf32>
    %273 = vector.broadcast %247 : vector<1x8xf32> to vector<8x8xf32>
    %274 = arith.addf %272, %273 : vector<8x8xf32>
    %cst_81 = arith.constant dense<0xFF800000> : vector<8xf32>
    %275 = vector.multi_reduction <maximumf>, %274, %cst_81 [1] : vector<8x8xf32> to vector<8xf32>
    %276 = vector.shape_cast %275 : vector<8xf32> to vector<8x1xf32>
    %277 = vector.broadcast %276 : vector<8x1xf32> to vector<8x8xf32>
    %278 = arith.subf %274, %277 : vector<8x8xf32>
    %279 = math.exp %278 : vector<8x8xf32>
    %cst_82 = arith.constant dense<0.000000e+00> : vector<8xf32>
    %280 = vector.multi_reduction <add>, %279, %cst_82 [1] : vector<8x8xf32> to vector<8xf32>
    %281 = vector.shape_cast %280 : vector<8xf32> to vector<8x1xf32>
    %282 = tpu.reciprocal %281 {approx = true} : vector<8x1xf32> -> vector<8x1xf32>
    %283 = vector.broadcast %282 : vector<8x1xf32> to vector<8x8xf32>
    %284 = arith.mulf %279, %283 : vector<8x8xf32>
    %cst_83 = arith.constant dense<0.000000e+00> : vector<8x16xf32>
    %285 = tpu.matmul %284, %269, %cst_83 {dimension_numbers = #tpu.dot_dimension_numbers<[1], [0], [0], [1], [0, 0, 1, 1], [], []>} : vector<8x8xf32>, vector<8x16xf32>, vector<8x16xf32> -> vector<8x16xf32>
    %286 = tpu.concatenate %266, %285 in 1 : vector<8x16xf32>, vector<8x16xf32> -> vector<8x32xf32>
    %287 = tpu.concatenate %242, %286 in 0 : vector<8x32xf32>, vector<8x32xf32> -> vector<16x32xf32>
    %c0_84 = arith.constant 0 : index
    %c0_85 = arith.constant 0 : index
    %288 = vector.load %arg12[%c0_84, %c0_85] : memref<32x32xf32, #tpu.memory_space<vmem>>, vector<32x32xf32>
    %cst_86 = arith.constant 0.000000e+00 : f32
    %289 = vector.broadcast %cst_86 : f32 to vector<32x32xf32>
    %c0_i32_87 = arith.constant 0 : i32
    %290 = arith.index_cast %c0_i32_87 : i32 to index
    %291 = memref.load %arg25[%290] : memref<18xf32, #tpu.memory_space<smem>>
    %292 = arith.index_cast %c0_i32_87 : i32 to index
    %c0_88 = arith.constant 0 : index
    %c0_89 = arith.constant 0 : index
    %293 = vector.load %arg14[%292, %c0_88, %c0_89] : memref<18x32x32xf32, #tpu.memory_space<vmem>>, vector<1x32x32xf32>
    %294 = vector.shape_cast %293 : vector<1x32x32xf32> to vector<32x32xf32>
    %295 = vector.broadcast %291 : f32 to vector<32x32xf32>
    %296 = arith.mulf %295, %294 : vector<32x32xf32>
    %297 = arith.addf %289, %296 : vector<32x32xf32>
    %c1_i32_90 = arith.constant 1 : i32
    %298 = arith.index_cast %c1_i32_90 : i32 to index
    %299 = memref.load %arg25[%298] : memref<18xf32, #tpu.memory_space<smem>>
    %300 = arith.index_cast %c1_i32_90 : i32 to index
    %c0_91 = arith.constant 0 : index
    %c0_92 = arith.constant 0 : index
    %301 = vector.load %arg14[%300, %c0_91, %c0_92] : memref<18x32x32xf32, #tpu.memory_space<vmem>>, vector<1x32x32xf32>
    %302 = vector.shape_cast %301 : vector<1x32x32xf32> to vector<32x32xf32>
    %303 = vector.broadcast %299 : f32 to vector<32x32xf32>
    %304 = arith.mulf %303, %302 : vector<32x32xf32>
    %305 = arith.addf %297, %304 : vector<32x32xf32>
    %c2_i32_93 = arith.constant 2 : i32
    %306 = arith.index_cast %c2_i32_93 : i32 to index
    %307 = memref.load %arg25[%306] : memref<18xf32, #tpu.memory_space<smem>>
    %308 = arith.index_cast %c2_i32_93 : i32 to index
    %c0_94 = arith.constant 0 : index
    %c0_95 = arith.constant 0 : index
    %309 = vector.load %arg14[%308, %c0_94, %c0_95] : memref<18x32x32xf32, #tpu.memory_space<vmem>>, vector<1x32x32xf32>
    %310 = vector.shape_cast %309 : vector<1x32x32xf32> to vector<32x32xf32>
    %311 = vector.broadcast %307 : f32 to vector<32x32xf32>
    %312 = arith.mulf %311, %310 : vector<32x32xf32>
    %313 = arith.addf %305, %312 : vector<32x32xf32>
    %c3_i32_96 = arith.constant 3 : i32
    %314 = arith.index_cast %c3_i32_96 : i32 to index
    %315 = memref.load %arg25[%314] : memref<18xf32, #tpu.memory_space<smem>>
    %316 = arith.index_cast %c3_i32_96 : i32 to index
    %c0_97 = arith.constant 0 : index
    %c0_98 = arith.constant 0 : index
    %317 = vector.load %arg14[%316, %c0_97, %c0_98] : memref<18x32x32xf32, #tpu.memory_space<vmem>>, vector<1x32x32xf32>
    %318 = vector.shape_cast %317 : vector<1x32x32xf32> to vector<32x32xf32>
    %319 = vector.broadcast %315 : f32 to vector<32x32xf32>
    %320 = arith.mulf %319, %318 : vector<32x32xf32>
    %321 = arith.addf %313, %320 : vector<32x32xf32>
    %c4_i32_99 = arith.constant 4 : i32
    %322 = arith.index_cast %c4_i32_99 : i32 to index
    %323 = memref.load %arg25[%322] : memref<18xf32, #tpu.memory_space<smem>>
    %324 = arith.index_cast %c4_i32_99 : i32 to index
    %c0_100 = arith.constant 0 : index
    %c0_101 = arith.constant 0 : index
    %325 = vector.load %arg14[%324, %c0_100, %c0_101] : memref<18x32x32xf32, #tpu.memory_space<vmem>>, vector<1x32x32xf32>
    %326 = vector.shape_cast %325 : vector<1x32x32xf32> to vector<32x32xf32>
    %327 = vector.broadcast %323 : f32 to vector<32x32xf32>
    %328 = arith.mulf %327, %326 : vector<32x32xf32>
    %329 = arith.addf %321, %328 : vector<32x32xf32>
    %c5_i32_102 = arith.constant 5 : i32
    %330 = arith.index_cast %c5_i32_102 : i32 to index
    %331 = memref.load %arg25[%330] : memref<18xf32, #tpu.memory_space<smem>>
    %332 = arith.index_cast %c5_i32_102 : i32 to index
    %c0_103 = arith.constant 0 : index
    %c0_104 = arith.constant 0 : index
    %333 = vector.load %arg14[%332, %c0_103, %c0_104] : memref<18x32x32xf32, #tpu.memory_space<vmem>>, vector<1x32x32xf32>
    %334 = vector.shape_cast %333 : vector<1x32x32xf32> to vector<32x32xf32>
    %335 = vector.broadcast %331 : f32 to vector<32x32xf32>
    %336 = arith.mulf %335, %334 : vector<32x32xf32>
    %337 = arith.addf %329, %336 : vector<32x32xf32>
    %c6_i32_105 = arith.constant 6 : i32
    %338 = arith.index_cast %c6_i32_105 : i32 to index
    %339 = memref.load %arg25[%338] : memref<18xf32, #tpu.memory_space<smem>>
    %340 = arith.index_cast %c6_i32_105 : i32 to index
    %c0_106 = arith.constant 0 : index
    %c0_107 = arith.constant 0 : index
    %341 = vector.load %arg14[%340, %c0_106, %c0_107] : memref<18x32x32xf32, #tpu.memory_space<vmem>>, vector<1x32x32xf32>
    %342 = vector.shape_cast %341 : vector<1x32x32xf32> to vector<32x32xf32>
    %343 = vector.broadcast %339 : f32 to vector<32x32xf32>
    %344 = arith.mulf %343, %342 : vector<32x32xf32>
    %345 = arith.addf %337, %344 : vector<32x32xf32>
    %c7_i32_108 = arith.constant 7 : i32
    %346 = arith.index_cast %c7_i32_108 : i32 to index
    %347 = memref.load %arg25[%346] : memref<18xf32, #tpu.memory_space<smem>>
    %348 = arith.index_cast %c7_i32_108 : i32 to index
    %c0_109 = arith.constant 0 : index
    %c0_110 = arith.constant 0 : index
    %349 = vector.load %arg14[%348, %c0_109, %c0_110] : memref<18x32x32xf32, #tpu.memory_space<vmem>>, vector<1x32x32xf32>
    %350 = vector.shape_cast %349 : vector<1x32x32xf32> to vector<32x32xf32>
    %351 = vector.broadcast %347 : f32 to vector<32x32xf32>
    %352 = arith.mulf %351, %350 : vector<32x32xf32>
    %353 = arith.addf %345, %352 : vector<32x32xf32>
    %c8_i32_111 = arith.constant 8 : i32
    %354 = arith.index_cast %c8_i32_111 : i32 to index
    %355 = memref.load %arg25[%354] : memref<18xf32, #tpu.memory_space<smem>>
    %356 = arith.index_cast %c8_i32_111 : i32 to index
    %c0_112 = arith.constant 0 : index
    %c0_113 = arith.constant 0 : index
    %357 = vector.load %arg14[%356, %c0_112, %c0_113] : memref<18x32x32xf32, #tpu.memory_space<vmem>>, vector<1x32x32xf32>
    %358 = vector.shape_cast %357 : vector<1x32x32xf32> to vector<32x32xf32>
    %359 = vector.broadcast %355 : f32 to vector<32x32xf32>
    %360 = arith.mulf %359, %358 : vector<32x32xf32>
    %361 = arith.addf %353, %360 : vector<32x32xf32>
    %c9_i32_114 = arith.constant 9 : i32
    %362 = arith.index_cast %c9_i32_114 : i32 to index
    %363 = memref.load %arg25[%362] : memref<18xf32, #tpu.memory_space<smem>>
    %364 = arith.index_cast %c9_i32_114 : i32 to index
    %c0_115 = arith.constant 0 : index
    %c0_116 = arith.constant 0 : index
    %365 = vector.load %arg14[%364, %c0_115, %c0_116] : memref<18x32x32xf32, #tpu.memory_space<vmem>>, vector<1x32x32xf32>
    %366 = vector.shape_cast %365 : vector<1x32x32xf32> to vector<32x32xf32>
    %367 = vector.broadcast %363 : f32 to vector<32x32xf32>
    %368 = arith.mulf %367, %366 : vector<32x32xf32>
    %369 = arith.addf %361, %368 : vector<32x32xf32>
    %c10_i32_117 = arith.constant 10 : i32
    %370 = arith.index_cast %c10_i32_117 : i32 to index
    %371 = memref.load %arg25[%370] : memref<18xf32, #tpu.memory_space<smem>>
    %372 = arith.index_cast %c10_i32_117 : i32 to index
    %c0_118 = arith.constant 0 : index
    %c0_119 = arith.constant 0 : index
    %373 = vector.load %arg14[%372, %c0_118, %c0_119] : memref<18x32x32xf32, #tpu.memory_space<vmem>>, vector<1x32x32xf32>
    %374 = vector.shape_cast %373 : vector<1x32x32xf32> to vector<32x32xf32>
    %375 = vector.broadcast %371 : f32 to vector<32x32xf32>
    %376 = arith.mulf %375, %374 : vector<32x32xf32>
    %377 = arith.addf %369, %376 : vector<32x32xf32>
    %c11_i32_120 = arith.constant 11 : i32
    %378 = arith.index_cast %c11_i32_120 : i32 to index
    %379 = memref.load %arg25[%378] : memref<18xf32, #tpu.memory_space<smem>>
    %380 = arith.index_cast %c11_i32_120 : i32 to index
    %c0_121 = arith.constant 0 : index
    %c0_122 = arith.constant 0 : index
    %381 = vector.load %arg14[%380, %c0_121, %c0_122] : memref<18x32x32xf32, #tpu.memory_space<vmem>>, vector<1x32x32xf32>
    %382 = vector.shape_cast %381 : vector<1x32x32xf32> to vector<32x32xf32>
    %383 = vector.broadcast %379 : f32 to vector<32x32xf32>
    %384 = arith.mulf %383, %382 : vector<32x32xf32>
    %385 = arith.addf %377, %384 : vector<32x32xf32>
    %c12_i32_123 = arith.constant 12 : i32
    %386 = arith.index_cast %c12_i32_123 : i32 to index
    %387 = memref.load %arg25[%386] : memref<18xf32, #tpu.memory_space<smem>>
    %388 = arith.index_cast %c12_i32_123 : i32 to index
    %c0_124 = arith.constant 0 : index
    %c0_125 = arith.constant 0 : index
    %389 = vector.load %arg14[%388, %c0_124, %c0_125] : memref<18x32x32xf32, #tpu.memory_space<vmem>>, vector<1x32x32xf32>
    %390 = vector.shape_cast %389 : vector<1x32x32xf32> to vector<32x32xf32>
    %391 = vector.broadcast %387 : f32 to vector<32x32xf32>
    %392 = arith.mulf %391, %390 : vector<32x32xf32>
    %393 = arith.addf %385, %392 : vector<32x32xf32>
    %c13_i32_126 = arith.constant 13 : i32
    %394 = arith.index_cast %c13_i32_126 : i32 to index
    %395 = memref.load %arg25[%394] : memref<18xf32, #tpu.memory_space<smem>>
    %396 = arith.index_cast %c13_i32_126 : i32 to index
    %c0_127 = arith.constant 0 : index
    %c0_128 = arith.constant 0 : index
    %397 = vector.load %arg14[%396, %c0_127, %c0_128] : memref<18x32x32xf32, #tpu.memory_space<vmem>>, vector<1x32x32xf32>
    %398 = vector.shape_cast %397 : vector<1x32x32xf32> to vector<32x32xf32>
    %399 = vector.broadcast %395 : f32 to vector<32x32xf32>
    %400 = arith.mulf %399, %398 : vector<32x32xf32>
    %401 = arith.addf %393, %400 : vector<32x32xf32>
    %c14_i32_129 = arith.constant 14 : i32
    %402 = arith.index_cast %c14_i32_129 : i32 to index
    %403 = memref.load %arg25[%402] : memref<18xf32, #tpu.memory_space<smem>>
    %404 = arith.index_cast %c14_i32_129 : i32 to index
    %c0_130 = arith.constant 0 : index
    %c0_131 = arith.constant 0 : index
    %405 = vector.load %arg14[%404, %c0_130, %c0_131] : memref<18x32x32xf32, #tpu.memory_space<vmem>>, vector<1x32x32xf32>
    %406 = vector.shape_cast %405 : vector<1x32x32xf32> to vector<32x32xf32>
    %407 = vector.broadcast %403 : f32 to vector<32x32xf32>
    %408 = arith.mulf %407, %406 : vector<32x32xf32>
    %409 = arith.addf %401, %408 : vector<32x32xf32>
    %c15_i32_132 = arith.constant 15 : i32
    %410 = arith.index_cast %c15_i32_132 : i32 to index
    %411 = memref.load %arg25[%410] : memref<18xf32, #tpu.memory_space<smem>>
    %412 = arith.index_cast %c15_i32_132 : i32 to index
    %c0_133 = arith.constant 0 : index
    %c0_134 = arith.constant 0 : index
    %413 = vector.load %arg14[%412, %c0_133, %c0_134] : memref<18x32x32xf32, #tpu.memory_space<vmem>>, vector<1x32x32xf32>
    %414 = vector.shape_cast %413 : vector<1x32x32xf32> to vector<32x32xf32>
    %415 = vector.broadcast %411 : f32 to vector<32x32xf32>
    %416 = arith.mulf %415, %414 : vector<32x32xf32>
    %417 = arith.addf %409, %416 : vector<32x32xf32>
    %c16_i32_135 = arith.constant 16 : i32
    %418 = arith.index_cast %c16_i32_135 : i32 to index
    %419 = memref.load %arg25[%418] : memref<18xf32, #tpu.memory_space<smem>>
    %420 = arith.index_cast %c16_i32_135 : i32 to index
    %c0_136 = arith.constant 0 : index
    %c0_137 = arith.constant 0 : index
    %421 = vector.load %arg14[%420, %c0_136, %c0_137] : memref<18x32x32xf32, #tpu.memory_space<vmem>>, vector<1x32x32xf32>
    %422 = vector.shape_cast %421 : vector<1x32x32xf32> to vector<32x32xf32>
    %423 = vector.broadcast %419 : f32 to vector<32x32xf32>
    %424 = arith.mulf %423, %422 : vector<32x32xf32>
    %425 = arith.addf %417, %424 : vector<32x32xf32>
    %c17_i32_138 = arith.constant 17 : i32
    %426 = arith.index_cast %c17_i32_138 : i32 to index
    %427 = memref.load %arg25[%426] : memref<18xf32, #tpu.memory_space<smem>>
    %428 = arith.index_cast %c17_i32_138 : i32 to index
    %c0_139 = arith.constant 0 : index
    %c0_140 = arith.constant 0 : index
    %429 = vector.load %arg14[%428, %c0_139, %c0_140] : memref<18x32x32xf32, #tpu.memory_space<vmem>>, vector<1x32x32xf32>
    %430 = vector.shape_cast %429 : vector<1x32x32xf32> to vector<32x32xf32>
    %431 = vector.broadcast %427 : f32 to vector<32x32xf32>
    %432 = arith.mulf %431, %430 : vector<32x32xf32>
    %433 = arith.addf %425, %432 : vector<32x32xf32>
    %c18_i32_141 = arith.constant 18 : i32
    %434 = vector.broadcast %27 : f32 to vector<32x32xf32>
    %435 = arith.mulf %434, %433 : vector<32x32xf32>
    %436 = arith.addf %288, %435 : vector<32x32xf32>
    %c0_142 = arith.constant 0 : index
    %c0_143 = arith.constant 0 : index
    %437 = vector.load %arg13[%c0_142, %c0_143] : memref<1x32xf32, #tpu.memory_space<vmem>>, vector<1x32xf32>
    %c0_144 = arith.constant 0 : index
    %c0_145 = arith.constant 0 : index
    %438 = vector.load %arg15[%c0_144, %c0_145] : memref<18x32xf32, #tpu.memory_space<vmem>>, vector<18x32xf32>
    %cst_146 = arith.constant dense<0.000000e+00> : vector<1x32xf32>
    %439 = tpu.matmul %23, %438, %cst_146 {dimension_numbers = #tpu.dot_dimension_numbers<[1], [0], [0], [1], [0, 0, 1, 1], [], []>} : vector<1x18xf32>, vector<18x32xf32>, vector<1x32xf32> -> vector<1x32xf32>
    %440 = vector.broadcast %27 : f32 to vector<1x32xf32>
    %441 = arith.mulf %440, %439 : vector<1x32xf32>
    %442 = arith.addf %437, %441 : vector<1x32xf32>
    %cst_147 = arith.constant dense<0.000000e+00> : vector<16x32xf32>
    %443 = tpu.matmul %287, %436, %cst_147 {dimension_numbers = #tpu.dot_dimension_numbers<[1], [0], [0], [1], [0, 0, 1, 1], [], []>} : vector<16x32xf32>, vector<32x32xf32>, vector<16x32xf32> -> vector<16x32xf32>
    %444 = vector.broadcast %442 : vector<1x32xf32> to vector<16x32xf32>
    %445 = arith.addf %443, %444 : vector<16x32xf32>
    %446 = arith.addf %22, %445 : vector<16x32xf32>
    %c0_148 = arith.constant 0 : index
    %c0_149 = arith.constant 0 : index
    %447 = vector.load %arg4[%c0_148, %c0_149] : memref<1x32xf32, #tpu.memory_space<vmem>>, vector<1x32xf32>
    %c0_150 = arith.constant 0 : index
    %c0_151 = arith.constant 0 : index
    %448 = vector.load %arg5[%c0_150, %c0_151] : memref<1x32xf32, #tpu.memory_space<vmem>>, vector<1x32xf32>
    %cst_152 = arith.constant dense<0.000000e+00> : vector<16xf32>
    %449 = vector.multi_reduction <add>, %446, %cst_152 [1] : vector<16x32xf32> to vector<16xf32>
    %450 = vector.shape_cast %449 : vector<16xf32> to vector<16x1xf32>
    %cst_153 = arith.constant 3.200000e+01 : f32
    %451 = vector.broadcast %cst_153 : f32 to vector<16x1xf32>
    %452 = arith.divf %450, %451 : vector<16x1xf32>
    %453 = vector.broadcast %452 : vector<16x1xf32> to vector<16x32xf32>
    %454 = arith.subf %446, %453 : vector<16x32xf32>
    %455 = arith.mulf %454, %454 : vector<16x32xf32>
    %cst_154 = arith.constant dense<0.000000e+00> : vector<16xf32>
    %456 = vector.multi_reduction <add>, %455, %cst_154 [1] : vector<16x32xf32> to vector<16xf32>
    %457 = vector.shape_cast %456 : vector<16xf32> to vector<16x1xf32>
    %cst_155 = arith.constant 3.200000e+01 : f32
    %458 = vector.broadcast %cst_155 : f32 to vector<16x1xf32>
    %459 = arith.divf %457, %458 : vector<16x1xf32>
    %cst_156 = arith.constant 9.99999974E-6 : f32
    %460 = vector.broadcast %cst_156 : f32 to vector<16x1xf32>
    %461 = arith.addf %459, %460 : vector<16x1xf32>
    %462 = math.rsqrt %461 : vector<16x1xf32>
    %463 = vector.broadcast %462 : vector<16x1xf32> to vector<16x32xf32>
    %464 = arith.mulf %454, %463 : vector<16x32xf32>
    %465 = vector.broadcast %447 : vector<1x32xf32> to vector<16x32xf32>
    %466 = arith.mulf %464, %465 : vector<16x32xf32>
    %467 = vector.broadcast %448 : vector<1x32xf32> to vector<16x32xf32>
    %468 = arith.addf %466, %467 : vector<16x32xf32>
    %c0_157 = arith.constant 0 : index
    %c0_158 = arith.constant 0 : index
    %469 = vector.load %arg16[%c0_157, %c0_158] : memref<32x128xf32, #tpu.memory_space<vmem>>, vector<32x128xf32>
    %cst_159 = arith.constant 0.000000e+00 : f32
    %470 = vector.broadcast %cst_159 : f32 to vector<32x128xf32>
    %c0_i32_160 = arith.constant 0 : i32
    %471 = arith.index_cast %c0_i32_160 : i32 to index
    %472 = memref.load %arg25[%471] : memref<18xf32, #tpu.memory_space<smem>>
    %473 = arith.index_cast %c0_i32_160 : i32 to index
    %c0_161 = arith.constant 0 : index
    %c0_162 = arith.constant 0 : index
    %474 = vector.load %arg18[%473, %c0_161, %c0_162] : memref<18x32x128xf32, #tpu.memory_space<vmem>>, vector<1x32x128xf32>
    %475 = vector.shape_cast %474 : vector<1x32x128xf32> to vector<32x128xf32>
    %476 = vector.broadcast %472 : f32 to vector<32x128xf32>
    %477 = arith.mulf %476, %475 : vector<32x128xf32>
    %478 = arith.addf %470, %477 : vector<32x128xf32>
    %c1_i32_163 = arith.constant 1 : i32
    %479 = arith.index_cast %c1_i32_163 : i32 to index
    %480 = memref.load %arg25[%479] : memref<18xf32, #tpu.memory_space<smem>>
    %481 = arith.index_cast %c1_i32_163 : i32 to index
    %c0_164 = arith.constant 0 : index
    %c0_165 = arith.constant 0 : index
    %482 = vector.load %arg18[%481, %c0_164, %c0_165] : memref<18x32x128xf32, #tpu.memory_space<vmem>>, vector<1x32x128xf32>
    %483 = vector.shape_cast %482 : vector<1x32x128xf32> to vector<32x128xf32>
    %484 = vector.broadcast %480 : f32 to vector<32x128xf32>
    %485 = arith.mulf %484, %483 : vector<32x128xf32>
    %486 = arith.addf %478, %485 : vector<32x128xf32>
    %c2_i32_166 = arith.constant 2 : i32
    %487 = arith.index_cast %c2_i32_166 : i32 to index
    %488 = memref.load %arg25[%487] : memref<18xf32, #tpu.memory_space<smem>>
    %489 = arith.index_cast %c2_i32_166 : i32 to index
    %c0_167 = arith.constant 0 : index
    %c0_168 = arith.constant 0 : index
    %490 = vector.load %arg18[%489, %c0_167, %c0_168] : memref<18x32x128xf32, #tpu.memory_space<vmem>>, vector<1x32x128xf32>
    %491 = vector.shape_cast %490 : vector<1x32x128xf32> to vector<32x128xf32>
    %492 = vector.broadcast %488 : f32 to vector<32x128xf32>
    %493 = arith.mulf %492, %491 : vector<32x128xf32>
    %494 = arith.addf %486, %493 : vector<32x128xf32>
    %c3_i32_169 = arith.constant 3 : i32
    %495 = arith.index_cast %c3_i32_169 : i32 to index
    %496 = memref.load %arg25[%495] : memref<18xf32, #tpu.memory_space<smem>>
    %497 = arith.index_cast %c3_i32_169 : i32 to index
    %c0_170 = arith.constant 0 : index
    %c0_171 = arith.constant 0 : index
    %498 = vector.load %arg18[%497, %c0_170, %c0_171] : memref<18x32x128xf32, #tpu.memory_space<vmem>>, vector<1x32x128xf32>
    %499 = vector.shape_cast %498 : vector<1x32x128xf32> to vector<32x128xf32>
    %500 = vector.broadcast %496 : f32 to vector<32x128xf32>
    %501 = arith.mulf %500, %499 : vector<32x128xf32>
    %502 = arith.addf %494, %501 : vector<32x128xf32>
    %c4_i32_172 = arith.constant 4 : i32
    %503 = arith.index_cast %c4_i32_172 : i32 to index
    %504 = memref.load %arg25[%503] : memref<18xf32, #tpu.memory_space<smem>>
    %505 = arith.index_cast %c4_i32_172 : i32 to index
    %c0_173 = arith.constant 0 : index
    %c0_174 = arith.constant 0 : index
    %506 = vector.load %arg18[%505, %c0_173, %c0_174] : memref<18x32x128xf32, #tpu.memory_space<vmem>>, vector<1x32x128xf32>
    %507 = vector.shape_cast %506 : vector<1x32x128xf32> to vector<32x128xf32>
    %508 = vector.broadcast %504 : f32 to vector<32x128xf32>
    %509 = arith.mulf %508, %507 : vector<32x128xf32>
    %510 = arith.addf %502, %509 : vector<32x128xf32>
    %c5_i32_175 = arith.constant 5 : i32
    %511 = arith.index_cast %c5_i32_175 : i32 to index
    %512 = memref.load %arg25[%511] : memref<18xf32, #tpu.memory_space<smem>>
    %513 = arith.index_cast %c5_i32_175 : i32 to index
    %c0_176 = arith.constant 0 : index
    %c0_177 = arith.constant 0 : index
    %514 = vector.load %arg18[%513, %c0_176, %c0_177] : memref<18x32x128xf32, #tpu.memory_space<vmem>>, vector<1x32x128xf32>
    %515 = vector.shape_cast %514 : vector<1x32x128xf32> to vector<32x128xf32>
    %516 = vector.broadcast %512 : f32 to vector<32x128xf32>
    %517 = arith.mulf %516, %515 : vector<32x128xf32>
    %518 = arith.addf %510, %517 : vector<32x128xf32>
    %c6_i32_178 = arith.constant 6 : i32
    %519 = arith.index_cast %c6_i32_178 : i32 to index
    %520 = memref.load %arg25[%519] : memref<18xf32, #tpu.memory_space<smem>>
    %521 = arith.index_cast %c6_i32_178 : i32 to index
    %c0_179 = arith.constant 0 : index
    %c0_180 = arith.constant 0 : index
    %522 = vector.load %arg18[%521, %c0_179, %c0_180] : memref<18x32x128xf32, #tpu.memory_space<vmem>>, vector<1x32x128xf32>
    %523 = vector.shape_cast %522 : vector<1x32x128xf32> to vector<32x128xf32>
    %524 = vector.broadcast %520 : f32 to vector<32x128xf32>
    %525 = arith.mulf %524, %523 : vector<32x128xf32>
    %526 = arith.addf %518, %525 : vector<32x128xf32>
    %c7_i32_181 = arith.constant 7 : i32
    %527 = arith.index_cast %c7_i32_181 : i32 to index
    %528 = memref.load %arg25[%527] : memref<18xf32, #tpu.memory_space<smem>>
    %529 = arith.index_cast %c7_i32_181 : i32 to index
    %c0_182 = arith.constant 0 : index
    %c0_183 = arith.constant 0 : index
    %530 = vector.load %arg18[%529, %c0_182, %c0_183] : memref<18x32x128xf32, #tpu.memory_space<vmem>>, vector<1x32x128xf32>
    %531 = vector.shape_cast %530 : vector<1x32x128xf32> to vector<32x128xf32>
    %532 = vector.broadcast %528 : f32 to vector<32x128xf32>
    %533 = arith.mulf %532, %531 : vector<32x128xf32>
    %534 = arith.addf %526, %533 : vector<32x128xf32>
    %c8_i32_184 = arith.constant 8 : i32
    %535 = arith.index_cast %c8_i32_184 : i32 to index
    %536 = memref.load %arg25[%535] : memref<18xf32, #tpu.memory_space<smem>>
    %537 = arith.index_cast %c8_i32_184 : i32 to index
    %c0_185 = arith.constant 0 : index
    %c0_186 = arith.constant 0 : index
    %538 = vector.load %arg18[%537, %c0_185, %c0_186] : memref<18x32x128xf32, #tpu.memory_space<vmem>>, vector<1x32x128xf32>
    %539 = vector.shape_cast %538 : vector<1x32x128xf32> to vector<32x128xf32>
    %540 = vector.broadcast %536 : f32 to vector<32x128xf32>
    %541 = arith.mulf %540, %539 : vector<32x128xf32>
    %542 = arith.addf %534, %541 : vector<32x128xf32>
    %c9_i32_187 = arith.constant 9 : i32
    %543 = arith.index_cast %c9_i32_187 : i32 to index
    %544 = memref.load %arg25[%543] : memref<18xf32, #tpu.memory_space<smem>>
    %545 = arith.index_cast %c9_i32_187 : i32 to index
    %c0_188 = arith.constant 0 : index
    %c0_189 = arith.constant 0 : index
    %546 = vector.load %arg18[%545, %c0_188, %c0_189] : memref<18x32x128xf32, #tpu.memory_space<vmem>>, vector<1x32x128xf32>
    %547 = vector.shape_cast %546 : vector<1x32x128xf32> to vector<32x128xf32>
    %548 = vector.broadcast %544 : f32 to vector<32x128xf32>
    %549 = arith.mulf %548, %547 : vector<32x128xf32>
    %550 = arith.addf %542, %549 : vector<32x128xf32>
    %c10_i32_190 = arith.constant 10 : i32
    %551 = arith.index_cast %c10_i32_190 : i32 to index
    %552 = memref.load %arg25[%551] : memref<18xf32, #tpu.memory_space<smem>>
    %553 = arith.index_cast %c10_i32_190 : i32 to index
    %c0_191 = arith.constant 0 : index
    %c0_192 = arith.constant 0 : index
    %554 = vector.load %arg18[%553, %c0_191, %c0_192] : memref<18x32x128xf32, #tpu.memory_space<vmem>>, vector<1x32x128xf32>
    %555 = vector.shape_cast %554 : vector<1x32x128xf32> to vector<32x128xf32>
    %556 = vector.broadcast %552 : f32 to vector<32x128xf32>
    %557 = arith.mulf %556, %555 : vector<32x128xf32>
    %558 = arith.addf %550, %557 : vector<32x128xf32>
    %c11_i32_193 = arith.constant 11 : i32
    %559 = arith.index_cast %c11_i32_193 : i32 to index
    %560 = memref.load %arg25[%559] : memref<18xf32, #tpu.memory_space<smem>>
    %561 = arith.index_cast %c11_i32_193 : i32 to index
    %c0_194 = arith.constant 0 : index
    %c0_195 = arith.constant 0 : index
    %562 = vector.load %arg18[%561, %c0_194, %c0_195] : memref<18x32x128xf32, #tpu.memory_space<vmem>>, vector<1x32x128xf32>
    %563 = vector.shape_cast %562 : vector<1x32x128xf32> to vector<32x128xf32>
    %564 = vector.broadcast %560 : f32 to vector<32x128xf32>
    %565 = arith.mulf %564, %563 : vector<32x128xf32>
    %566 = arith.addf %558, %565 : vector<32x128xf32>
    %c12_i32_196 = arith.constant 12 : i32
    %567 = arith.index_cast %c12_i32_196 : i32 to index
    %568 = memref.load %arg25[%567] : memref<18xf32, #tpu.memory_space<smem>>
    %569 = arith.index_cast %c12_i32_196 : i32 to index
    %c0_197 = arith.constant 0 : index
    %c0_198 = arith.constant 0 : index
    %570 = vector.load %arg18[%569, %c0_197, %c0_198] : memref<18x32x128xf32, #tpu.memory_space<vmem>>, vector<1x32x128xf32>
    %571 = vector.shape_cast %570 : vector<1x32x128xf32> to vector<32x128xf32>
    %572 = vector.broadcast %568 : f32 to vector<32x128xf32>
    %573 = arith.mulf %572, %571 : vector<32x128xf32>
    %574 = arith.addf %566, %573 : vector<32x128xf32>
    %c13_i32_199 = arith.constant 13 : i32
    %575 = arith.index_cast %c13_i32_199 : i32 to index
    %576 = memref.load %arg25[%575] : memref<18xf32, #tpu.memory_space<smem>>
    %577 = arith.index_cast %c13_i32_199 : i32 to index
    %c0_200 = arith.constant 0 : index
    %c0_201 = arith.constant 0 : index
    %578 = vector.load %arg18[%577, %c0_200, %c0_201] : memref<18x32x128xf32, #tpu.memory_space<vmem>>, vector<1x32x128xf32>
    %579 = vector.shape_cast %578 : vector<1x32x128xf32> to vector<32x128xf32>
    %580 = vector.broadcast %576 : f32 to vector<32x128xf32>
    %581 = arith.mulf %580, %579 : vector<32x128xf32>
    %582 = arith.addf %574, %581 : vector<32x128xf32>
    %c14_i32_202 = arith.constant 14 : i32
    %583 = arith.index_cast %c14_i32_202 : i32 to index
    %584 = memref.load %arg25[%583] : memref<18xf32, #tpu.memory_space<smem>>
    %585 = arith.index_cast %c14_i32_202 : i32 to index
    %c0_203 = arith.constant 0 : index
    %c0_204 = arith.constant 0 : index
    %586 = vector.load %arg18[%585, %c0_203, %c0_204] : memref<18x32x128xf32, #tpu.memory_space<vmem>>, vector<1x32x128xf32>
    %587 = vector.shape_cast %586 : vector<1x32x128xf32> to vector<32x128xf32>
    %588 = vector.broadcast %584 : f32 to vector<32x128xf32>
    %589 = arith.mulf %588, %587 : vector<32x128xf32>
    %590 = arith.addf %582, %589 : vector<32x128xf32>
    %c15_i32_205 = arith.constant 15 : i32
    %591 = arith.index_cast %c15_i32_205 : i32 to index
    %592 = memref.load %arg25[%591] : memref<18xf32, #tpu.memory_space<smem>>
    %593 = arith.index_cast %c15_i32_205 : i32 to index
    %c0_206 = arith.constant 0 : index
    %c0_207 = arith.constant 0 : index
    %594 = vector.load %arg18[%593, %c0_206, %c0_207] : memref<18x32x128xf32, #tpu.memory_space<vmem>>, vector<1x32x128xf32>
    %595 = vector.shape_cast %594 : vector<1x32x128xf32> to vector<32x128xf32>
    %596 = vector.broadcast %592 : f32 to vector<32x128xf32>
    %597 = arith.mulf %596, %595 : vector<32x128xf32>
    %598 = arith.addf %590, %597 : vector<32x128xf32>
    %c16_i32_208 = arith.constant 16 : i32
    %599 = arith.index_cast %c16_i32_208 : i32 to index
    %600 = memref.load %arg25[%599] : memref<18xf32, #tpu.memory_space<smem>>
    %601 = arith.index_cast %c16_i32_208 : i32 to index
    %c0_209 = arith.constant 0 : index
    %c0_210 = arith.constant 0 : index
    %602 = vector.load %arg18[%601, %c0_209, %c0_210] : memref<18x32x128xf32, #tpu.memory_space<vmem>>, vector<1x32x128xf32>
    %603 = vector.shape_cast %602 : vector<1x32x128xf32> to vector<32x128xf32>
    %604 = vector.broadcast %600 : f32 to vector<32x128xf32>
    %605 = arith.mulf %604, %603 : vector<32x128xf32>
    %606 = arith.addf %598, %605 : vector<32x128xf32>
    %c17_i32_211 = arith.constant 17 : i32
    %607 = arith.index_cast %c17_i32_211 : i32 to index
    %608 = memref.load %arg25[%607] : memref<18xf32, #tpu.memory_space<smem>>
    %609 = arith.index_cast %c17_i32_211 : i32 to index
    %c0_212 = arith.constant 0 : index
    %c0_213 = arith.constant 0 : index
    %610 = vector.load %arg18[%609, %c0_212, %c0_213] : memref<18x32x128xf32, #tpu.memory_space<vmem>>, vector<1x32x128xf32>
    %611 = vector.shape_cast %610 : vector<1x32x128xf32> to vector<32x128xf32>
    %612 = vector.broadcast %608 : f32 to vector<32x128xf32>
    %613 = arith.mulf %612, %611 : vector<32x128xf32>
    %614 = arith.addf %606, %613 : vector<32x128xf32>
    %c18_i32_214 = arith.constant 18 : i32
    %615 = vector.broadcast %28 : f32 to vector<32x128xf32>
    %616 = arith.mulf %615, %614 : vector<32x128xf32>
    %617 = arith.addf %469, %616 : vector<32x128xf32>
    %c0_215 = arith.constant 0 : index
    %c0_216 = arith.constant 0 : index
    %618 = vector.load %arg17[%c0_215, %c0_216] : memref<1x128xf32, #tpu.memory_space<vmem>>, vector<1x128xf32>
    %c0_217 = arith.constant 0 : index
    %c0_218 = arith.constant 0 : index
    %619 = vector.load %arg19[%c0_217, %c0_218] : memref<18x128xf32, #tpu.memory_space<vmem>>, vector<18x128xf32>
    %cst_219 = arith.constant dense<0.000000e+00> : vector<1x128xf32>
    %620 = tpu.matmul %23, %619, %cst_219 {dimension_numbers = #tpu.dot_dimension_numbers<[1], [0], [0], [1], [0, 0, 1, 1], [], []>} : vector<1x18xf32>, vector<18x128xf32>, vector<1x128xf32> -> vector<1x128xf32>
    %621 = vector.broadcast %28 : f32 to vector<1x128xf32>
    %622 = arith.mulf %621, %620 : vector<1x128xf32>
    %623 = arith.addf %618, %622 : vector<1x128xf32>
    %cst_220 = arith.constant dense<0.000000e+00> : vector<16x128xf32>
    %624 = tpu.matmul %468, %617, %cst_220 {dimension_numbers = #tpu.dot_dimension_numbers<[1], [0], [0], [1], [0, 0, 1, 1], [], []>} : vector<16x32xf32>, vector<32x128xf32>, vector<16x128xf32> -> vector<16x128xf32>
    %625 = vector.broadcast %623 : vector<1x128xf32> to vector<16x128xf32>
    %626 = arith.addf %624, %625 : vector<16x128xf32>
    %cst_221 = arith.constant 5.000000e-01 : f32
    %627 = vector.broadcast %cst_221 : f32 to vector<16x128xf32>
    %628 = arith.mulf %627, %626 : vector<16x128xf32>
    %cst_222 = arith.constant 4.471500e-02 : f32
    %629 = vector.broadcast %cst_222 : f32 to vector<16x128xf32>
    %630 = arith.mulf %629, %626 : vector<16x128xf32>
    %631 = arith.mulf %630, %626 : vector<16x128xf32>
    %632 = arith.mulf %631, %626 : vector<16x128xf32>
    %633 = arith.addf %626, %632 : vector<16x128xf32>
    %cst_223 = arith.constant 0.797884583 : f32
    %634 = vector.broadcast %cst_223 : f32 to vector<16x128xf32>
    %635 = arith.mulf %634, %633 : vector<16x128xf32>
    %636 = math.tanh %635 : vector<16x128xf32>
    %cst_224 = arith.constant 1.000000e+00 : f32
    %637 = vector.broadcast %cst_224 : f32 to vector<16x128xf32>
    %638 = arith.addf %637, %636 : vector<16x128xf32>
    %639 = arith.mulf %628, %638 : vector<16x128xf32>
    %c0_225 = arith.constant 0 : index
    %c0_226 = arith.constant 0 : index
    %640 = vector.load %arg20[%c0_225, %c0_226] : memref<128x32xf32, #tpu.memory_space<vmem>>, vector<128x32xf32>
    %cst_227 = arith.constant 0.000000e+00 : f32
    %641 = vector.broadcast %cst_227 : f32 to vector<128x32xf32>
    %c0_i32_228 = arith.constant 0 : i32
    %642 = arith.index_cast %c0_i32_228 : i32 to index
    %643 = memref.load %arg25[%642] : memref<18xf32, #tpu.memory_space<smem>>
    %644 = arith.index_cast %c0_i32_228 : i32 to index
    %c0_229 = arith.constant 0 : index
    %c0_230 = arith.constant 0 : index
    %645 = vector.load %arg22[%644, %c0_229, %c0_230] : memref<18x128x32xf32, #tpu.memory_space<vmem>>, vector<1x128x32xf32>
    %646 = vector.shape_cast %645 : vector<1x128x32xf32> to vector<128x32xf32>
    %647 = vector.broadcast %643 : f32 to vector<128x32xf32>
    %648 = arith.mulf %647, %646 : vector<128x32xf32>
    %649 = arith.addf %641, %648 : vector<128x32xf32>
    %c1_i32_231 = arith.constant 1 : i32
    %650 = arith.index_cast %c1_i32_231 : i32 to index
    %651 = memref.load %arg25[%650] : memref<18xf32, #tpu.memory_space<smem>>
    %652 = arith.index_cast %c1_i32_231 : i32 to index
    %c0_232 = arith.constant 0 : index
    %c0_233 = arith.constant 0 : index
    %653 = vector.load %arg22[%652, %c0_232, %c0_233] : memref<18x128x32xf32, #tpu.memory_space<vmem>>, vector<1x128x32xf32>
    %654 = vector.shape_cast %653 : vector<1x128x32xf32> to vector<128x32xf32>
    %655 = vector.broadcast %651 : f32 to vector<128x32xf32>
    %656 = arith.mulf %655, %654 : vector<128x32xf32>
    %657 = arith.addf %649, %656 : vector<128x32xf32>
    %c2_i32_234 = arith.constant 2 : i32
    %658 = arith.index_cast %c2_i32_234 : i32 to index
    %659 = memref.load %arg25[%658] : memref<18xf32, #tpu.memory_space<smem>>
    %660 = arith.index_cast %c2_i32_234 : i32 to index
    %c0_235 = arith.constant 0 : index
    %c0_236 = arith.constant 0 : index
    %661 = vector.load %arg22[%660, %c0_235, %c0_236] : memref<18x128x32xf32, #tpu.memory_space<vmem>>, vector<1x128x32xf32>
    %662 = vector.shape_cast %661 : vector<1x128x32xf32> to vector<128x32xf32>
    %663 = vector.broadcast %659 : f32 to vector<128x32xf32>
    %664 = arith.mulf %663, %662 : vector<128x32xf32>
    %665 = arith.addf %657, %664 : vector<128x32xf32>
    %c3_i32_237 = arith.constant 3 : i32
    %666 = arith.index_cast %c3_i32_237 : i32 to index
    %667 = memref.load %arg25[%666] : memref<18xf32, #tpu.memory_space<smem>>
    %668 = arith.index_cast %c3_i32_237 : i32 to index
    %c0_238 = arith.constant 0 : index
    %c0_239 = arith.constant 0 : index
    %669 = vector.load %arg22[%668, %c0_238, %c0_239] : memref<18x128x32xf32, #tpu.memory_space<vmem>>, vector<1x128x32xf32>
    %670 = vector.shape_cast %669 : vector<1x128x32xf32> to vector<128x32xf32>
    %671 = vector.broadcast %667 : f32 to vector<128x32xf32>
    %672 = arith.mulf %671, %670 : vector<128x32xf32>
    %673 = arith.addf %665, %672 : vector<128x32xf32>
    %c4_i32_240 = arith.constant 4 : i32
    %674 = arith.index_cast %c4_i32_240 : i32 to index
    %675 = memref.load %arg25[%674] : memref<18xf32, #tpu.memory_space<smem>>
    %676 = arith.index_cast %c4_i32_240 : i32 to index
    %c0_241 = arith.constant 0 : index
    %c0_242 = arith.constant 0 : index
    %677 = vector.load %arg22[%676, %c0_241, %c0_242] : memref<18x128x32xf32, #tpu.memory_space<vmem>>, vector<1x128x32xf32>
    %678 = vector.shape_cast %677 : vector<1x128x32xf32> to vector<128x32xf32>
    %679 = vector.broadcast %675 : f32 to vector<128x32xf32>
    %680 = arith.mulf %679, %678 : vector<128x32xf32>
    %681 = arith.addf %673, %680 : vector<128x32xf32>
    %c5_i32_243 = arith.constant 5 : i32
    %682 = arith.index_cast %c5_i32_243 : i32 to index
    %683 = memref.load %arg25[%682] : memref<18xf32, #tpu.memory_space<smem>>
    %684 = arith.index_cast %c5_i32_243 : i32 to index
    %c0_244 = arith.constant 0 : index
    %c0_245 = arith.constant 0 : index
    %685 = vector.load %arg22[%684, %c0_244, %c0_245] : memref<18x128x32xf32, #tpu.memory_space<vmem>>, vector<1x128x32xf32>
    %686 = vector.shape_cast %685 : vector<1x128x32xf32> to vector<128x32xf32>
    %687 = vector.broadcast %683 : f32 to vector<128x32xf32>
    %688 = arith.mulf %687, %686 : vector<128x32xf32>
    %689 = arith.addf %681, %688 : vector<128x32xf32>
    %c6_i32_246 = arith.constant 6 : i32
    %690 = arith.index_cast %c6_i32_246 : i32 to index
    %691 = memref.load %arg25[%690] : memref<18xf32, #tpu.memory_space<smem>>
    %692 = arith.index_cast %c6_i32_246 : i32 to index
    %c0_247 = arith.constant 0 : index
    %c0_248 = arith.constant 0 : index
    %693 = vector.load %arg22[%692, %c0_247, %c0_248] : memref<18x128x32xf32, #tpu.memory_space<vmem>>, vector<1x128x32xf32>
    %694 = vector.shape_cast %693 : vector<1x128x32xf32> to vector<128x32xf32>
    %695 = vector.broadcast %691 : f32 to vector<128x32xf32>
    %696 = arith.mulf %695, %694 : vector<128x32xf32>
    %697 = arith.addf %689, %696 : vector<128x32xf32>
    %c7_i32_249 = arith.constant 7 : i32
    %698 = arith.index_cast %c7_i32_249 : i32 to index
    %699 = memref.load %arg25[%698] : memref<18xf32, #tpu.memory_space<smem>>
    %700 = arith.index_cast %c7_i32_249 : i32 to index
    %c0_250 = arith.constant 0 : index
    %c0_251 = arith.constant 0 : index
    %701 = vector.load %arg22[%700, %c0_250, %c0_251] : memref<18x128x32xf32, #tpu.memory_space<vmem>>, vector<1x128x32xf32>
    %702 = vector.shape_cast %701 : vector<1x128x32xf32> to vector<128x32xf32>
    %703 = vector.broadcast %699 : f32 to vector<128x32xf32>
    %704 = arith.mulf %703, %702 : vector<128x32xf32>
    %705 = arith.addf %697, %704 : vector<128x32xf32>
    %c8_i32_252 = arith.constant 8 : i32
    %706 = arith.index_cast %c8_i32_252 : i32 to index
    %707 = memref.load %arg25[%706] : memref<18xf32, #tpu.memory_space<smem>>
    %708 = arith.index_cast %c8_i32_252 : i32 to index
    %c0_253 = arith.constant 0 : index
    %c0_254 = arith.constant 0 : index
    %709 = vector.load %arg22[%708, %c0_253, %c0_254] : memref<18x128x32xf32, #tpu.memory_space<vmem>>, vector<1x128x32xf32>
    %710 = vector.shape_cast %709 : vector<1x128x32xf32> to vector<128x32xf32>
    %711 = vector.broadcast %707 : f32 to vector<128x32xf32>
    %712 = arith.mulf %711, %710 : vector<128x32xf32>
    %713 = arith.addf %705, %712 : vector<128x32xf32>
    %c9_i32_255 = arith.constant 9 : i32
    %714 = arith.index_cast %c9_i32_255 : i32 to index
    %715 = memref.load %arg25[%714] : memref<18xf32, #tpu.memory_space<smem>>
    %716 = arith.index_cast %c9_i32_255 : i32 to index
    %c0_256 = arith.constant 0 : index
    %c0_257 = arith.constant 0 : index
    %717 = vector.load %arg22[%716, %c0_256, %c0_257] : memref<18x128x32xf32, #tpu.memory_space<vmem>>, vector<1x128x32xf32>
    %718 = vector.shape_cast %717 : vector<1x128x32xf32> to vector<128x32xf32>
    %719 = vector.broadcast %715 : f32 to vector<128x32xf32>
    %720 = arith.mulf %719, %718 : vector<128x32xf32>
    %721 = arith.addf %713, %720 : vector<128x32xf32>
    %c10_i32_258 = arith.constant 10 : i32
    %722 = arith.index_cast %c10_i32_258 : i32 to index
    %723 = memref.load %arg25[%722] : memref<18xf32, #tpu.memory_space<smem>>
    %724 = arith.index_cast %c10_i32_258 : i32 to index
    %c0_259 = arith.constant 0 : index
    %c0_260 = arith.constant 0 : index
    %725 = vector.load %arg22[%724, %c0_259, %c0_260] : memref<18x128x32xf32, #tpu.memory_space<vmem>>, vector<1x128x32xf32>
    %726 = vector.shape_cast %725 : vector<1x128x32xf32> to vector<128x32xf32>
    %727 = vector.broadcast %723 : f32 to vector<128x32xf32>
    %728 = arith.mulf %727, %726 : vector<128x32xf32>
    %729 = arith.addf %721, %728 : vector<128x32xf32>
    %c11_i32_261 = arith.constant 11 : i32
    %730 = arith.index_cast %c11_i32_261 : i32 to index
    %731 = memref.load %arg25[%730] : memref<18xf32, #tpu.memory_space<smem>>
    %732 = arith.index_cast %c11_i32_261 : i32 to index
    %c0_262 = arith.constant 0 : index
    %c0_263 = arith.constant 0 : index
    %733 = vector.load %arg22[%732, %c0_262, %c0_263] : memref<18x128x32xf32, #tpu.memory_space<vmem>>, vector<1x128x32xf32>
    %734 = vector.shape_cast %733 : vector<1x128x32xf32> to vector<128x32xf32>
    %735 = vector.broadcast %731 : f32 to vector<128x32xf32>
    %736 = arith.mulf %735, %734 : vector<128x32xf32>
    %737 = arith.addf %729, %736 : vector<128x32xf32>
    %c12_i32_264 = arith.constant 12 : i32
    %738 = arith.index_cast %c12_i32_264 : i32 to index
    %739 = memref.load %arg25[%738] : memref<18xf32, #tpu.memory_space<smem>>
    %740 = arith.index_cast %c12_i32_264 : i32 to index
    %c0_265 = arith.constant 0 : index
    %c0_266 = arith.constant 0 : index
    %741 = vector.load %arg22[%740, %c0_265, %c0_266] : memref<18x128x32xf32, #tpu.memory_space<vmem>>, vector<1x128x32xf32>
    %742 = vector.shape_cast %741 : vector<1x128x32xf32> to vector<128x32xf32>
    %743 = vector.broadcast %739 : f32 to vector<128x32xf32>
    %744 = arith.mulf %743, %742 : vector<128x32xf32>
    %745 = arith.addf %737, %744 : vector<128x32xf32>
    %c13_i32_267 = arith.constant 13 : i32
    %746 = arith.index_cast %c13_i32_267 : i32 to index
    %747 = memref.load %arg25[%746] : memref<18xf32, #tpu.memory_space<smem>>
    %748 = arith.index_cast %c13_i32_267 : i32 to index
    %c0_268 = arith.constant 0 : index
    %c0_269 = arith.constant 0 : index
    %749 = vector.load %arg22[%748, %c0_268, %c0_269] : memref<18x128x32xf32, #tpu.memory_space<vmem>>, vector<1x128x32xf32>
    %750 = vector.shape_cast %749 : vector<1x128x32xf32> to vector<128x32xf32>
    %751 = vector.broadcast %747 : f32 to vector<128x32xf32>
    %752 = arith.mulf %751, %750 : vector<128x32xf32>
    %753 = arith.addf %745, %752 : vector<128x32xf32>
    %c14_i32_270 = arith.constant 14 : i32
    %754 = arith.index_cast %c14_i32_270 : i32 to index
    %755 = memref.load %arg25[%754] : memref<18xf32, #tpu.memory_space<smem>>
    %756 = arith.index_cast %c14_i32_270 : i32 to index
    %c0_271 = arith.constant 0 : index
    %c0_272 = arith.constant 0 : index
    %757 = vector.load %arg22[%756, %c0_271, %c0_272] : memref<18x128x32xf32, #tpu.memory_space<vmem>>, vector<1x128x32xf32>
    %758 = vector.shape_cast %757 : vector<1x128x32xf32> to vector<128x32xf32>
    %759 = vector.broadcast %755 : f32 to vector<128x32xf32>
    %760 = arith.mulf %759, %758 : vector<128x32xf32>
    %761 = arith.addf %753, %760 : vector<128x32xf32>
    %c15_i32_273 = arith.constant 15 : i32
    %762 = arith.index_cast %c15_i32_273 : i32 to index
    %763 = memref.load %arg25[%762] : memref<18xf32, #tpu.memory_space<smem>>
    %764 = arith.index_cast %c15_i32_273 : i32 to index
    %c0_274 = arith.constant 0 : index
    %c0_275 = arith.constant 0 : index
    %765 = vector.load %arg22[%764, %c0_274, %c0_275] : memref<18x128x32xf32, #tpu.memory_space<vmem>>, vector<1x128x32xf32>
    %766 = vector.shape_cast %765 : vector<1x128x32xf32> to vector<128x32xf32>
    %767 = vector.broadcast %763 : f32 to vector<128x32xf32>
    %768 = arith.mulf %767, %766 : vector<128x32xf32>
    %769 = arith.addf %761, %768 : vector<128x32xf32>
    %c16_i32_276 = arith.constant 16 : i32
    %770 = arith.index_cast %c16_i32_276 : i32 to index
    %771 = memref.load %arg25[%770] : memref<18xf32, #tpu.memory_space<smem>>
    %772 = arith.index_cast %c16_i32_276 : i32 to index
    %c0_277 = arith.constant 0 : index
    %c0_278 = arith.constant 0 : index
    %773 = vector.load %arg22[%772, %c0_277, %c0_278] : memref<18x128x32xf32, #tpu.memory_space<vmem>>, vector<1x128x32xf32>
    %774 = vector.shape_cast %773 : vector<1x128x32xf32> to vector<128x32xf32>
    %775 = vector.broadcast %771 : f32 to vector<128x32xf32>
    %776 = arith.mulf %775, %774 : vector<128x32xf32>
    %777 = arith.addf %769, %776 : vector<128x32xf32>
    %c17_i32_279 = arith.constant 17 : i32
    %778 = arith.index_cast %c17_i32_279 : i32 to index
    %779 = memref.load %arg25[%778] : memref<18xf32, #tpu.memory_space<smem>>
    %780 = arith.index_cast %c17_i32_279 : i32 to index
    %c0_280 = arith.constant 0 : index
    %c0_281 = arith.constant 0 : index
    %781 = vector.load %arg22[%780, %c0_280, %c0_281] : memref<18x128x32xf32, #tpu.memory_space<vmem>>, vector<1x128x32xf32>
    %782 = vector.shape_cast %781 : vector<1x128x32xf32> to vector<128x32xf32>
    %783 = vector.broadcast %779 : f32 to vector<128x32xf32>
    %784 = arith.mulf %783, %782 : vector<128x32xf32>
    %785 = arith.addf %777, %784 : vector<128x32xf32>
    %c18_i32_282 = arith.constant 18 : i32
    %786 = vector.broadcast %29 : f32 to vector<128x32xf32>
    %787 = arith.mulf %786, %785 : vector<128x32xf32>
    %788 = arith.addf %640, %787 : vector<128x32xf32>
    %c0_283 = arith.constant 0 : index
    %c0_284 = arith.constant 0 : index
    %789 = vector.load %arg21[%c0_283, %c0_284] : memref<1x32xf32, #tpu.memory_space<vmem>>, vector<1x32xf32>
    %c0_285 = arith.constant 0 : index
    %c0_286 = arith.constant 0 : index
    %790 = vector.load %arg23[%c0_285, %c0_286] : memref<18x32xf32, #tpu.memory_space<vmem>>, vector<18x32xf32>
    %cst_287 = arith.constant dense<0.000000e+00> : vector<1x32xf32>
    %791 = tpu.matmul %23, %790, %cst_287 {dimension_numbers = #tpu.dot_dimension_numbers<[1], [0], [0], [1], [0, 0, 1, 1], [], []>} : vector<1x18xf32>, vector<18x32xf32>, vector<1x32xf32> -> vector<1x32xf32>
    %792 = vector.broadcast %29 : f32 to vector<1x32xf32>
    %793 = arith.mulf %792, %791 : vector<1x32xf32>
    %794 = arith.addf %789, %793 : vector<1x32xf32>
    %cst_288 = arith.constant dense<0.000000e+00> : vector<16x32xf32>
    %795 = tpu.matmul %639, %788, %cst_288 {dimension_numbers = #tpu.dot_dimension_numbers<[1], [0], [0], [1], [0, 0, 1, 1], [], []>} : vector<16x128xf32>, vector<128x32xf32>, vector<16x32xf32> -> vector<16x32xf32>
    %796 = vector.broadcast %794 : vector<1x32xf32> to vector<16x32xf32>
    %797 = arith.addf %795, %796 : vector<16x32xf32>
    %798 = arith.addf %468, %797 : vector<16x32xf32>
    %c0_289 = arith.constant 0 : index
    %c0_290 = arith.constant 0 : index
    %799 = vector.load %arg6[%c0_289, %c0_290] : memref<1x32xf32, #tpu.memory_space<vmem>>, vector<1x32xf32>
    %c0_291 = arith.constant 0 : index
    %c0_292 = arith.constant 0 : index
    %800 = vector.load %arg7[%c0_291, %c0_292] : memref<1x32xf32, #tpu.memory_space<vmem>>, vector<1x32xf32>
    %cst_293 = arith.constant dense<0.000000e+00> : vector<16xf32>
    %801 = vector.multi_reduction <add>, %798, %cst_293 [1] : vector<16x32xf32> to vector<16xf32>
    %802 = vector.shape_cast %801 : vector<16xf32> to vector<16x1xf32>
    %cst_294 = arith.constant 3.200000e+01 : f32
    %803 = vector.broadcast %cst_294 : f32 to vector<16x1xf32>
    %804 = arith.divf %802, %803 : vector<16x1xf32>
    %805 = vector.broadcast %804 : vector<16x1xf32> to vector<16x32xf32>
    %806 = arith.subf %798, %805 : vector<16x32xf32>
    %807 = arith.mulf %806, %806 : vector<16x32xf32>
    %cst_295 = arith.constant dense<0.000000e+00> : vector<16xf32>
    %808 = vector.multi_reduction <add>, %807, %cst_295 [1] : vector<16x32xf32> to vector<16xf32>
    %809 = vector.shape_cast %808 : vector<16xf32> to vector<16x1xf32>
    %cst_296 = arith.constant 3.200000e+01 : f32
    %810 = vector.broadcast %cst_296 : f32 to vector<16x1xf32>
    %811 = arith.divf %809, %810 : vector<16x1xf32>
    %cst_297 = arith.constant 9.99999974E-6 : f32
    %812 = vector.broadcast %cst_297 : f32 to vector<16x1xf32>
    %813 = arith.addf %811, %812 : vector<16x1xf32>
    %814 = math.rsqrt %813 : vector<16x1xf32>
    %815 = vector.broadcast %814 : vector<16x1xf32> to vector<16x32xf32>
    %816 = arith.mulf %806, %815 : vector<16x32xf32>
    %817 = vector.broadcast %799 : vector<1x32xf32> to vector<16x32xf32>
    %818 = arith.mulf %816, %817 : vector<16x32xf32>
    %819 = vector.broadcast %800 : vector<1x32xf32> to vector<16x32xf32>
    %820 = arith.addf %818, %819 : vector<16x32xf32>
    %c0_298 = arith.constant 0 : index
    %c0_299 = arith.constant 0 : index
    %821 = vector.load %arg27[%c0_298, %c0_299] : memref<16x32xf32, #tpu.memory_space<vmem>>, vector<16x32xf32>
    tpu.vector_store %arg27[%c0_298, %c0_299], %820 {strides = array<i32>} : memref<16x32xf32, #tpu.memory_space<vmem>>, vector<16x32xf32>,
    return
  }
}

</mosaic_0001>

<llo_original>
// kernel: transformer_subspace_forward.1
$region0: #{transformer_subspace_forward.1}
  #allocation0 [shape = 'u32[]', space=smem, size = 0x4, offset = 0x4, fixed_abs, tag = 'smem constant byte address 0x4 - core index']
  #allocation1 [shape = 'u32[144,128]{1,0:T(1,128)}', space=vmem, size = 0x12000, scoped, tag = 'internal scratch']
  %s0 = inlined_call_operand.vmem [shape: f32[16,32], index: 0, kind: input, shape index: {}]
  %s1 = inlined_call_operand.vmem [shape: f32[2,8], index: 1, kind: input, shape index: {}]
  %s2 = inlined_call_operand.vmem [shape: f32[1,32], index: 2, kind: input, shape index: {}]
  %s3 = inlined_call_operand.vmem [shape: f32[1,32], index: 3, kind: input, shape index: {}]
  %s4 = inlined_call_operand.vmem [shape: f32[1,32], index: 4, kind: input, shape index: {}]
  %s5 = inlined_call_operand.vmem [shape: f32[1,32], index: 5, kind: input, shape index: {}]
  %s6 = inlined_call_operand.vmem [shape: f32[1,32], index: 6, kind: input, shape index: {}]
  %s7 = inlined_call_operand.vmem [shape: f32[1,32], index: 7, kind: input, shape index: {}]
  %s8 = inlined_call_operand.vmem [shape: f32[32,96], index: 8, kind: input, shape index: {}]
  %s9 = inlined_call_operand.vmem [shape: f32[1,96], index: 9, kind: input, shape index: {}]
  %s10 = inlined_call_operand.vmem [shape: f32[18,32,96], index: 10, kind: input, shape index: {}]
  %s11 = inlined_call_operand.vmem [shape: f32[18,96], index: 11, kind: input, shape index: {}]
  %s12 = inlined_call_operand.vmem [shape: f32[32,32], index: 12, kind: input, shape index: {}]
  %s13 = inlined_call_operand.vmem [shape: f32[1,32], index: 13, kind: input, shape index: {}]
  %s14 = inlined_call_operand.vmem [shape: f32[18,32,32], index: 14, kind: input, shape index: {}]
  %s15 = inlined_call_operand.vmem [shape: f32[18,32], index: 15, kind: input, shape index: {}]
  %s16 = inlined_call_operand.vmem [shape: f32[32,128], index: 16, kind: input, shape index: {}]
  %s17 = inlined_call_operand.vmem [shape: f32[1,128], index: 17, kind: input, shape index: {}]
  %s18 = inlined_call_operand.vmem [shape: f32[18,32,128], index: 18, kind: input, shape index: {}]
  %s19 = inlined_call_operand.vmem [shape: f32[18,128], index: 19, kind: input, shape index: {}]
  %s20 = inlined_call_operand.vmem [shape: f32[128,32], index: 20, kind: input, shape index: {}]
  %s21 = inlined_call_operand.vmem [shape: f32[1,32], index: 21, kind: input, shape index: {}]
  %s22 = inlined_call_operand.vmem [shape: f32[18,128,32], index: 22, kind: input, shape index: {}]
  %s23 = inlined_call_operand.vmem [shape: f32[18,32], index: 23, kind: input, shape index: {}]
  %s24 = inlined_call_operand.vmem [shape: f32[1,18], index: 24, kind: input, shape index: {}, may-alias: {24,25}]
  %s25 = inlined_call_operand.vmem [shape: f32[18], index: 25, kind: input, shape index: {}, may-alias: {24,25}]
  %s26 = inlined_call_operand.vmem [shape: f32[6], index: 26, kind: input, shape index: {}]
  %s27 = inlined_call_operand.hbm [shape: f32[16,32], index: 27, kind: output, shape index: {}]
  %s28 = sld [smem:[#allocation0]]
  $region126: #{transformer_subspace_forward.1} parent=0
    _
  %s30 = ssub.s32 1, %s28
  %s31 = scalar_select 0, %s30, %s28
  $region1: #{transformer_subspace_forward.1} parent=0
    #allocation2 [shape = 'u8[512]{0}', space=smem, size = 0x200, scoped, tag = 'input window, operand 25, single buffered']
    #allocation3 [shape = 's32[1]{0}', space=sflag, size = 0x4, scoped, tag = 'scoped memory for transformer_subspace_forward.1']
    #allocation4 [shape = 's32[1]{0}', space=sflag, size = 0x4, scoped, tag = 'scoped memory for transformer_subspace_forward.1']
    #allocation5 [shape = 'u8[512]{0}', space=smem, size = 0x200, scoped, tag = 'input window, operand 26, single buffered']
    #allocation6 [shape = 's32[1]{0}', space=sflag, size = 0x4, scoped, tag = 'scoped memory for transformer_subspace_forward.1']
    #allocation7 [shape = 'u8[8192]{0}', space=vmem, size = 0x2000, scoped, tag = 'output window, operand 0, single buffered']
    %32 = vsyncpa [#allocation4], 0
    %33 = vsyncpa [#allocation6], 0
    %34 = vsyncpa [#allocation3], 0
    // Predicated region
    $region2: #{transformer_subspace_forward.1} parent=1 // pred_check
      _
    $region3: #{transformer_subspace_forward.1} parent=1 // pred_check_branch
      %36 = sbr.rel (0) target = $region5
    $region4: #{transformer_subspace_forward.1} parent=1 // pred_region
      _
    $region5: #{transformer_subspace_forward.1} parent=1 // pred_fallthru
      _
    // Predicated region
    $region6: #{transformer_subspace_forward.1} parent=1 // pred_check
      _
    $region7: #{transformer_subspace_forward.1} parent=1 // pred_check_branch
      %38 = sbr.rel (0) target = $region9
    $region8: #{transformer_subspace_forward.1} parent=1 // pred_region
      _
    $region9: #{transformer_subspace_forward.1} parent=1 // pred_fallthru
      _
    // Predicated region
    $region10: #{transformer_subspace_forward.1} parent=1 // pred_check
      _
    $region11: #{transformer_subspace_forward.1} parent=1 // pred_check_branch
      %40 = sbr.rel (0) target = $region13
    $region12: #{transformer_subspace_forward.1} parent=1 // pred_region
      _
    $region13: #{transformer_subspace_forward.1} parent=1 // pred_fallthru
      _
    // Predicated region
    $region14: #{transformer_subspace_forward.1} parent=1 // pred_check
      _
    $region15: #{transformer_subspace_forward.1} parent=1 // pred_check_branch
      %42 = sbr.rel (0) target = $region17
    $region16: #{transformer_subspace_forward.1} parent=1 // pred_region
      _
    $region17: #{transformer_subspace_forward.1} parent=1 // pred_fallthru
      _
    // Predicated region
    $region18: #{transformer_subspace_forward.1} parent=1 // pred_check
      _
    $region19: #{transformer_subspace_forward.1} parent=1 // pred_check_branch
      %44 = sbr.rel (0) target = $region21
    $region20: #{transformer_subspace_forward.1} parent=1 // pred_region
      _
    $region21: #{transformer_subspace_forward.1} parent=1 // pred_fallthru
      _
    // Predicated region
    $region22: #{transformer_subspace_forward.1} parent=1 // pred_check
      _
    $region23: #{transformer_subspace_forward.1} parent=1 // pred_check_branch
      %46 = sbr.rel (0) target = $region25
    $region24: #{transformer_subspace_forward.1} parent=1 // pred_region
      _
    $region25: #{transformer_subspace_forward.1} parent=1 // pred_fallthru
      _
    // Predicated region
    $region26: #{transformer_subspace_forward.1} parent=1 // pred_check
      _
    $region27: #{transformer_subspace_forward.1} parent=1 // pred_check_branch
      %48 = sbr.rel (0) target = $region29
    $region28: #{transformer_subspace_forward.1} parent=1 // pred_region
      _
    $region29: #{transformer_subspace_forward.1} parent=1 // pred_fallthru
      _
    // Predicated region
    $region30: #{transformer_subspace_forward.1} parent=1 // pred_check
      _
    $region31: #{transformer_subspace_forward.1} parent=1 // pred_check_branch
      %50 = sbr.rel (0) target = $region33
    $region32: #{transformer_subspace_forward.1} parent=1 // pred_region
      _
    $region33: #{transformer_subspace_forward.1} parent=1 // pred_fallthru
      _
    // Predicated region
    $region34: #{transformer_subspace_forward.1} parent=1 // pred_check
      _
    $region35: #{transformer_subspace_forward.1} parent=1 // pred_check_branch
      %52 = sbr.rel (0) target = $region37
    $region36: #{transformer_subspace_forward.1} parent=1 // pred_region
      _
    $region37: #{transformer_subspace_forward.1} parent=1 // pred_fallthru
      _
    // Predicated region
    $region38: #{transformer_subspace_forward.1} parent=1 // pred_check
      _
    $region39: #{transformer_subspace_forward.1} parent=1 // pred_check_branch
      %54 = sbr.rel (0) target = $region41
    $region40: #{transformer_subspace_forward.1} parent=1 // pred_region
      _
    $region41: #{transformer_subspace_forward.1} parent=1 // pred_fallthru
      _
    // Predicated region
    $region42: #{transformer_subspace_forward.1} parent=1 // pred_check
      _
    $region43: #{transformer_subspace_forward.1} parent=1 // pred_check_branch
      %56 = sbr.rel (0) target = $region45
    $region44: #{transformer_subspace_forward.1} parent=1 // pred_region
      _
    $region45: #{transformer_subspace_forward.1} parent=1 // pred_fallthru
      _
    // Predicated region
    $region46: #{transformer_subspace_forward.1} parent=1 // pred_check
      _
    $region47: #{transformer_subspace_forward.1} parent=1 // pred_check_branch
      %58 = sbr.rel (0) target = $region49
    $region48: #{transformer_subspace_forward.1} parent=1 // pred_region
      _
    $region49: #{transformer_subspace_forward.1} parent=1 // pred_fallthru
      _
    // Predicated region
    $region50: #{transformer_subspace_forward.1} parent=1 // pred_check
      _
    $region51: #{transformer_subspace_forward.1} parent=1 // pred_check_branch
      %60 = sbr.rel (0) target = $region53
    $region52: #{transformer_subspace_forward.1} parent=1 // pred_region
      _
    $region53: #{transformer_subspace_forward.1} parent=1 // pred_fallthru
      _
    // Predicated region
    $region54: #{transformer_subspace_forward.1} parent=1 // pred_check
      _
    $region55: #{transformer_subspace_forward.1} parent=1 // pred_check_branch
      %62 = sbr.rel (0) target = $region57
    $region56: #{transformer_subspace_forward.1} parent=1 // pred_region
      _
    $region57: #{transformer_subspace_forward.1} parent=1 // pred_fallthru
      _
    // Predicated region
    $region58: #{transformer_subspace_forward.1} parent=1 // pred_check
      _
    $region59: #{transformer_subspace_forward.1} parent=1 // pred_check_branch
      %64 = sbr.rel (0) target = $region61
    $region60: #{transformer_subspace_forward.1} parent=1 // pred_region
      _
    $region61: #{transformer_subspace_forward.1} parent=1 // pred_fallthru
      _
    // Predicated region
    $region62: #{transformer_subspace_forward.1} parent=1 // pred_check
      _
    $region63: #{transformer_subspace_forward.1} parent=1 // pred_check_branch
      %66 = sbr.rel (0) target = $region65
    $region64: #{transformer_subspace_forward.1} parent=1 // pred_region
      _
    $region65: #{transformer_subspace_forward.1} parent=1 // pred_fallthru
      _
    // Predicated region
    $region66: #{transformer_subspace_forward.1} parent=1 // pred_check
      _
    $region67: #{transformer_subspace_forward.1} parent=1 // pred_check_branch
      %68 = sbr.rel (0) target = $region69
    $region68: #{transformer_subspace_forward.1} parent=1 // pred_region
      _
    $region69: #{transformer_subspace_forward.1} parent=1 // pred_fallthru
      _
    // Predicated region
    $region70: #{transformer_subspace_forward.1} parent=1 // pred_check
      _
    $region71: #{transformer_subspace_forward.1} parent=1 // pred_check_branch
      %70 = sbr.rel (0) target = $region73
    $region72: #{transformer_subspace_forward.1} parent=1 // pred_region
      _
    $region73: #{transformer_subspace_forward.1} parent=1 // pred_fallthru
      _
    // Predicated region
    $region74: #{transformer_subspace_forward.1} parent=1 // pred_check
      _
    $region75: #{transformer_subspace_forward.1} parent=1 // pred_check_branch
      %72 = sbr.rel (0) target = $region77
    $region76: #{transformer_subspace_forward.1} parent=1 // pred_region
      _
    $region77: #{transformer_subspace_forward.1} parent=1 // pred_fallthru
      _
    // Predicated region
    $region78: #{transformer_subspace_forward.1} parent=1 // pred_check
      _
    $region79: #{transformer_subspace_forward.1} parent=1 // pred_check_branch
      %74 = sbr.rel (0) target = $region81
    $region80: #{transformer_subspace_forward.1} parent=1 // pred_region
      _
    $region81: #{transformer_subspace_forward.1} parent=1 // pred_fallthru
      _
    // Predicated region
    $region82: #{transformer_subspace_forward.1} parent=1 // pred_check
      _
    $region83: #{transformer_subspace_forward.1} parent=1 // pred_check_branch
      %76 = sbr.rel (0) target = $region85
    $region84: #{transformer_subspace_forward.1} parent=1 // pred_region
      _
    $region85: #{transformer_subspace_forward.1} parent=1 // pred_fallthru
      _
    // Predicated region
    $region86: #{transformer_subspace_forward.1} parent=1 // pred_check
      _
    $region87: #{transformer_subspace_forward.1} parent=1 // pred_check_branch
      %78 = sbr.rel (0) target = $region89
    $region88: #{transformer_subspace_forward.1} parent=1 // pred_region
      _
    $region89: #{transformer_subspace_forward.1} parent=1 // pred_fallthru
      _
    // Predicated region
    $region90: #{transformer_subspace_forward.1} parent=1 // pred_check
      _
    $region91: #{transformer_subspace_forward.1} parent=1 // pred_check_branch
      %80 = sbr.rel (0) target = $region93
    $region92: #{transformer_subspace_forward.1} parent=1 // pred_region
      _
    $region93: #{transformer_subspace_forward.1} parent=1 // pred_fallthru
      _
    // Predicated region
    $region94: #{transformer_subspace_forward.1} parent=1 // pred_check
      _
    $region95: #{transformer_subspace_forward.1} parent=1 // pred_check_branch
      %82 = sbr.rel (0) target = $region97
    $region96: #{transformer_subspace_forward.1} parent=1 // pred_region
      _
    $region97: #{transformer_subspace_forward.1} parent=1 // pred_fallthru
      _
    // Predicated region
    $region98: #{transformer_subspace_forward.1} parent=1 // pred_check
      _
    $region99: #{transformer_subspace_forward.1} parent=1 // pred_check_branch
      %84 = sbr.rel (0) target = $region101
    $region100: #{transformer_subspace_forward.1} parent=1 // pred_region
      _
    $region101: #{transformer_subspace_forward.1} parent=1 // pred_fallthru
      _
    // Predicated region
    $region102: #{transformer_subspace_forward.1} parent=1 // pred_check
      _
    $region103: #{transformer_subspace_forward.1} parent=1 // pred_check_branch
      %86 = sbr.rel (0) target = $region105
    $region104: #{transformer_subspace_forward.1} parent=1 // pred_region
      %s88 = ssub.s32 16, 16
      %89 = vsyncadd [#allocation4], %s88
      %s91 = sshll.u32 %s25, 4
      %s92 = int_to_ptr.vmem [resolvable:$true] %s91
      %94 = dma.vmem_to_smem %s92, 16, [#allocation2], [#allocation4]
    $region105: #{transformer_subspace_forward.1} parent=1 // pred_fallthru
      _
    // Predicated region
    $region106: #{transformer_subspace_forward.1} parent=1 // pred_check
      _
    $region107: #{transformer_subspace_forward.1} parent=1 // pred_check_branch
      %96 = sbr.rel (0) target = $region109
    $region108: #{transformer_subspace_forward.1} parent=1 // pred_region
      %s98 = ssub.s32 16, 16
      %99 = vsyncadd [#allocation6], %s98
      %s101 = sshll.u32 %s26, 4
      %s102 = int_to_ptr.vmem [resolvable:$true] %s101
      %104 = dma.vmem_to_smem %s102, 16, [#allocation5], [#allocation6]
    $region109: #{transformer_subspace_forward.1} parent=1 // pred_fallthru
      _
    // Predicated region
    $region110: #{transformer_subspace_forward.1} parent=1 // pred_check
      _
    $region111: #{transformer_subspace_forward.1} parent=1 // pred_check_branch
      %106 = sbr.rel (0) target = $region113
    $region112: #{transformer_subspace_forward.1} parent=1 // pred_region
      %107 = dma.done [#allocation4], 16
    $region113: #{transformer_subspace_forward.1} parent=1 // pred_fallthru
      _
    // Predicated region
    $region114: #{transformer_subspace_forward.1} parent=1 // pred_check
      _
    $region115: #{transformer_subspace_forward.1} parent=1 // pred_check_branch
      %109 = sbr.rel (0) target = $region117
    $region116: #{transformer_subspace_forward.1} parent=1 // pred_region
      %110 = dma.done [#allocation6], 16
    $region117: #{transformer_subspace_forward.1} parent=1 // pred_fallthru
      _
    %111 = sfence
    %v112 = vld [vmem:[%s0] sm:$0xff]
    %v113 = vld [vmem:[%s0 + $0x8] sm:$0xff]
    %v114 = vld [vmem:[%s2] sm:$0x1]
    %v115 = vld [vmem:[%s3] sm:$0x1]
    %vm116 = vcmask 261120
    %v117 = vsel %vm116, %v112, 0.0
    %118 = vadd.xlane.f32.xlu0 %v117
    %v119 = vpop.xlane.xlu0 %118
    %v120 = vsel %vm116, %v113, 0.0
    %121 = vadd.xlane.f32.xlu0 %v120
    %v122 = vpop.xlane.xlu0 %121
    %v123 = vrcp.pop 32.0
    %v124 = vmul.f32 %v119, %v123
    %v125 = vmul.f32 %v122, %v123
    %v126 = vsub.f32 %v112, %v124
    %v127 = vsub.f32 %v113, %v125
    %v128 = vmul.f32 %v126, %v126
    %v129 = vmul.f32 %v127, %v127
    %v130 = vsel %vm116, %v128, 0.0
    %131 = vadd.xlane.f32.xlu0 %v130
    %v132 = vpop.xlane.xlu0 %131
    %v133 = vsel %vm116, %v129, 0.0
    %134 = vadd.xlane.f32.xlu0 %v133
    %v135 = vpop.xlane.xlu0 %134
    %v136 = vmul.f32 %v132, %v123
    %v137 = vmul.f32 %v135, %v123
    %v138 = vadd.f32 %v136, 1e-05
    %v139 = vadd.f32 %v137, 1e-05
    %v140 = vrsqrt.pop %v138
    %v141 = vrsqrt.pop %v139
    %v142 = vmul.f32 %v126, %v140
    %v143 = vmul.f32 %v127, %v141
    %v145 = vlaneseq
    %v146 = vshrl.u32 %v145, 7
    %v147 = vsub.s32 0, %v146
    %v148 = vrot.slane %v114, %v147
    %v150 = vmul.f32 %v142, %v148
    %v151 = vmul.f32 %v143, %v148
    %v153 = vlaneseq
    %v154 = vshrl.u32 %v153, 7
    %v155 = vsub.s32 0, %v154
    %v156 = vrot.slane %v115, %v155
    %v158 = vadd.f32 %v150, %v156
    %v159 = vadd.f32 %v151, %v156
    %v160 = vld [vmem:[%s24] sm:$0x1]
    %s161 = sld [smem:[#allocation5]]
    %s162 = sld [smem:[#allocation5 + $0x1]]
    %s163 = sld [smem:[#allocation5 + $0x2]]
    %s164 = sld [smem:[#allocation5 + $0x3]]
    %s165 = sld [smem:[#allocation5 + $0x4]]
    %s166 = sld [smem:[#allocation5 + $0x5]]
    %v167 = vstv %s161
    %v168 = vstv %s162
    %v169 = vstv %s163
    %v170 = vsel %vm116, %v167, %v168
    %vm171 = vcmask 523264
    %v172 = vsel %vm171, %v170, %v169
    %v173 = vld [vmem:[%s8] sm:$0xff]
    %v174 = vld [vmem:[%s8 + $0x8] sm:$0xff]
    %v175 = vld [vmem:[%s8 + $0x10] sm:$0xff]
    %v176 = vld [vmem:[%s8 + $0x18] sm:$0xff]
    %s177 = sld [smem:[#allocation2]]
    %v178 = vld [vmem:[%s10] sm:$0xff]
    %v179 = vld [vmem:[%s10 + $0x8] sm:$0xff]
    %v180 = vld [vmem:[%s10 + $0x10] sm:$0xff]
    %v181 = vld [vmem:[%s10 + $0x18] sm:$0xff]
    %v182 = vstv %s177
    %v183 = vmul.f32 %v182, %v178
    %v184 = vmul.f32 %v182, %v179
    %v185 = vmul.f32 %v182, %v180
    %v186 = vmul.f32 %v182, %v181
    %v187 = vadd.f32 %v183, 0.0
    %v188 = vadd.f32 %v184, 0.0
    %v189 = vadd.f32 %v185, 0.0
    %v190 = vadd.f32 %v186, 0.0
    %s191 = sld [smem:[#allocation2 + $0x1]]
    %s192 = scalar_lea.vmem %s10, 32
    %v193 = vld [vmem:[%s192] sm:$0xff]
    %v194 = vld [vmem:[%s192 + $0x8] sm:$0xff]
    %v195 = vld [vmem:[%s192 + $0x10] sm:$0xff]
    %v196 = vld [vmem:[%s192 + $0x18] sm:$0xff]
    %v197 = vstv %s191
    %v198 = vmul.f32 %v197, %v193
    %v199 = vmul.f32 %v197, %v194
    %v200 = vmul.f32 %v197, %v195
    %v201 = vmul.f32 %v197, %v196
    %v202 = vadd.f32 %v187, %v198
    %v203 = vadd.f32 %v188, %v199
    %v204 = vadd.f32 %v189, %v200
    %v205 = vadd.f32 %v190, %v201
    %s206 = sld [smem:[#allocation2 + $0x2]]
    %s207 = scalar_lea.vmem %s10, 64
    %v208 = vld [vmem:[%s207] sm:$0xff]
    %v209 = vld [vmem:[%s207 + $0x8] sm:$0xff]
    %v210 = vld [vmem:[%s207 + $0x10] sm:$0xff]
    %v211 = vld [vmem:[%s207 + $0x18] sm:$0xff]
    %v212 = vstv %s206
    %v213 = vmul.f32 %v212, %v208
    %v214 = vmul.f32 %v212, %v209
    %v215 = vmul.f32 %v212, %v210
    %v216 = vmul.f32 %v212, %v211
    %v217 = vadd.f32 %v202, %v213
    %v218 = vadd.f32 %v203, %v214
    %v219 = vadd.f32 %v204, %v215
    %v220 = vadd.f32 %v205, %v216
    %s221 = sld [smem:[#allocation2 + $0x3]]
    %s222 = scalar_lea.vmem %s10, 96
    %v223 = vld [vmem:[%s222] sm:$0xff]
    %v224 = vld [vmem:[%s222 + $0x8] sm:$0xff]
    %v225 = vld [vmem:[%s222 + $0x10] sm:$0xff]
    %v226 = vld [vmem:[%s222 + $0x18] sm:$0xff]
    %v227 = vstv %s221
    %v228 = vmul.f32 %v227, %v223
    %v229 = vmul.f32 %v227, %v224
    %v230 = vmul.f32 %v227, %v225
    %v231 = vmul.f32 %v227, %v226
    %v232 = vadd.f32 %v217, %v228
    %v233 = vadd.f32 %v218, %v229
    %v234 = vadd.f32 %v219, %v230
    %v235 = vadd.f32 %v220, %v231
    %s236 = sld [smem:[#allocation2 + $0x4]]
    %s237 = scalar_lea.vmem %s10, 128
    %v238 = vld [vmem:[%s237] sm:$0xff]
    %v239 = vld [vmem:[%s237 + $0x8] sm:$0xff]
    %v240 = vld [vmem:[%s237 + $0x10] sm:$0xff]
    %v241 = vld [vmem:[%s237 + $0x18] sm:$0xff]
    %v242 = vstv %s236
    %v243 = vmul.f32 %v242, %v238
    %v244 = vmul.f32 %v242, %v239
    %v245 = vmul.f32 %v242, %v240
    %v246 = vmul.f32 %v242, %v241
    %v247 = vadd.f32 %v232, %v243
    %v248 = vadd.f32 %v233, %v244
    %v249 = vadd.f32 %v234, %v245
    %v250 = vadd.f32 %v235, %v246
    %s251 = sld [smem:[#allocation2 + $0x5]]
    %s252 = scalar_lea.vmem %s10, 160
    %v253 = vld [vmem:[%s252] sm:$0xff]
    %v254 = vld [vmem:[%s252 + $0x8] sm:$0xff]
    %v255 = vld [vmem:[%s252 + $0x10] sm:$0xff]
    %v256 = vld [vmem:[%s252 + $0x18] sm:$0xff]
    %v257 = vstv %s251
    %v258 = vmul.f32 %v257, %v253
    %v259 = vmul.f32 %v257, %v254
    %v260 = vmul.f32 %v257, %v255
    %v261 = vmul.f32 %v257, %v256
    %v262 = vadd.f32 %v247, %v258
    %v263 = vadd.f32 %v248, %v259
    %v264 = vadd.f32 %v249, %v260
    %v265 = vadd.f32 %v250, %v261
    %s266 = sld [smem:[#allocation2 + $0x6]]
    %s267 = scalar_lea.vmem %s10, 192
    %v268 = vld [vmem:[%s267] sm:$0xff]
    %v269 = vld [vmem:[%s267 + $0x8] sm:$0xff]
    %v270 = vld [vmem:[%s267 + $0x10] sm:$0xff]
    %v271 = vld [vmem:[%s267 + $0x18] sm:$0xff]
    %v272 = vstv %s266
    %v273 = vmul.f32 %v272, %v268
    %v274 = vmul.f32 %v272, %v269
    %v275 = vmul.f32 %v272, %v270
    %v276 = vmul.f32 %v272, %v271
    %v277 = vadd.f32 %v262, %v273
    %v278 = vadd.f32 %v263, %v274
    %v279 = vadd.f32 %v264, %v275
    %v280 = vadd.f32 %v265, %v276
    %s281 = sld [smem:[#allocation2 + $0x7]]
    %s282 = scalar_lea.vmem %s10, 224
    %v283 = vld [vmem:[%s282] sm:$0xff]
    %v284 = vld [vmem:[%s282 + $0x8] sm:$0xff]
    %v285 = vld [vmem:[%s282 + $0x10] sm:$0xff]
    %v286 = vld [vmem:[%s282 + $0x18] sm:$0xff]
    %v287 = vstv %s281
    %v288 = vmul.f32 %v287, %v283
    %v289 = vmul.f32 %v287, %v284
    %v290 = vmul.f32 %v287, %v285
    %v291 = vmul.f32 %v287, %v286
    %v292 = vadd.f32 %v277, %v288
    %v293 = vadd.f32 %v278, %v289
    %v294 = vadd.f32 %v279, %v290
    %v295 = vadd.f32 %v280, %v291
    %s296 = sld [smem:[#allocation2 + $0x8]]
    %s297 = scalar_lea.vmem %s10, 256
    %v298 = vld [vmem:[%s297] sm:$0xff]
    %v299 = vld [vmem:[%s297 + $0x8] sm:$0xff]
    %v300 = vld [vmem:[%s297 + $0x10] sm:$0xff]
    %v301 = vld [vmem:[%s297 + $0x18] sm:$0xff]
    %v302 = vstv %s296
    %v303 = vmul.f32 %v302, %v298
    %v304 = vmul.f32 %v302, %v299
    %v305 = vmul.f32 %v302, %v300
    %v306 = vmul.f32 %v302, %v301
    %v307 = vadd.f32 %v292, %v303
    %v308 = vadd.f32 %v293, %v304
    %v309 = vadd.f32 %v294, %v305
    %v310 = vadd.f32 %v295, %v306
    %s311 = sld [smem:[#allocation2 + $0x9]]
    %s312 = scalar_lea.vmem %s10, 288
    %v313 = vld [vmem:[%s312] sm:$0xff]
    %v314 = vld [vmem:[%s312 + $0x8] sm:$0xff]
    %v315 = vld [vmem:[%s312 + $0x10] sm:$0xff]
    %v316 = vld [vmem:[%s312 + $0x18] sm:$0xff]
    %v317 = vstv %s311
    %v318 = vmul.f32 %v317, %v313
    %v319 = vmul.f32 %v317, %v314
    %v320 = vmul.f32 %v317, %v315
    %v321 = vmul.f32 %v317, %v316
    %v322 = vadd.f32 %v307, %v318
    %v323 = vadd.f32 %v308, %v319
    %v324 = vadd.f32 %v309, %v320
    %v325 = vadd.f32 %v310, %v321
    %s326 = sld [smem:[#allocation2 + $0xa]]
    %s327 = scalar_lea.vmem %s10, 320
    %v328 = vld [vmem:[%s327] sm:$0xff]
    %v329 = vld [vmem:[%s327 + $0x8] sm:$0xff]
    %v330 = vld [vmem:[%s327 + $0x10] sm:$0xff]
    %v331 = vld [vmem:[%s327 + $0x18] sm:$0xff]
    %v332 = vstv %s326
    %v333 = vmul.f32 %v332, %v328
    %v334 = vmul.f32 %v332, %v329
    %v335 = vmul.f32 %v332, %v330
    %v336 = vmul.f32 %v332, %v331
    %v337 = vadd.f32 %v322, %v333
    %v338 = vadd.f32 %v323, %v334
    %v339 = vadd.f32 %v324, %v335
    %v340 = vadd.f32 %v325, %v336
    %s341 = sld [smem:[#allocation2 + $0xb]]
    %s342 = scalar_lea.vmem %s10, 352
    %v343 = vld [vmem:[%s342] sm:$0xff]
    %v344 = vld [vmem:[%s342 + $0x8] sm:$0xff]
    %v345 = vld [vmem:[%s342 + $0x10] sm:$0xff]
    %v346 = vld [vmem:[%s342 + $0x18] sm:$0xff]
    %v347 = vstv %s341
    %v348 = vmul.f32 %v347, %v343
    %v349 = vmul.f32 %v347, %v344
    %v350 = vmul.f32 %v347, %v345
    %v351 = vmul.f32 %v347, %v346
    %v352 = vadd.f32 %v337, %v348
    %v353 = vadd.f32 %v338, %v349
    %v354 = vadd.f32 %v339, %v350
    %v355 = vadd.f32 %v340, %v351
    %s356 = sld [smem:[#allocation2 + $0xc]]
    %s357 = scalar_lea.vmem %s10, 384
    %v358 = vld [vmem:[%s357] sm:$0xff]
    %v359 = vld [vmem:[%s357 + $0x8] sm:$0xff]
    %v360 = vld [vmem:[%s357 + $0x10] sm:$0xff]
    %v361 = vld [vmem:[%s357 + $0x18] sm:$0xff]
    %v362 = vstv %s356
    %v363 = vmul.f32 %v362, %v358
    %v364 = vmul.f32 %v362, %v359
    %v365 = vmul.f32 %v362, %v360
    %v366 = vmul.f32 %v362, %v361
    %v367 = vadd.f32 %v352, %v363
    %v368 = vadd.f32 %v353, %v364
    %v369 = vadd.f32 %v354, %v365
    %v370 = vadd.f32 %v355, %v366
    %s371 = sld [smem:[#allocation2 + $0xd]]
    %s372 = scalar_lea.vmem %s10, 416
    %v373 = vld [vmem:[%s372] sm:$0xff]
    %v374 = vld [vmem:[%s372 + $0x8] sm:$0xff]
    %v375 = vld [vmem:[%s372 + $0x10] sm:$0xff]
    %v376 = vld [vmem:[%s372 + $0x18] sm:$0xff]
    %v377 = vstv %s371
    %v378 = vmul.f32 %v377, %v373
    %v379 = vmul.f32 %v377, %v374
    %v380 = vmul.f32 %v377, %v375
    %v381 = vmul.f32 %v377, %v376
    %v382 = vadd.f32 %v367, %v378
    %v383 = vadd.f32 %v368, %v379
    %v384 = vadd.f32 %v369, %v380
    %v385 = vadd.f32 %v370, %v381
    %s386 = sld [smem:[#allocation2 + $0xe]]
    %s387 = scalar_lea.vmem %s10, 448
    %v388 = vld [vmem:[%s387] sm:$0xff]
    %v389 = vld [vmem:[%s387 + $0x8] sm:$0xff]
    %v390 = vld [vmem:[%s387 + $0x10] sm:$0xff]
    %v391 = vld [vmem:[%s387 + $0x18] sm:$0xff]
    %v392 = vstv %s386
    %v393 = vmul.f32 %v392, %v388
    %v394 = vmul.f32 %v392, %v389
    %v395 = vmul.f32 %v392, %v390
    %v396 = vmul.f32 %v392, %v391
    %v397 = vadd.f32 %v382, %v393
    %v398 = vadd.f32 %v383, %v394
    %v399 = vadd.f32 %v384, %v395
    %v400 = vadd.f32 %v385, %v396
    %s401 = sld [smem:[#allocation2 + $0xf]]
    %s402 = scalar_lea.vmem %s10, 480
    %v403 = vld [vmem:[%s402] sm:$0xff]
    %v404 = vld [vmem:[%s402 + $0x8] sm:$0xff]
    %v405 = vld [vmem:[%s402 + $0x10] sm:$0xff]
    %v406 = vld [vmem:[%s402 + $0x18] sm:$0xff]
    %v407 = vstv %s401
    %v408 = vmul.f32 %v407, %v403
    %v409 = vmul.f32 %v407, %v404
    %v410 = vmul.f32 %v407, %v405
    %v411 = vmul.f32 %v407, %v406
    %v412 = vadd.f32 %v397, %v408
    %v413 = vadd.f32 %v398, %v409
    %v414 = vadd.f32 %v399, %v410
    %v415 = vadd.f32 %v400, %v411
    %s416 = sld [smem:[#allocation2 + $0x10]]
    %s417 = scalar_lea.vmem %s10, 512
    %v418 = vld [vmem:[%s417] sm:$0xff]
    %v419 = vld [vmem:[%s417 + $0x8] sm:$0xff]
    %v420 = vld [vmem:[%s417 + $0x10] sm:$0xff]
    %v421 = vld [vmem:[%s417 + $0x18] sm:$0xff]
    %v422 = vstv %s416
    %v423 = vmul.f32 %v422, %v418
    %v424 = vmul.f32 %v422, %v419
    %v425 = vmul.f32 %v422, %v420
    %v426 = vmul.f32 %v422, %v421
    %v427 = vadd.f32 %v412, %v423
    %v428 = vadd.f32 %v413, %v424
    %v429 = vadd.f32 %v414, %v425
    %v430 = vadd.f32 %v415, %v426
    %s431 = sld [smem:[#allocation2 + $0x11]]
    %s432 = scalar_lea.vmem %s10, 544
    %v433 = vld [vmem:[%s432] sm:$0xff]
    %v434 = vld [vmem:[%s432 + $0x8] sm:$0xff]
    %v435 = vld [vmem:[%s432 + $0x10] sm:$0xff]
    %v436 = vld [vmem:[%s432 + $0x18] sm:$0xff]
    %v437 = vstv %s431
    %v438 = vmul.f32 %v437, %v433
    %v439 = vmul.f32 %v437, %v434
    %v440 = vmul.f32 %v437, %v435
    %v441 = vmul.f32 %v437, %v436
    %v442 = vadd.f32 %v427, %v438
    %v443 = vadd.f32 %v428, %v439
    %v444 = vadd.f32 %v429, %v440
    %v445 = vadd.f32 %v430, %v441
    %v446 = vlaneseq
    %v447 = vshrl.u32 %v446, 7
    %v448 = vsub.s32 0, %v447
    %v449 = vrot.slane %v172, %v448
    %v450 = vmul.f32 %v449, %v442
    %v451 = vmul.f32 %v449, %v443
    %v452 = vmul.f32 %v449, %v444
    %v453 = vmul.f32 %v449, %v445
    %v454 = vadd.f32 %v173, %v450
    %v455 = vadd.f32 %v174, %v451
    %v456 = vadd.f32 %v175, %v452
    %v457 = vadd.f32 %v176, %v453
    %v458 = vld [vmem:[%s9] sm:$0x1]
    %v459 = vld [vmem:[%s11] sm:$0xff]
    %v460 = vld [vmem:[%s11 + $0x8] sm:$0xff]
    %v461 = vld [vmem:[%s11 + $0x10] sm:$0x3]
    %vm462 = vcmask 146432
    %v464 = vsel %vm462, %v160, 0
    %vm466 = vcmask 1041408
    %v468 = vsel %vm466, %v461, 0
    %470 = vmatprep.subr.mxu0 0.0
    %471 = vmatpush1.msra.mxu0 %v459
    %472 = vmatprep.subr.mxu0 0.0
    %473 = vmatpush1.msra.mxu0 %v460
    %474 = vmatprep.subr.mxu0 0.0
    %475 = vmatpush1.msra.mxu0 %v468
    %476 = vmatprep.subr.mxu0 0.0
    %477 = vmatpush1.msra.mxu0 0.0
    %478 = vmatprep.subr.mxu0 0.0
    %479 = vmatpush1.msra.mxu0 0.0
    %480 = vmatprep.subr.mxu0 0.0
    %481 = vmatpush1.msra.mxu0 0.0
    %482 = vmatprep.subr.mxu0 0.0
    %483 = vmatpush1.msra.mxu0 0.0
    %484 = vmatprep.subr.mxu0 0.0
    %485 = vmatpush1.msra.mxu0 0.0
    %486 = vmatprep.subr.mxu0 0.0
    %487 = vmatpush1.msra.mxu0 0.0
    %488 = vmatprep.subr.mxu0 0.0
    %489 = vmatpush1.msra.mxu0 0.0
    %490 = vmatprep.subr.mxu0 0.0
    %491 = vmatpush1.msra.mxu0 0.0
    %492 = vmatprep.subr.mxu0 0.0
    %493 = vmatpush1.msra.mxu0 0.0
    %494 = vmatprep.subr.mxu0 0.0
    %495 = vmatpush1.msra.mxu0 0.0
    %496 = vmatprep.subr.mxu0 0.0
    %497 = vmatpush1.msra.mxu0 0.0
    %498 = vmatprep.subr.mxu0 0.0
    %499 = vmatpush1.msra.mxu0 0.0
    %500 = vmatprep.subr.mxu0 0.0
    %501 = vmatpush1.msra.mxu0 0.0
    %502 = vmatprep.subr.mxu0 0.0
    %503 = vmatpush1.msra.mxu0 0.0
    %504 = vmatprep.subr.mxu0 0.0
    %505 = vmatpush1.msra.mxu0 0.0
    %506 = vmatprep.subr.mxu0 0.0
    %507 = vmatpush1.msra.mxu0 0.0
    %508 = vmatprep.subr.mxu0 0.0
    %509 = vmatpush1.msra.mxu0 0.0
    %510 = vmatprep.subr.mxu0 0.0
    %511 = vmatpush1.msra.mxu0 0.0
    %512 = vmatprep.subr.mxu0 0.0
    %513 = vmatpush1.msra.mxu0 0.0
    %514 = vmatprep.subr.mxu0 0.0
    %515 = vmatpush1.msra.mxu0 0.0
    %516 = vmatprep.subr.mxu0 0.0
    %517 = vmatpush1.msra.mxu0 0.0
    %518 = vmatprep.subr.mxu0 0.0
    %519 = vmatpush1.msra.mxu0 0.0
    %520 = vmatprep.subr.mxu0 0.0
    %521 = vmatpush1.msra.mxu0 0.0
    %522 = vmatprep.subr.mxu0 0.0
    %523 = vmatpush1.msra.mxu0 0.0
    %524 = vmatprep.subr.mxu0 0.0
    %525 = vmatpush1.msra.mxu0 0.0
    %526 = vmatprep.subr.mxu0 0.0
    %527 = vmatpush1.msra.mxu0 0.0
    %528 = vmatprep.subr.mxu0 0.0
    %529 = vmatpush1.msra.mxu0 0.0
    %530 = vmatprep.subr.mxu0 0.0
    %531 = vmatpush1.msra.mxu0 0.0
    %532 = vmatprep.subr.mxu0 0.0
    %533 = vmatpush1.msra.mxu0 0.0
    %534 = vmatprep.mubr.f32.mxu0 0.0
    %535 = vmatmul.mubr.f32.gmra.mrb[0].mxu0 %v464
    %v536 = vpop.f32.mrb[0].mxu0
    %v537 = vadd.f32 0.0, %v536
    %v538 = vpop.f32.mrb[0].mxu0
    %539 = vdwg.mxu0
    %v540 = vmul.f32 %v172, %v537
    %v541 = vadd.f32 %v458, %v540
    %v543 = vlaneseq
    %v544 = vshrl.u32 %v543, 7
    %v545 = vsub.s32 0, %v544
    %v546 = vrot.slane %v541, %v545
    %v549 = vsel %vm116, %v158, 0
    %v552 = vsel %vm116, %v159, 0
    %554 = vmatprep.subr.mxu0 0.0
    %555 = vmatpush1.msra.mxu0 %v454
    %556 = vmatprep.subr.mxu0 0.0
    %557 = vmatpush1.msra.mxu0 %v455
    %558 = vmatprep.subr.mxu0 0.0
    %559 = vmatpush1.msra.mxu0 %v456
    %560 = vmatprep.subr.mxu0 0.0
    %561 = vmatpush1.msra.mxu0 %v457
    %562 = vmatprep.subr.mxu0 0.0
    %563 = vmatpush1.msra.mxu0 0.0
    %564 = vmatprep.subr.mxu0 0.0
    %565 = vmatpush1.msra.mxu0 0.0
    %566 = vmatprep.subr.mxu0 0.0
    %567 = vmatpush1.msra.mxu0 0.0
    %568 = vmatprep.subr.mxu0 0.0
    %569 = vmatpush1.msra.mxu0 0.0
    %570 = vmatprep.subr.mxu0 0.0
    %571 = vmatpush1.msra.mxu0 0.0
    %572 = vmatprep.subr.mxu0 0.0
    %573 = vmatpush1.msra.mxu0 0.0
    %574 = vmatprep.subr.mxu0 0.0
    %575 = vmatpush1.msra.mxu0 0.0
    %576 = vmatprep.subr.mxu0 0.0
    %577 = vmatpush1.msra.mxu0 0.0
    %578 = vmatprep.subr.mxu0 0.0
    %579 = vmatpush1.msra.mxu0 0.0
    %580 = vmatprep.subr.mxu0 0.0
    %581 = vmatpush1.msra.mxu0 0.0
    %582 = vmatprep.subr.mxu0 0.0
    %583 = vmatpush1.msra.mxu0 0.0
    %584 = vmatprep.subr.mxu0 0.0
    %585 = vmatpush1.msra.mxu0 0.0
    %586 = vmatprep.subr.mxu0 0.0
    %587 = vmatpush1.msra.mxu0 0.0
    %588 = vmatprep.subr.mxu0 0.0
    %589 = vmatpush1.msra.mxu0 0.0
    %590 = vmatprep.subr.mxu0 0.0
    %591 = vmatpush1.msra.mxu0 0.0
    %592 = vmatprep.subr.mxu0 0.0
    %593 = vmatpush1.msra.mxu0 0.0
    %594 = vmatprep.subr.mxu0 0.0
    %595 = vmatpush1.msra.mxu0 0.0
    %596 = vmatprep.subr.mxu0 0.0
    %597 = vmatpush1.msra.mxu0 0.0
    %598 = vmatprep.subr.mxu0 0.0
    %599 = vmatpush1.msra.mxu0 0.0
    %600 = vmatprep.subr.mxu0 0.0
    %601 = vmatpush1.msra.mxu0 0.0
    %602 = vmatprep.subr.mxu0 0.0
    %603 = vmatpush1.msra.mxu0 0.0
    %604 = vmatprep.subr.mxu0 0.0
    %605 = vmatpush1.msra.mxu0 0.0
    %606 = vmatprep.subr.mxu0 0.0
    %607 = vmatpush1.msra.mxu0 0.0
    %608 = vmatprep.subr.mxu0 0.0
    %609 = vmatpush1.msra.mxu0 0.0
    %610 = vmatprep.subr.mxu0 0.0
    %611 = vmatpush1.msra.mxu0 0.0
    %612 = vmatprep.subr.mxu0 0.0
    %613 = vmatpush1.msra.mxu0 0.0
    %614 = vmatprep.subr.mxu0 0.0
    %615 = vmatpush1.msra.mxu0 0.0
    %616 = vmatprep.subr.mxu0 0.0
    %617 = vmatpush1.msra.mxu0 0.0
    %618 = vmatprep.mubr.f32.mxu0 0.0
    %619 = vmatmul.mubr.f32.gmra.mrb[0].mxu0 %v549
    %v620 = vpop.f32.mrb[0].mxu0
    %v621 = vadd.f32 %v546, %v620
    %v622 = vpop.f32.mrb[0].mxu0
    %623 = vmatprep.mubr.f32.mxu0 0.0
    %624 = vmatmul.mubr.f32.gmra.mrb[0].mxu0 %v552
    %v625 = vpop.f32.mrb[0].mxu0
    %v626 = vadd.f32 %v546, %v625
    %v627 = vpop.f32.mrb[0].mxu0
    %628 = vdwg.mxu0
    %v629 = vld [vmem:[%s1] sm:$0x3]
    %v630 = vsub.f32 1.0, %v629
    %v631 = vmul.f32 %v630, -1e+09
    %633 = vrot.lane.b32.xlu0 %v621, 96
    %v634 = vpop.permute.xlu0 %633
    %vm635 = vcmask 130048
    %v636 = vsel %vm635, %v621, 0
    %v638 = vsel %vm635, %v634, 0
    %640 = vmatprep.subr.mxu0 0.0
    %641 = vmatpush1.xpose.msra.mxu0 %v638
    %642 = vmatprep.subr.mxu0 0.0
    %643 = vmatpush1.xpose.msra.mxu0 0.0
    %644 = vmatprep.subr.mxu0 0.0
    %645 = vmatpush1.xpose.msra.mxu0 0.0
    %646 = vmatprep.subr.mxu0 0.0
    %647 = vmatpush1.xpose.msra.mxu0 0.0
    %648 = vmatprep.subr.mxu0 0.0
    %649 = vmatpush1.xpose.msra.mxu0 0.0
    %650 = vmatprep.subr.mxu0 0.0
    %651 = vmatpush1.xpose.msra.mxu0 0.0
    %652 = vmatprep.subr.mxu0 0.0
    %653 = vmatpush1.xpose.msra.mxu0 0.0
    %654 = vmatprep.subr.mxu0 0.0
    %655 = vmatpush1.xpose.msra.mxu0 0.0
    %656 = vmatprep.subr.mxu0 0.0
    %657 = vmatpush1.xpose.msra.mxu0 0.0
    %658 = vmatprep.subr.mxu0 0.0
    %659 = vmatpush1.xpose.msra.mxu0 0.0
    %660 = vmatprep.subr.mxu0 0.0
    %661 = vmatpush1.xpose.msra.mxu0 0.0
    %662 = vmatprep.subr.mxu0 0.0
    %663 = vmatpush1.xpose.msra.mxu0 0.0
    %664 = vmatprep.subr.mxu0 0.0
    %665 = vmatpush1.xpose.msra.mxu0 0.0
    %666 = vmatprep.subr.mxu0 0.0
    %667 = vmatpush1.xpose.msra.mxu0 0.0
    %668 = vmatprep.subr.mxu0 0.0
    %669 = vmatpush1.xpose.msra.mxu0 0.0
    %670 = vmatprep.subr.mxu0 0.0
    %671 = vmatpush1.xpose.msra.mxu0 0.0
    %672 = vmatprep.subr.mxu0 0.0
    %673 = vmatpush1.xpose.msra.mxu0 0.0
    %674 = vmatprep.subr.mxu0 0.0
    %675 = vmatpush1.xpose.msra.mxu0 0.0
    %676 = vmatprep.subr.mxu0 0.0
    %677 = vmatpush1.xpose.msra.mxu0 0.0
    %678 = vmatprep.subr.mxu0 0.0
    %679 = vmatpush1.xpose.msra.mxu0 0.0
    %680 = vmatprep.subr.mxu0 0.0
    %681 = vmatpush1.xpose.msra.mxu0 0.0
    %682 = vmatprep.subr.mxu0 0.0
    %683 = vmatpush1.xpose.msra.mxu0 0.0
    %684 = vmatprep.subr.mxu0 0.0
    %685 = vmatpush1.xpose.msra.mxu0 0.0
    %686 = vmatprep.subr.mxu0 0.0
    %687 = vmatpush1.xpose.msra.mxu0 0.0
    %688 = vmatprep.subr.mxu0 0.0
    %689 = vmatpush1.xpose.msra.mxu0 0.0
    %690 = vmatprep.subr.mxu0 0.0
    %691 = vmatpush1.xpose.msra.mxu0 0.0
    %692 = vmatprep.subr.mxu0 0.0
    %693 = vmatpush1.xpose.msra.mxu0 0.0
    %694 = vmatprep.subr.mxu0 0.0
    %695 = vmatpush1.xpose.msra.mxu0 0.0
    %696 = vmatprep.subr.mxu0 0.0
    %697 = vmatpush1.xpose.msra.mxu0 0.0
    %698 = vmatprep.subr.mxu0 0.0
    %699 = vmatpush1.xpose.msra.mxu0 0.0
    %700 = vmatprep.subr.mxu0 0.0
    %701 = vmatpush1.xpose.msra.mxu0 0.0
    %702 = vmatprep.subr.mxu0 0.0
    %703 = vmatpush1.xpose.msra.mxu0 0.0
    %704 = vmatprep.mubr.f32.mxu0 0.0
    %705 = vmatmul.mubr.f32.gmra.mrb[0].mxu0 %v636
    %v706 = vpop.f32.mrb[0].mxu0
    %v707 = vadd.f32 0.0, %v706
    %v708 = vpop.f32.mrb[0].mxu0
    %709 = vdwg.mxu0
    %v710 = vmul.f32 %v707, 0.25
    %v711 = vlaneseq
    %v712 = vshrl.u32 %v711, 7
    %v713 = vsub.s32 0, %v712
    %v714 = vrot.slane %v631, %v713
    %v715 = vadd.f32 %v710, %v714
    %vm716 = vcmask 64512
    %v717 = vsel %vm716, %v715, -inf
    %718 = vmax.xlane.f32.xlu0 %v717
    %v719 = vpop.xlane.xlu0 %718
    %v720 = vsub.f32 %v715, %v719
    %v721 = vmul.f32 %v720, 1.442695
    %v722 = vpow.pop %v721
    %v723 = vsel %vm716, %v722, 0.0
    %724 = vadd.xlane.f32.xlu0 %v723
    %v725 = vpop.xlane.xlu0 %724
    %v726 = vrcp.pop %v725
    %v727 = vmul.f32 %v722, %v726
    %728 = vrot.lane.b32.xlu0 %v621, 64
    %v729 = vpop.permute.xlu0 %728
    %v732 = vsel %vm716, %v727, 0
    %734 = vmatprep.subr.mxu0 0.0
    %735 = vmatpush1.msra.mxu0 %v729
    %736 = vmatprep.subr.mxu0 0.0
    %737 = vmatpush1.msra.mxu0 0.0
    %738 = vmatprep.subr.mxu0 0.0
    %739 = vmatpush1.msra.mxu0 0.0
    %740 = vmatprep.subr.mxu0 0.0
    %741 = vmatpush1.msra.mxu0 0.0
    %742 = vmatprep.subr.mxu0 0.0
    %743 = vmatpush1.msra.mxu0 0.0
    %744 = vmatprep.subr.mxu0 0.0
    %745 = vmatpush1.msra.mxu0 0.0
    %746 = vmatprep.subr.mxu0 0.0
    %747 = vmatpush1.msra.mxu0 0.0
    %748 = vmatprep.subr.mxu0 0.0
    %749 = vmatpush1.msra.mxu0 0.0
    %750 = vmatprep.subr.mxu0 0.0
    %751 = vmatpush1.msra.mxu0 0.0
    %752 = vmatprep.subr.mxu0 0.0
    %753 = vmatpush1.msra.mxu0 0.0
    %754 = vmatprep.subr.mxu0 0.0
    %755 = vmatpush1.msra.mxu0 0.0
    %756 = vmatprep.subr.mxu0 0.0
    %757 = vmatpush1.msra.mxu0 0.0
    %758 = vmatprep.subr.mxu0 0.0
    %759 = vmatpush1.msra.mxu0 0.0
    %760 = vmatprep.subr.mxu0 0.0
    %761 = vmatpush1.msra.mxu0 0.0
    %762 = vmatprep.subr.mxu0 0.0
    %763 = vmatpush1.msra.mxu0 0.0
    %764 = vmatprep.subr.mxu0 0.0
    %765 = vmatpush1.msra.mxu0 0.0
    %766 = vmatprep.subr.mxu0 0.0
    %767 = vmatpush1.msra.mxu0 0.0
    %768 = vmatprep.subr.mxu0 0.0
    %769 = vmatpush1.msra.mxu0 0.0
    %770 = vmatprep.subr.mxu0 0.0
    %771 = vmatpush1.msra.mxu0 0.0
    %772 = vmatprep.subr.mxu0 0.0
    %773 = vmatpush1.msra.mxu0 0.0
    %774 = vmatprep.subr.mxu0 0.0
    %775 = vmatpush1.msra.mxu0 0.0
    %776 = vmatprep.subr.mxu0 0.0
    %777 = vmatpush1.msra.mxu0 0.0
    %778 = vmatprep.subr.mxu0 0.0
    %779 = vmatpush1.msra.mxu0 0.0
    %780 = vmatprep.subr.mxu0 0.0
    %781 = vmatpush1.msra.mxu0 0.0
    %782 = vmatprep.subr.mxu0 0.0
    %783 = vmatpush1.msra.mxu0 0.0
    %784 = vmatprep.subr.mxu0 0.0
    %785 = vmatpush1.msra.mxu0 0.0
    %786 = vmatprep.subr.mxu0 0.0
    %787 = vmatpush1.msra.mxu0 0.0
    %788 = vmatprep.subr.mxu0 0.0
    %789 = vmatpush1.msra.mxu0 0.0
    %790 = vmatprep.subr.mxu0 0.0
    %791 = vmatpush1.msra.mxu0 0.0
    %792 = vmatprep.subr.mxu0 0.0
    %793 = vmatpush1.msra.mxu0 0.0
    %794 = vmatprep.subr.mxu0 0.0
    %795 = vmatpush1.msra.mxu0 0.0
    %796 = vmatprep.subr.mxu0 0.0
    %797 = vmatpush1.msra.mxu0 0.0
    %798 = vmatprep.mubr.f32.mxu0 0.0
    %799 = vmatmul.mubr.f32.gmra.mrb[0].mxu0 %v732
    %v800 = vpop.f32.mrb[0].mxu0
    %v801 = vadd.f32 0.0, %v800
    %v802 = vpop.f32.mrb[0].mxu0
    %803 = vdwg.mxu0
    %804 = vrot.lane.b32.xlu0 %v621, 112
    %v805 = vpop.permute.xlu0 %804
    %806 = vrot.lane.b32.xlu0 %v621, 80
    %v807 = vpop.permute.xlu0 %806
    %v808 = vsel %vm635, %v805, 0
    %v810 = vsel %vm635, %v807, 0
    %812 = vmatprep.subr.mxu0 0.0
    %813 = vmatpush1.xpose.msra.mxu0 %v810
    %814 = vmatprep.subr.mxu0 0.0
    %815 = vmatpush1.xpose.msra.mxu0 0.0
    %816 = vmatprep.subr.mxu0 0.0
    %817 = vmatpush1.xpose.msra.mxu0 0.0
    %818 = vmatprep.subr.mxu0 0.0
    %819 = vmatpush1.xpose.msra.mxu0 0.0
    %820 = vmatprep.subr.mxu0 0.0
    %821 = vmatpush1.xpose.msra.mxu0 0.0
    %822 = vmatprep.subr.mxu0 0.0
    %823 = vmatpush1.xpose.msra.mxu0 0.0
    %824 = vmatprep.subr.mxu0 0.0
    %825 = vmatpush1.xpose.msra.mxu0 0.0
    %826 = vmatprep.subr.mxu0 0.0
    %827 = vmatpush1.xpose.msra.mxu0 0.0
    %828 = vmatprep.subr.mxu0 0.0
    %829 = vmatpush1.xpose.msra.mxu0 0.0
    %830 = vmatprep.subr.mxu0 0.0
    %831 = vmatpush1.xpose.msra.mxu0 0.0
    %832 = vmatprep.subr.mxu0 0.0
    %833 = vmatpush1.xpose.msra.mxu0 0.0
    %834 = vmatprep.subr.mxu0 0.0
    %835 = vmatpush1.xpose.msra.mxu0 0.0
    %836 = vmatprep.subr.mxu0 0.0
    %837 = vmatpush1.xpose.msra.mxu0 0.0
    %838 = vmatprep.subr.mxu0 0.0
    %839 = vmatpush1.xpose.msra.mxu0 0.0
    %840 = vmatprep.subr.mxu0 0.0
    %841 = vmatpush1.xpose.msra.mxu0 0.0
    %842 = vmatprep.subr.mxu0 0.0
    %843 = vmatpush1.xpose.msra.mxu0 0.0
    %844 = vmatprep.subr.mxu0 0.0
    %845 = vmatpush1.xpose.msra.mxu0 0.0
    %846 = vmatprep.subr.mxu0 0.0
    %847 = vmatpush1.xpose.msra.mxu0 0.0
    %848 = vmatprep.subr.mxu0 0.0
    %849 = vmatpush1.xpose.msra.mxu0 0.0
    %850 = vmatprep.subr.mxu0 0.0
    %851 = vmatpush1.xpose.msra.mxu0 0.0
    %852 = vmatprep.subr.mxu0 0.0
    %853 = vmatpush1.xpose.msra.mxu0 0.0
    %854 = vmatprep.subr.mxu0 0.0
    %855 = vmatpush1.xpose.msra.mxu0 0.0
    %856 = vmatprep.subr.mxu0 0.0
    %857 = vmatpush1.xpose.msra.mxu0 0.0
    %858 = vmatprep.subr.mxu0 0.0
    %859 = vmatpush1.xpose.msra.mxu0 0.0
    %860 = vmatprep.subr.mxu0 0.0
    %861 = vmatpush1.xpose.msra.mxu0 0.0
    %862 = vmatprep.subr.mxu0 0.0
    %863 = vmatpush1.xpose.msra.mxu0 0.0
    %864 = vmatprep.subr.mxu0 0.0
    %865 = vmatpush1.xpose.msra.mxu0 0.0
    %866 = vmatprep.subr.mxu0 0.0
    %867 = vmatpush1.xpose.msra.mxu0 0.0
    %868 = vmatprep.subr.mxu0 0.0
    %869 = vmatpush1.xpose.msra.mxu0 0.0
    %870 = vmatprep.subr.mxu0 0.0
    %871 = vmatpush1.xpose.msra.mxu0 0.0
    %872 = vmatprep.subr.mxu0 0.0
    %873 = vmatpush1.xpose.msra.mxu0 0.0
    %874 = vmatprep.subr.mxu0 0.0
    %875 = vmatpush1.xpose.msra.mxu0 0.0
    %876 = vmatprep.mubr.f32.mxu0 0.0
    %877 = vmatmul.mubr.f32.gmra.mrb[0].mxu0 %v808
    %v878 = vpop.f32.mrb[0].mxu0
    %v879 = vadd.f32 0.0, %v878
    %v880 = vpop.f32.mrb[0].mxu0
    %881 = vdwg.mxu0
    %v882 = vmul.f32 %v879, 0.25
    %v883 = vadd.f32 %v882, %v714
    %v884 = vsel %vm716, %v883, -inf
    %885 = vmax.xlane.f32.xlu0 %v884
    %v886 = vpop.xlane.xlu0 %885
    %v887 = vsub.f32 %v883, %v886
    %v888 = vmul.f32 %v887, 1.442695
    %v889 = vpow.pop %v888
    %v890 = vsel %vm716, %v889, 0.0
    %891 = vadd.xlane.f32.xlu0 %v890
    %v892 = vpop.xlane.xlu0 %891
    %v893 = vrcp.pop %v892
    %v894 = vmul.f32 %v889, %v893
    %895 = vrot.lane.b32.xlu0 %v621, 48
    %v896 = vpop.permute.xlu0 %895
    %v899 = vsel %vm716, %v894, 0
    %901 = vmatprep.subr.mxu0 0.0
    %902 = vmatpush1.msra.mxu0 %v896
    %903 = vmatprep.subr.mxu0 0.0
    %904 = vmatpush1.msra.mxu0 0.0
    %905 = vmatprep.subr.mxu0 0.0
    %906 = vmatpush1.msra.mxu0 0.0
    %907 = vmatprep.subr.mxu0 0.0
    %908 = vmatpush1.msra.mxu0 0.0
    %909 = vmatprep.subr.mxu0 0.0
    %910 = vmatpush1.msra.mxu0 0.0
    %911 = vmatprep.subr.mxu0 0.0
    %912 = vmatpush1.msra.mxu0 0.0
    %913 = vmatprep.subr.mxu0 0.0
    %914 = vmatpush1.msra.mxu0 0.0
    %915 = vmatprep.subr.mxu0 0.0
    %916 = vmatpush1.msra.mxu0 0.0
    %917 = vmatprep.subr.mxu0 0.0
    %918 = vmatpush1.msra.mxu0 0.0
    %919 = vmatprep.subr.mxu0 0.0
    %920 = vmatpush1.msra.mxu0 0.0
    %921 = vmatprep.subr.mxu0 0.0
    %922 = vmatpush1.msra.mxu0 0.0
    %923 = vmatprep.subr.mxu0 0.0
    %924 = vmatpush1.msra.mxu0 0.0
    %925 = vmatprep.subr.mxu0 0.0
    %926 = vmatpush1.msra.mxu0 0.0
    %927 = vmatprep.subr.mxu0 0.0
    %928 = vmatpush1.msra.mxu0 0.0
    %929 = vmatprep.subr.mxu0 0.0
    %930 = vmatpush1.msra.mxu0 0.0
    %931 = vmatprep.subr.mxu0 0.0
    %932 = vmatpush1.msra.mxu0 0.0
    %933 = vmatprep.subr.mxu0 0.0
    %934 = vmatpush1.msra.mxu0 0.0
    %935 = vmatprep.subr.mxu0 0.0
    %936 = vmatpush1.msra.mxu0 0.0
    %937 = vmatprep.subr.mxu0 0.0
    %938 = vmatpush1.msra.mxu0 0.0
    %939 = vmatprep.subr.mxu0 0.0
    %940 = vmatpush1.msra.mxu0 0.0
    %941 = vmatprep.subr.mxu0 0.0
    %942 = vmatpush1.msra.mxu0 0.0
    %943 = vmatprep.subr.mxu0 0.0
    %944 = vmatpush1.msra.mxu0 0.0
    %945 = vmatprep.subr.mxu0 0.0
    %946 = vmatpush1.msra.mxu0 0.0
    %947 = vmatprep.subr.mxu0 0.0
    %948 = vmatpush1.msra.mxu0 0.0
    %949 = vmatprep.subr.mxu0 0.0
    %950 = vmatpush1.msra.mxu0 0.0
    %951 = vmatprep.subr.mxu0 0.0
    %952 = vmatpush1.msra.mxu0 0.0
    %953 = vmatprep.subr.mxu0 0.0
    %954 = vmatpush1.msra.mxu0 0.0
    %955 = vmatprep.subr.mxu0 0.0
    %956 = vmatpush1.msra.mxu0 0.0
    %957 = vmatprep.subr.mxu0 0.0
    %958 = vmatpush1.msra.mxu0 0.0
    %959 = vmatprep.subr.mxu0 0.0
    %960 = vmatpush1.msra.mxu0 0.0
    %961 = vmatprep.subr.mxu0 0.0
    %962 = vmatpush1.msra.mxu0 0.0
    %963 = vmatprep.subr.mxu0 0.0
    %964 = vmatpush1.msra.mxu0 0.0
    %965 = vmatprep.mubr.f32.mxu0 0.0
    %966 = vmatmul.mubr.f32.gmra.mrb[0].mxu0 %v899
    %v967 = vpop.f32.mrb[0].mxu0
    %v968 = vadd.f32 0.0, %v967
    %v969 = vpop.f32.mrb[0].mxu0
    %970 = vdwg.mxu0
    %972 = vrot.lane.b32.xlu0 %v968, 16
    %v973 = vpop.permute.xlu0 %972
    %v975 = vsel %vm635, %v801, %v973
    %977 = vrot.lane.b32.xlu0 %v626, 96
    %v978 = vpop.permute.xlu0 %977
    %v979 = vsel %vm635, %v626, 0
    %v981 = vsel %vm635, %v978, 0
    %983 = vmatprep.subr.mxu0 0.0
    %984 = vmatpush1.xpose.msra.mxu0 %v981
    %985 = vmatprep.subr.mxu0 0.0
    %986 = vmatpush1.xpose.msra.mxu0 0.0
    %987 = vmatprep.subr.mxu0 0.0
    %988 = vmatpush1.xpose.msra.mxu0 0.0
    %989 = vmatprep.subr.mxu0 0.0
    %990 = vmatpush1.xpose.msra.mxu0 0.0
    %991 = vmatprep.subr.mxu0 0.0
    %992 = vmatpush1.xpose.msra.mxu0 0.0
    %993 = vmatprep.subr.mxu0 0.0
    %994 = vmatpush1.xpose.msra.mxu0 0.0
    %995 = vmatprep.subr.mxu0 0.0
    %996 = vmatpush1.xpose.msra.mxu0 0.0
    %997 = vmatprep.subr.mxu0 0.0
    %998 = vmatpush1.xpose.msra.mxu0 0.0
    %999 = vmatprep.subr.mxu0 0.0
    %1000 = vmatpush1.xpose.msra.mxu0 0.0
    %1001 = vmatprep.subr.mxu0 0.0
    %1002 = vmatpush1.xpose.msra.mxu0 0.0
    %1003 = vmatprep.subr.mxu0 0.0
    %1004 = vmatpush1.xpose.msra.mxu0 0.0
    %1005 = vmatprep.subr.mxu0 0.0
    %1006 = vmatpush1.xpose.msra.mxu0 0.0
    %1007 = vmatprep.subr.mxu0 0.0
    %1008 = vmatpush1.xpose.msra.mxu0 0.0
    %1009 = vmatprep.subr.mxu0 0.0
    %1010 = vmatpush1.xpose.msra.mxu0 0.0
    %1011 = vmatprep.subr.mxu0 0.0
    %1012 = vmatpush1.xpose.msra.mxu0 0.0
    %1013 = vmatprep.subr.mxu0 0.0
    %1014 = vmatpush1.xpose.msra.mxu0 0.0
    %1015 = vmatprep.subr.mxu0 0.0
    %1016 = vmatpush1.xpose.msra.mxu0 0.0
    %1017 = vmatprep.subr.mxu0 0.0
    %1018 = vmatpush1.xpose.msra.mxu0 0.0
    %1019 = vmatprep.subr.mxu0 0.0
    %1020 = vmatpush1.xpose.msra.mxu0 0.0
    %1021 = vmatprep.subr.mxu0 0.0
    %1022 = vmatpush1.xpose.msra.mxu0 0.0
    %1023 = vmatprep.subr.mxu0 0.0
    %1024 = vmatpush1.xpose.msra.mxu0 0.0
    %1025 = vmatprep.subr.mxu0 0.0
    %1026 = vmatpush1.xpose.msra.mxu0 0.0
    %1027 = vmatprep.subr.mxu0 0.0
    %1028 = vmatpush1.xpose.msra.mxu0 0.0
    %1029 = vmatprep.subr.mxu0 0.0
    %1030 = vmatpush1.xpose.msra.mxu0 0.0
    %1031 = vmatprep.subr.mxu0 0.0
    %1032 = vmatpush1.xpose.msra.mxu0 0.0
    %1033 = vmatprep.subr.mxu0 0.0
    %1034 = vmatpush1.xpose.msra.mxu0 0.0
    %1035 = vmatprep.subr.mxu0 0.0
    %1036 = vmatpush1.xpose.msra.mxu0 0.0
    %1037 = vmatprep.subr.mxu0 0.0
    %1038 = vmatpush1.xpose.msra.mxu0 0.0
    %1039 = vmatprep.subr.mxu0 0.0
    %1040 = vmatpush1.xpose.msra.mxu0 0.0
    %1041 = vmatprep.subr.mxu0 0.0
    %1042 = vmatpush1.xpose.msra.mxu0 0.0
    %1043 = vmatprep.subr.mxu0 0.0
    %1044 = vmatpush1.xpose.msra.mxu0 0.0
    %1045 = vmatprep.subr.mxu0 0.0
    %1046 = vmatpush1.xpose.msra.mxu0 0.0
    %1047 = vmatprep.mubr.f32.mxu0 0.0
    %1048 = vmatmul.mubr.f32.gmra.mrb[0].mxu0 %v979
    %v1049 = vpop.f32.mrb[0].mxu0
    %v1050 = vadd.f32 0.0, %v1049
    %v1051 = vpop.f32.mrb[0].mxu0
    %1052 = vdwg.mxu0
    %v1053 = vmul.f32 %v1050, 0.25
    %v1054 = vlaneseq
    %v1055 = vshrl.u32 %v1054, 7
    %v1056 = vsub.s32 1, %v1055
    %v1057 = vrot.slane %v631, %v1056
    %v1058 = vadd.f32 %v1053, %v1057
    %v1059 = vsel %vm716, %v1058, -inf
    %1060 = vmax.xlane.f32.xlu0 %v1059
    %v1061 = vpop.xlane.xlu0 %1060
    %v1062 = vsub.f32 %v1058, %v1061
    %v1063 = vmul.f32 %v1062, 1.442695
    %v1064 = vpow.pop %v1063
    %v1065 = vsel %vm716, %v1064, 0.0
    %1066 = vadd.xlane.f32.xlu0 %v1065
    %v1067 = vpop.xlane.xlu0 %1066
    %v1068 = vrcp.pop %v1067
    %v1069 = vmul.f32 %v1064, %v1068
    %1070 = vrot.lane.b32.xlu0 %v626, 64
    %v1071 = vpop.permute.xlu0 %1070
    %v1074 = vsel %vm716, %v1069, 0
    %1076 = vmatprep.subr.mxu0 0.0
    %1077 = vmatpush1.msra.mxu0 %v1071
    %1078 = vmatprep.subr.mxu0 0.0
    %1079 = vmatpush1.msra.mxu0 0.0
    %1080 = vmatprep.subr.mxu0 0.0
    %1081 = vmatpush1.msra.mxu0 0.0
    %1082 = vmatprep.subr.mxu0 0.0
    %1083 = vmatpush1.msra.mxu0 0.0
    %1084 = vmatprep.subr.mxu0 0.0
    %1085 = vmatpush1.msra.mxu0 0.0
    %1086 = vmatprep.subr.mxu0 0.0
    %1087 = vmatpush1.msra.mxu0 0.0
    %1088 = vmatprep.subr.mxu0 0.0
    %1089 = vmatpush1.msra.mxu0 0.0
    %1090 = vmatprep.subr.mxu0 0.0
    %1091 = vmatpush1.msra.mxu0 0.0
    %1092 = vmatprep.subr.mxu0 0.0
    %1093 = vmatpush1.msra.mxu0 0.0
    %1094 = vmatprep.subr.mxu0 0.0
    %1095 = vmatpush1.msra.mxu0 0.0
    %1096 = vmatprep.subr.mxu0 0.0
    %1097 = vmatpush1.msra.mxu0 0.0
    %1098 = vmatprep.subr.mxu0 0.0
    %1099 = vmatpush1.msra.mxu0 0.0
    %1100 = vmatprep.subr.mxu0 0.0
    %1101 = vmatpush1.msra.mxu0 0.0
    %1102 = vmatprep.subr.mxu0 0.0
    %1103 = vmatpush1.msra.mxu0 0.0
    %1104 = vmatprep.subr.mxu0 0.0
    %1105 = vmatpush1.msra.mxu0 0.0
    %1106 = vmatprep.subr.mxu0 0.0
    %1107 = vmatpush1.msra.mxu0 0.0
    %1108 = vmatprep.subr.mxu0 0.0
    %1109 = vmatpush1.msra.mxu0 0.0
    %1110 = vmatprep.subr.mxu0 0.0
    %1111 = vmatpush1.msra.mxu0 0.0
    %1112 = vmatprep.subr.mxu0 0.0
    %1113 = vmatpush1.msra.mxu0 0.0
    %1114 = vmatprep.subr.mxu0 0.0
    %1115 = vmatpush1.msra.mxu0 0.0
    %1116 = vmatprep.subr.mxu0 0.0
    %1117 = vmatpush1.msra.mxu0 0.0
    %1118 = vmatprep.subr.mxu0 0.0
    %1119 = vmatpush1.msra.mxu0 0.0
    %1120 = vmatprep.subr.mxu0 0.0
    %1121 = vmatpush1.msra.mxu0 0.0
    %1122 = vmatprep.subr.mxu0 0.0
    %1123 = vmatpush1.msra.mxu0 0.0
    %1124 = vmatprep.subr.mxu0 0.0
    %1125 = vmatpush1.msra.mxu0 0.0
    %1126 = vmatprep.subr.mxu0 0.0
    %1127 = vmatpush1.msra.mxu0 0.0
    %1128 = vmatprep.subr.mxu0 0.0
    %1129 = vmatpush1.msra.mxu0 0.0
    %1130 = vmatprep.subr.mxu0 0.0
    %1131 = vmatpush1.msra.mxu0 0.0
    %1132 = vmatprep.subr.mxu0 0.0
    %1133 = vmatpush1.msra.mxu0 0.0
    %1134 = vmatprep.subr.mxu0 0.0
    %1135 = vmatpush1.msra.mxu0 0.0
    %1136 = vmatprep.subr.mxu0 0.0
    %1137 = vmatpush1.msra.mxu0 0.0
    %1138 = vmatprep.subr.mxu0 0.0
    %1139 = vmatpush1.msra.mxu0 0.0
    %1140 = vmatprep.mubr.f32.mxu0 0.0
    %1141 = vmatmul.mubr.f32.gmra.mrb[0].mxu0 %v1074
    %v1142 = vpop.f32.mrb[0].mxu0
    %v1143 = vadd.f32 0.0, %v1142
    %v1144 = vpop.f32.mrb[0].mxu0
    %1145 = vdwg.mxu0
    %1146 = vrot.lane.b32.xlu0 %v626, 112
    %v1147 = vpop.permute.xlu0 %1146
    %1148 = vrot.lane.b32.xlu0 %v626, 80
    %v1149 = vpop.permute.xlu0 %1148
    %v1150 = vsel %vm635, %v1147, 0
    %v1152 = vsel %vm635, %v1149, 0
    %1154 = vmatprep.subr.mxu0 0.0
    %1155 = vmatpush1.xpose.msra.mxu0 %v1152
    %1156 = vmatprep.subr.mxu0 0.0
    %1157 = vmatpush1.xpose.msra.mxu0 0.0
    %1158 = vmatprep.subr.mxu0 0.0
    %1159 = vmatpush1.xpose.msra.mxu0 0.0
    %1160 = vmatprep.subr.mxu0 0.0
    %1161 = vmatpush1.xpose.msra.mxu0 0.0
    %1162 = vmatprep.subr.mxu0 0.0
    %1163 = vmatpush1.xpose.msra.mxu0 0.0
    %1164 = vmatprep.subr.mxu0 0.0
    %1165 = vmatpush1.xpose.msra.mxu0 0.0
    %1166 = vmatprep.subr.mxu0 0.0
    %1167 = vmatpush1.xpose.msra.mxu0 0.0
    %1168 = vmatprep.subr.mxu0 0.0
    %1169 = vmatpush1.xpose.msra.mxu0 0.0
    %1170 = vmatprep.subr.mxu0 0.0
    %1171 = vmatpush1.xpose.msra.mxu0 0.0
    %1172 = vmatprep.subr.mxu0 0.0
    %1173 = vmatpush1.xpose.msra.mxu0 0.0
    %1174 = vmatprep.subr.mxu0 0.0
    %1175 = vmatpush1.xpose.msra.mxu0 0.0
    %1176 = vmatprep.subr.mxu0 0.0
    %1177 = vmatpush1.xpose.msra.mxu0 0.0
    %1178 = vmatprep.subr.mxu0 0.0
    %1179 = vmatpush1.xpose.msra.mxu0 0.0
    %1180 = vmatprep.subr.mxu0 0.0
    %1181 = vmatpush1.xpose.msra.mxu0 0.0
    %1182 = vmatprep.subr.mxu0 0.0
    %1183 = vmatpush1.xpose.msra.mxu0 0.0
    %1184 = vmatprep.subr.mxu0 0.0
    %1185 = vmatpush1.xpose.msra.mxu0 0.0
    %1186 = vmatprep.subr.mxu0 0.0
    %1187 = vmatpush1.xpose.msra.mxu0 0.0
    %1188 = vmatprep.subr.mxu0 0.0
    %1189 = vmatpush1.xpose.msra.mxu0 0.0
    %1190 = vmatprep.subr.mxu0 0.0
    %1191 = vmatpush1.xpose.msra.mxu0 0.0
    %1192 = vmatprep.subr.mxu0 0.0
    %1193 = vmatpush1.xpose.msra.mxu0 0.0
    %1194 = vmatprep.subr.mxu0 0.0
    %1195 = vmatpush1.xpose.msra.mxu0 0.0
    %1196 = vmatprep.subr.mxu0 0.0
    %1197 = vmatpush1.xpose.msra.mxu0 0.0
    %1198 = vmatprep.subr.mxu0 0.0
    %1199 = vmatpush1.xpose.msra.mxu0 0.0
    %1200 = vmatprep.subr.mxu0 0.0
    %1201 = vmatpush1.xpose.msra.mxu0 0.0
    %1202 = vmatprep.subr.mxu0 0.0
    %1203 = vmatpush1.xpose.msra.mxu0 0.0
    %1204 = vmatprep.subr.mxu0 0.0
    %1205 = vmatpush1.xpose.msra.mxu0 0.0
    %1206 = vmatprep.subr.mxu0 0.0
    %1207 = vmatpush1.xpose.msra.mxu0 0.0
    %1208 = vmatprep.subr.mxu0 0.0
    %1209 = vmatpush1.xpose.msra.mxu0 0.0
    %1210 = vmatprep.subr.mxu0 0.0
    %1211 = vmatpush1.xpose.msra.mxu0 0.0
    %1212 = vmatprep.subr.mxu0 0.0
    %1213 = vmatpush1.xpose.msra.mxu0 0.0
    %1214 = vmatprep.subr.mxu0 0.0
    %1215 = vmatpush1.xpose.msra.mxu0 0.0
    %1216 = vmatprep.subr.mxu0 0.0
    %1217 = vmatpush1.xpose.msra.mxu0 0.0
    %1218 = vmatprep.mubr.f32.mxu0 0.0
    %1219 = vmatmul.mubr.f32.gmra.mrb[0].mxu0 %v1150
    %v1220 = vpop.f32.mrb[0].mxu0
    %v1221 = vadd.f32 0.0, %v1220
    %v1222 = vpop.f32.mrb[0].mxu0
    %1223 = vdwg.mxu0
    %v1224 = vmul.f32 %v1221, 0.25
    %v1225 = vadd.f32 %v1224, %v1057
    %v1226 = vsel %vm716, %v1225, -inf
    %1227 = vmax.xlane.f32.xlu0 %v1226
    %v1228 = vpop.xlane.xlu0 %1227
    %v1229 = vsub.f32 %v1225, %v1228
    %v1230 = vmul.f32 %v1229, 1.442695
    %v1231 = vpow.pop %v1230
    %v1232 = vsel %vm716, %v1231, 0.0
    %1233 = vadd.xlane.f32.xlu0 %v1232
    %v1234 = vpop.xlane.xlu0 %1233
    %v1235 = vrcp.pop %v1234
    %v1236 = vmul.f32 %v1231, %v1235
    %1237 = vrot.lane.b32.xlu0 %v626, 48
    %v1238 = vpop.permute.xlu0 %1237
    %v1241 = vsel %vm716, %v1236, 0
    %1243 = vmatprep.subr.mxu0 0.0
    %1244 = vmatpush1.msra.mxu0 %v1238
    %1245 = vmatprep.subr.mxu0 0.0
    %1246 = vmatpush1.msra.mxu0 0.0
    %1247 = vmatprep.subr.mxu0 0.0
    %1248 = vmatpush1.msra.mxu0 0.0
    %1249 = vmatprep.subr.mxu0 0.0
    %1250 = vmatpush1.msra.mxu0 0.0
    %1251 = vmatprep.subr.mxu0 0.0
    %1252 = vmatpush1.msra.mxu0 0.0
    %1253 = vmatprep.subr.mxu0 0.0
    %1254 = vmatpush1.msra.mxu0 0.0
    %1255 = vmatprep.subr.mxu0 0.0
    %1256 = vmatpush1.msra.mxu0 0.0
    %1257 = vmatprep.subr.mxu0 0.0
    %1258 = vmatpush1.msra.mxu0 0.0
    %1259 = vmatprep.subr.mxu0 0.0
    %1260 = vmatpush1.msra.mxu0 0.0
    %1261 = vmatprep.subr.mxu0 0.0
    %1262 = vmatpush1.msra.mxu0 0.0
    %1263 = vmatprep.subr.mxu0 0.0
    %1264 = vmatpush1.msra.mxu0 0.0
    %1265 = vmatprep.subr.mxu0 0.0
    %1266 = vmatpush1.msra.mxu0 0.0
    %1267 = vmatprep.subr.mxu0 0.0
    %1268 = vmatpush1.msra.mxu0 0.0
    %1269 = vmatprep.subr.mxu0 0.0
    %1270 = vmatpush1.msra.mxu0 0.0
    %1271 = vmatprep.subr.mxu0 0.0
    %1272 = vmatpush1.msra.mxu0 0.0
    %1273 = vmatprep.subr.mxu0 0.0
    %1274 = vmatpush1.msra.mxu0 0.0
    %1275 = vmatprep.subr.mxu0 0.0
    %1276 = vmatpush1.msra.mxu0 0.0
    %1277 = vmatprep.subr.mxu0 0.0
    %1278 = vmatpush1.msra.mxu0 0.0
    %1279 = vmatprep.subr.mxu0 0.0
    %1280 = vmatpush1.msra.mxu0 0.0
    %1281 = vmatprep.subr.mxu0 0.0
    %1282 = vmatpush1.msra.mxu0 0.0
    %1283 = vmatprep.subr.mxu0 0.0
    %1284 = vmatpush1.msra.mxu0 0.0
    %1285 = vmatprep.subr.mxu0 0.0
    %1286 = vmatpush1.msra.mxu0 0.0
    %1287 = vmatprep.subr.mxu0 0.0
    %1288 = vmatpush1.msra.mxu0 0.0
    %1289 = vmatprep.subr.mxu0 0.0
    %1290 = vmatpush1.msra.mxu0 0.0
    %1291 = vmatprep.subr.mxu0 0.0
    %1292 = vmatpush1.msra.mxu0 0.0
    %1293 = vmatprep.subr.mxu0 0.0
    %1294 = vmatpush1.msra.mxu0 0.0
    %1295 = vmatprep.subr.mxu0 0.0
    %1296 = vmatpush1.msra.mxu0 0.0
    %1297 = vmatprep.subr.mxu0 0.0
    %1298 = vmatpush1.msra.mxu0 0.0
    %1299 = vmatprep.subr.mxu0 0.0
    %1300 = vmatpush1.msra.mxu0 0.0
    %1301 = vmatprep.subr.mxu0 0.0
    %1302 = vmatpush1.msra.mxu0 0.0
    %1303 = vmatprep.subr.mxu0 0.0
    %1304 = vmatpush1.msra.mxu0 0.0
    %1305 = vmatprep.subr.mxu0 0.0
    %1306 = vmatpush1.msra.mxu0 0.0
    %1307 = vmatprep.mubr.f32.mxu0 0.0
    %1308 = vmatmul.mubr.f32.gmra.mrb[0].mxu0 %v1241
    %v1309 = vpop.f32.mrb[0].mxu0
    %v1310 = vadd.f32 0.0, %v1309
    %v1311 = vpop.f32.mrb[0].mxu0
    %1312 = vdwg.mxu0
    %1314 = vrot.lane.b32.xlu0 %v1310, 16
    %v1315 = vpop.permute.xlu0 %1314
    %v1317 = vsel %vm635, %v1143, %v1315
    %v1318 = vld [vmem:[%s12] sm:$0xff]
    %v1319 = vld [vmem:[%s12 + $0x8] sm:$0xff]
    %v1320 = vld [vmem:[%s12 + $0x10] sm:$0xff]
    %v1321 = vld [vmem:[%s12 + $0x18] sm:$0xff]
    %v1322 = vld [vmem:[%s14] sm:$0xff]
    %v1323 = vld [vmem:[%s14 + $0x8] sm:$0xff]
    %v1324 = vld [vmem:[%s14 + $0x10] sm:$0xff]
    %v1325 = vld [vmem:[%s14 + $0x18] sm:$0xff]
    %v1326 = vmul.f32 %v182, %v1322
    %v1327 = vmul.f32 %v182, %v1323
    %v1328 = vmul.f32 %v182, %v1324
    %v1329 = vmul.f32 %v182, %v1325
    %v1330 = vadd.f32 %v1326, 0.0
    %v1331 = vadd.f32 %v1327, 0.0
    %v1332 = vadd.f32 %v1328, 0.0
    %v1333 = vadd.f32 %v1329, 0.0
    %s1334 = scalar_lea.vmem %s14, 32
    %v1335 = vld [vmem:[%s1334] sm:$0xff]
    %v1336 = vld [vmem:[%s1334 + $0x8] sm:$0xff]
    %v1337 = vld [vmem:[%s1334 + $0x10] sm:$0xff]
    %v1338 = vld [vmem:[%s1334 + $0x18] sm:$0xff]
    %v1339 = vmul.f32 %v197, %v1335
    %v1340 = vmul.f32 %v197, %v1336
    %v1341 = vmul.f32 %v197, %v1337
    %v1342 = vmul.f32 %v197, %v1338
    %v1343 = vadd.f32 %v1330, %v1339
    %v1344 = vadd.f32 %v1331, %v1340
    %v1345 = vadd.f32 %v1332, %v1341
    %v1346 = vadd.f32 %v1333, %v1342
    %s1347 = scalar_lea.vmem %s14, 64
    %v1348 = vld [vmem:[%s1347] sm:$0xff]
    %v1349 = vld [vmem:[%s1347 + $0x8] sm:$0xff]
    %v1350 = vld [vmem:[%s1347 + $0x10] sm:$0xff]
    %v1351 = vld [vmem:[%s1347 + $0x18] sm:$0xff]
    %v1352 = vmul.f32 %v212, %v1348
    %v1353 = vmul.f32 %v212, %v1349
    %v1354 = vmul.f32 %v212, %v1350
    %v1355 = vmul.f32 %v212, %v1351
    %v1356 = vadd.f32 %v1343, %v1352
    %v1357 = vadd.f32 %v1344, %v1353
    %v1358 = vadd.f32 %v1345, %v1354
    %v1359 = vadd.f32 %v1346, %v1355
    %s1360 = scalar_lea.vmem %s14, 96
    %v1361 = vld [vmem:[%s1360] sm:$0xff]
    %v1362 = vld [vmem:[%s1360 + $0x8] sm:$0xff]
    %v1363 = vld [vmem:[%s1360 + $0x10] sm:$0xff]
    %v1364 = vld [vmem:[%s1360 + $0x18] sm:$0xff]
    %v1365 = vmul.f32 %v227, %v1361
    %v1366 = vmul.f32 %v227, %v1362
    %v1367 = vmul.f32 %v227, %v1363
    %v1368 = vmul.f32 %v227, %v1364
    %v1369 = vadd.f32 %v1356, %v1365
    %v1370 = vadd.f32 %v1357, %v1366
    %v1371 = vadd.f32 %v1358, %v1367
    %v1372 = vadd.f32 %v1359, %v1368
    %s1373 = scalar_lea.vmem %s14, 128
    %v1374 = vld [vmem:[%s1373] sm:$0xff]
    %v1375 = vld [vmem:[%s1373 + $0x8] sm:$0xff]
    %v1376 = vld [vmem:[%s1373 + $0x10] sm:$0xff]
    %v1377 = vld [vmem:[%s1373 + $0x18] sm:$0xff]
    %v1378 = vmul.f32 %v242, %v1374
    %v1379 = vmul.f32 %v242, %v1375
    %v1380 = vmul.f32 %v242, %v1376
    %v1381 = vmul.f32 %v242, %v1377
    %v1382 = vadd.f32 %v1369, %v1378
    %v1383 = vadd.f32 %v1370, %v1379
    %v1384 = vadd.f32 %v1371, %v1380
    %v1385 = vadd.f32 %v1372, %v1381
    %s1386 = scalar_lea.vmem %s14, 160
    %v1387 = vld [vmem:[%s1386] sm:$0xff]
    %v1388 = vld [vmem:[%s1386 + $0x8] sm:$0xff]
    %v1389 = vld [vmem:[%s1386 + $0x10] sm:$0xff]
    %v1390 = vld [vmem:[%s1386 + $0x18] sm:$0xff]
    %v1391 = vmul.f32 %v257, %v1387
    %v1392 = vmul.f32 %v257, %v1388
    %v1393 = vmul.f32 %v257, %v1389
    %v1394 = vmul.f32 %v257, %v1390
    %v1395 = vadd.f32 %v1382, %v1391
    %v1396 = vadd.f32 %v1383, %v1392
    %v1397 = vadd.f32 %v1384, %v1393
    %v1398 = vadd.f32 %v1385, %v1394
    %s1399 = scalar_lea.vmem %s14, 192
    %v1400 = vld [vmem:[%s1399] sm:$0xff]
    %v1401 = vld [vmem:[%s1399 + $0x8] sm:$0xff]
    %v1402 = vld [vmem:[%s1399 + $0x10] sm:$0xff]
    %v1403 = vld [vmem:[%s1399 + $0x18] sm:$0xff]
    %v1404 = vmul.f32 %v272, %v1400
    %v1405 = vmul.f32 %v272, %v1401
    %v1406 = vmul.f32 %v272, %v1402
    %v1407 = vmul.f32 %v272, %v1403
    %v1408 = vadd.f32 %v1395, %v1404
    %v1409 = vadd.f32 %v1396, %v1405
    %v1410 = vadd.f32 %v1397, %v1406
    %v1411 = vadd.f32 %v1398, %v1407
    %s1412 = scalar_lea.vmem %s14, 224
    %v1413 = vld [vmem:[%s1412] sm:$0xff]
    %v1414 = vld [vmem:[%s1412 + $0x8] sm:$0xff]
    %v1415 = vld [vmem:[%s1412 + $0x10] sm:$0xff]
    %v1416 = vld [vmem:[%s1412 + $0x18] sm:$0xff]
    %v1417 = vmul.f32 %v287, %v1413
    %v1418 = vmul.f32 %v287, %v1414
    %v1419 = vmul.f32 %v287, %v1415
    %v1420 = vmul.f32 %v287, %v1416
    %v1421 = vadd.f32 %v1408, %v1417
    %v1422 = vadd.f32 %v1409, %v1418
    %v1423 = vadd.f32 %v1410, %v1419
    %v1424 = vadd.f32 %v1411, %v1420
    %s1425 = scalar_lea.vmem %s14, 256
    %v1426 = vld [vmem:[%s1425] sm:$0xff]
    %v1427 = vld [vmem:[%s1425 + $0x8] sm:$0xff]
    %v1428 = vld [vmem:[%s1425 + $0x10] sm:$0xff]
    %v1429 = vld [vmem:[%s1425 + $0x18] sm:$0xff]
    %v1430 = vmul.f32 %v302, %v1426
    %v1431 = vmul.f32 %v302, %v1427
    %v1432 = vmul.f32 %v302, %v1428
    %v1433 = vmul.f32 %v302, %v1429
    %v1434 = vadd.f32 %v1421, %v1430
    %v1435 = vadd.f32 %v1422, %v1431
    %v1436 = vadd.f32 %v1423, %v1432
    %v1437 = vadd.f32 %v1424, %v1433
    %s1438 = scalar_lea.vmem %s14, 288
    %v1439 = vld [vmem:[%s1438] sm:$0xff]
    %v1440 = vld [vmem:[%s1438 + $0x8] sm:$0xff]
    %v1441 = vld [vmem:[%s1438 + $0x10] sm:$0xff]
    %v1442 = vld [vmem:[%s1438 + $0x18] sm:$0xff]
    %v1443 = vmul.f32 %v317, %v1439
    %v1444 = vmul.f32 %v317, %v1440
    %v1445 = vmul.f32 %v317, %v1441
    %v1446 = vmul.f32 %v317, %v1442
    %v1447 = vadd.f32 %v1434, %v1443
    %v1448 = vadd.f32 %v1435, %v1444
    %v1449 = vadd.f32 %v1436, %v1445
    %v1450 = vadd.f32 %v1437, %v1446
    %s1451 = scalar_lea.vmem %s14, 320
    %v1452 = vld [vmem:[%s1451] sm:$0xff]
    %v1453 = vld [vmem:[%s1451 + $0x8] sm:$0xff]
    %v1454 = vld [vmem:[%s1451 + $0x10] sm:$0xff]
    %v1455 = vld [vmem:[%s1451 + $0x18] sm:$0xff]
    %v1456 = vmul.f32 %v332, %v1452
    %v1457 = vmul.f32 %v332, %v1453
    %v1458 = vmul.f32 %v332, %v1454
    %v1459 = vmul.f32 %v332, %v1455
    %v1460 = vadd.f32 %v1447, %v1456
    %v1461 = vadd.f32 %v1448, %v1457
    %v1462 = vadd.f32 %v1449, %v1458
    %v1463 = vadd.f32 %v1450, %v1459
    %s1464 = scalar_lea.vmem %s14, 352
    %v1465 = vld [vmem:[%s1464] sm:$0xff]
    %v1466 = vld [vmem:[%s1464 + $0x8] sm:$0xff]
    %v1467 = vld [vmem:[%s1464 + $0x10] sm:$0xff]
    %v1468 = vld [vmem:[%s1464 + $0x18] sm:$0xff]
    %v1469 = vmul.f32 %v347, %v1465
    %v1470 = vmul.f32 %v347, %v1466
    %v1471 = vmul.f32 %v347, %v1467
    %v1472 = vmul.f32 %v347, %v1468
    %v1473 = vadd.f32 %v1460, %v1469
    %v1474 = vadd.f32 %v1461, %v1470
    %v1475 = vadd.f32 %v1462, %v1471
    %v1476 = vadd.f32 %v1463, %v1472
    %s1477 = scalar_lea.vmem %s14, 384
    %v1478 = vld [vmem:[%s1477] sm:$0xff]
    %v1479 = vld [vmem:[%s1477 + $0x8] sm:$0xff]
    %v1480 = vld [vmem:[%s1477 + $0x10] sm:$0xff]
    %v1481 = vld [vmem:[%s1477 + $0x18] sm:$0xff]
    %v1482 = vmul.f32 %v362, %v1478
    %v1483 = vmul.f32 %v362, %v1479
    %v1484 = vmul.f32 %v362, %v1480
    %v1485 = vmul.f32 %v362, %v1481
    %v1486 = vadd.f32 %v1473, %v1482
    %v1487 = vadd.f32 %v1474, %v1483
    %v1488 = vadd.f32 %v1475, %v1484
    %v1489 = vadd.f32 %v1476, %v1485
    %s1490 = scalar_lea.vmem %s14, 416
    %v1491 = vld [vmem:[%s1490] sm:$0xff]
    %v1492 = vld [vmem:[%s1490 + $0x8] sm:$0xff]
    %v1493 = vld [vmem:[%s1490 + $0x10] sm:$0xff]
    %v1494 = vld [vmem:[%s1490 + $0x18] sm:$0xff]
    %v1495 = vmul.f32 %v377, %v1491
    %v1496 = vmul.f32 %v377, %v1492
    %v1497 = vmul.f32 %v377, %v1493
    %v1498 = vmul.f32 %v377, %v1494
    %v1499 = vadd.f32 %v1486, %v1495
    %v1500 = vadd.f32 %v1487, %v1496
    %v1501 = vadd.f32 %v1488, %v1497
    %v1502 = vadd.f32 %v1489, %v1498
    %s1503 = scalar_lea.vmem %s14, 448
    %v1504 = vld [vmem:[%s1503] sm:$0xff]
    %v1505 = vld [vmem:[%s1503 + $0x8] sm:$0xff]
    %v1506 = vld [vmem:[%s1503 + $0x10] sm:$0xff]
    %v1507 = vld [vmem:[%s1503 + $0x18] sm:$0xff]
    %v1508 = vmul.f32 %v392, %v1504
    %v1509 = vmul.f32 %v392, %v1505
    %v1510 = vmul.f32 %v392, %v1506
    %v1511 = vmul.f32 %v392, %v1507
    %v1512 = vadd.f32 %v1499, %v1508
    %v1513 = vadd.f32 %v1500, %v1509
    %v1514 = vadd.f32 %v1501, %v1510
    %v1515 = vadd.f32 %v1502, %v1511
    %s1516 = scalar_lea.vmem %s14, 480
    %v1517 = vld [vmem:[%s1516] sm:$0xff]
    %v1518 = vld [vmem:[%s1516 + $0x8] sm:$0xff]
    %v1519 = vld [vmem:[%s1516 + $0x10] sm:$0xff]
    %v1520 = vld [vmem:[%s1516 + $0x18] sm:$0xff]
    %v1521 = vmul.f32 %v407, %v1517
    %v1522 = vmul.f32 %v407, %v1518
    %v1523 = vmul.f32 %v407, %v1519
    %v1524 = vmul.f32 %v407, %v1520
    %v1525 = vadd.f32 %v1512, %v1521
    %v1526 = vadd.f32 %v1513, %v1522
    %v1527 = vadd.f32 %v1514, %v1523
    %v1528 = vadd.f32 %v1515, %v1524
    %s1529 = scalar_lea.vmem %s14, 512
    %v1530 = vld [vmem:[%s1529] sm:$0xff]
    %v1531 = vld [vmem:[%s1529 + $0x8] sm:$0xff]
    %v1532 = vld [vmem:[%s1529 + $0x10] sm:$0xff]
    %v1533 = vld [vmem:[%s1529 + $0x18] sm:$0xff]
    %v1534 = vmul.f32 %v422, %v1530
    %v1535 = vmul.f32 %v422, %v1531
    %v1536 = vmul.f32 %v422, %v1532
    %v1537 = vmul.f32 %v422, %v1533
    %v1538 = vadd.f32 %v1525, %v1534
    %v1539 = vadd.f32 %v1526, %v1535
    %v1540 = vadd.f32 %v1527, %v1536
    %v1541 = vadd.f32 %v1528, %v1537
    %s1542 = scalar_lea.vmem %s14, 544
    %v1543 = vld [vmem:[%s1542] sm:$0xff]
    %v1544 = vld [vmem:[%s1542 + $0x8] sm:$0xff]
    %v1545 = vld [vmem:[%s1542 + $0x10] sm:$0xff]
    %v1546 = vld [vmem:[%s1542 + $0x18] sm:$0xff]
    %v1547 = vmul.f32 %v437, %v1543
    %v1548 = vmul.f32 %v437, %v1544
    %v1549 = vmul.f32 %v437, %v1545
    %v1550 = vmul.f32 %v437, %v1546
    %v1551 = vadd.f32 %v1538, %v1547
    %v1552 = vadd.f32 %v1539, %v1548
    %v1553 = vadd.f32 %v1540, %v1549
    %v1554 = vadd.f32 %v1541, %v1550
    %v1555 = vstv %s164
    %v1556 = vmul.f32 %v1555, %v1551
    %v1557 = vmul.f32 %v1555, %v1552
    %v1558 = vmul.f32 %v1555, %v1553
    %v1559 = vmul.f32 %v1555, %v1554
    %v1560 = vadd.f32 %v1318, %v1556
    %v1561 = vadd.f32 %v1319, %v1557
    %v1562 = vadd.f32 %v1320, %v1558
    %v1563 = vadd.f32 %v1321, %v1559
    %v1564 = vld [vmem:[%s13] sm:$0x1]
    %v1565 = vld [vmem:[%s15] sm:$0xff]
    %v1566 = vld [vmem:[%s15 + $0x8] sm:$0xff]
    %v1567 = vld [vmem:[%s15 + $0x10] sm:$0x3]
    %v1569 = vsel %vm466, %v1567, 0
    %1571 = vmatprep.subr.mxu0 0.0
    %1572 = vmatpush1.msra.mxu0 %v1565
    %1573 = vmatprep.subr.mxu0 0.0
    %1574 = vmatpush1.msra.mxu0 %v1566
    %1575 = vmatprep.subr.mxu0 0.0
    %1576 = vmatpush1.msra.mxu0 %v1569
    %1577 = vmatprep.subr.mxu0 0.0
    %1578 = vmatpush1.msra.mxu0 0.0
    %1579 = vmatprep.subr.mxu0 0.0
    %1580 = vmatpush1.msra.mxu0 0.0
    %1581 = vmatprep.subr.mxu0 0.0
    %1582 = vmatpush1.msra.mxu0 0.0
    %1583 = vmatprep.subr.mxu0 0.0
    %1584 = vmatpush1.msra.mxu0 0.0
    %1585 = vmatprep.subr.mxu0 0.0
    %1586 = vmatpush1.msra.mxu0 0.0
    %1587 = vmatprep.subr.mxu0 0.0
    %1588 = vmatpush1.msra.mxu0 0.0
    %1589 = vmatprep.subr.mxu0 0.0
    %1590 = vmatpush1.msra.mxu0 0.0
    %1591 = vmatprep.subr.mxu0 0.0
    %1592 = vmatpush1.msra.mxu0 0.0
    %1593 = vmatprep.subr.mxu0 0.0
    %1594 = vmatpush1.msra.mxu0 0.0
    %1595 = vmatprep.subr.mxu0 0.0
    %1596 = vmatpush1.msra.mxu0 0.0
    %1597 = vmatprep.subr.mxu0 0.0
    %1598 = vmatpush1.msra.mxu0 0.0
    %1599 = vmatprep.subr.mxu0 0.0
    %1600 = vmatpush1.msra.mxu0 0.0
    %1601 = vmatprep.subr.mxu0 0.0
    %1602 = vmatpush1.msra.mxu0 0.0
    %1603 = vmatprep.subr.mxu0 0.0
    %1604 = vmatpush1.msra.mxu0 0.0
    %1605 = vmatprep.subr.mxu0 0.0
    %1606 = vmatpush1.msra.mxu0 0.0
    %1607 = vmatprep.subr.mxu0 0.0
    %1608 = vmatpush1.msra.mxu0 0.0
    %1609 = vmatprep.subr.mxu0 0.0
    %1610 = vmatpush1.msra.mxu0 0.0
    %1611 = vmatprep.subr.mxu0 0.0
    %1612 = vmatpush1.msra.mxu0 0.0
    %1613 = vmatprep.subr.mxu0 0.0
    %1614 = vmatpush1.msra.mxu0 0.0
    %1615 = vmatprep.subr.mxu0 0.0
    %1616 = vmatpush1.msra.mxu0 0.0
    %1617 = vmatprep.subr.mxu0 0.0
    %1618 = vmatpush1.msra.mxu0 0.0
    %1619 = vmatprep.subr.mxu0 0.0
    %1620 = vmatpush1.msra.mxu0 0.0
    %1621 = vmatprep.subr.mxu0 0.0
    %1622 = vmatpush1.msra.mxu0 0.0
    %1623 = vmatprep.subr.mxu0 0.0
    %1624 = vmatpush1.msra.mxu0 0.0
    %1625 = vmatprep.subr.mxu0 0.0
    %1626 = vmatpush1.msra.mxu0 0.0
    %1627 = vmatprep.subr.mxu0 0.0
    %1628 = vmatpush1.msra.mxu0 0.0
    %1629 = vmatprep.subr.mxu0 0.0
    %1630 = vmatpush1.msra.mxu0 0.0
    %1631 = vmatprep.subr.mxu0 0.0
    %1632 = vmatpush1.msra.mxu0 0.0
    %1633 = vmatprep.subr.mxu0 0.0
    %1634 = vmatpush1.msra.mxu0 0.0
    %1635 = vmatprep.mubr.f32.mxu0 0.0
    %1636 = vmatmul.mubr.f32.gmra.mrb[0].mxu0 %v464
    %v1637 = vpop.f32.mrb[0].mxu0
    %v1638 = vadd.f32 0.0, %v1637
    %v1639 = vpop.f32.mrb[0].mxu0
    %1640 = vdwg.mxu0
    %v1641 = vmul.f32 %v1555, %v1638
    %v1642 = vadd.f32 %v1564, %v1641
    %v1644 = vlaneseq
    %v1645 = vshrl.u32 %v1644, 7
    %v1646 = vsub.s32 0, %v1645
    %v1647 = vrot.slane %v1642, %v1646
    %v1650 = vsel %vm116, %v975, 0
    %v1653 = vsel %vm116, %v1317, 0
    %1655 = vmatprep.subr.mxu0 0.0
    %1656 = vmatpush1.msra.mxu0 %v1560
    %1657 = vmatprep.subr.mxu0 0.0
    %1658 = vmatpush1.msra.mxu0 %v1561
    %1659 = vmatprep.subr.mxu0 0.0
    %1660 = vmatpush1.msra.mxu0 %v1562
    %1661 = vmatprep.subr.mxu0 0.0
    %1662 = vmatpush1.msra.mxu0 %v1563
    %1663 = vmatprep.subr.mxu0 0.0
    %1664 = vmatpush1.msra.mxu0 0.0
    %1665 = vmatprep.subr.mxu0 0.0
    %1666 = vmatpush1.msra.mxu0 0.0
    %1667 = vmatprep.subr.mxu0 0.0
    %1668 = vmatpush1.msra.mxu0 0.0
    %1669 = vmatprep.subr.mxu0 0.0
    %1670 = vmatpush1.msra.mxu0 0.0
    %1671 = vmatprep.subr.mxu0 0.0
    %1672 = vmatpush1.msra.mxu0 0.0
    %1673 = vmatprep.subr.mxu0 0.0
    %1674 = vmatpush1.msra.mxu0 0.0
    %1675 = vmatprep.subr.mxu0 0.0
    %1676 = vmatpush1.msra.mxu0 0.0
    %1677 = vmatprep.subr.mxu0 0.0
    %1678 = vmatpush1.msra.mxu0 0.0
    %1679 = vmatprep.subr.mxu0 0.0
    %1680 = vmatpush1.msra.mxu0 0.0
    %1681 = vmatprep.subr.mxu0 0.0
    %1682 = vmatpush1.msra.mxu0 0.0
    %1683 = vmatprep.subr.mxu0 0.0
    %1684 = vmatpush1.msra.mxu0 0.0
    %1685 = vmatprep.subr.mxu0 0.0
    %1686 = vmatpush1.msra.mxu0 0.0
    %1687 = vmatprep.subr.mxu0 0.0
    %1688 = vmatpush1.msra.mxu0 0.0
    %1689 = vmatprep.subr.mxu0 0.0
    %1690 = vmatpush1.msra.mxu0 0.0
    %1691 = vmatprep.subr.mxu0 0.0
    %1692 = vmatpush1.msra.mxu0 0.0
    %1693 = vmatprep.subr.mxu0 0.0
    %1694 = vmatpush1.msra.mxu0 0.0
    %1695 = vmatprep.subr.mxu0 0.0
    %1696 = vmatpush1.msra.mxu0 0.0
    %1697 = vmatprep.subr.mxu0 0.0
    %1698 = vmatpush1.msra.mxu0 0.0
    %1699 = vmatprep.subr.mxu0 0.0
    %1700 = vmatpush1.msra.mxu0 0.0
    %1701 = vmatprep.subr.mxu0 0.0
    %1702 = vmatpush1.msra.mxu0 0.0
    %1703 = vmatprep.subr.mxu0 0.0
    %1704 = vmatpush1.msra.mxu0 0.0
    %1705 = vmatprep.subr.mxu0 0.0
    %1706 = vmatpush1.msra.mxu0 0.0
    %1707 = vmatprep.subr.mxu0 0.0
    %1708 = vmatpush1.msra.mxu0 0.0
    %1709 = vmatprep.subr.mxu0 0.0
    %1710 = vmatpush1.msra.mxu0 0.0
    %1711 = vmatprep.subr.mxu0 0.0
    %1712 = vmatpush1.msra.mxu0 0.0
    %1713 = vmatprep.subr.mxu0 0.0
    %1714 = vmatpush1.msra.mxu0 0.0
    %1715 = vmatprep.subr.mxu0 0.0
    %1716 = vmatpush1.msra.mxu0 0.0
    %1717 = vmatprep.subr.mxu0 0.0
    %1718 = vmatpush1.msra.mxu0 0.0
    %1719 = vmatprep.mubr.f32.mxu0 0.0
    %1720 = vmatmul.mubr.f32.gmra.mrb[0].mxu0 %v1650
    %v1721 = vpop.f32.mrb[0].mxu0
    %v1722 = vadd.f32 %v1647, %v1721
    %v1723 = vpop.f32.mrb[0].mxu0
    %1724 = vmatprep.mubr.f32.mxu0 0.0
    %1725 = vmatmul.mubr.f32.gmra.mrb[0].mxu0 %v1653
    %v1726 = vpop.f32.mrb[0].mxu0
    %v1727 = vadd.f32 %v1647, %v1726
    %v1728 = vpop.f32.mrb[0].mxu0
    %1729 = vdwg.mxu0
    %v1730 = vadd.f32 %v158, %v1722
    %v1731 = vadd.f32 %v159, %v1727
    %v1732 = vld [vmem:[%s4] sm:$0x1]
    %v1733 = vld [vmem:[%s5] sm:$0x1]
    %v1734 = vsel %vm116, %v1730, 0.0
    %1735 = vadd.xlane.f32.xlu0 %v1734
    %v1736 = vpop.xlane.xlu0 %1735
    %v1737 = vsel %vm116, %v1731, 0.0
    %1738 = vadd.xlane.f32.xlu0 %v1737
    %v1739 = vpop.xlane.xlu0 %1738
    %v1740 = vmul.f32 %v1736, %v123
    %v1741 = vmul.f32 %v1739, %v123
    %v1742 = vsub.f32 %v1730, %v1740
    %v1743 = vsub.f32 %v1731, %v1741
    %v1744 = vmul.f32 %v1742, %v1742
    %v1745 = vmul.f32 %v1743, %v1743
    %v1746 = vsel %vm116, %v1744, 0.0
    %1747 = vadd.xlane.f32.xlu0 %v1746
    %v1748 = vpop.xlane.xlu0 %1747
    %v1749 = vsel %vm116, %v1745, 0.0
    %1750 = vadd.xlane.f32.xlu0 %v1749
    %v1751 = vpop.xlane.xlu0 %1750
    %v1752 = vmul.f32 %v1748, %v123
    %v1753 = vmul.f32 %v1751, %v123
    %v1754 = vadd.f32 %v1752, 1e-05
    %v1755 = vadd.f32 %v1753, 1e-05
    %v1756 = vrsqrt.pop %v1754
    %v1757 = vrsqrt.pop %v1755
    %v1758 = vmul.f32 %v1742, %v1756
    %v1759 = vmul.f32 %v1743, %v1757
    %v1761 = vlaneseq
    %v1762 = vshrl.u32 %v1761, 7
    %v1763 = vsub.s32 0, %v1762
    %v1764 = vrot.slane %v1732, %v1763
    %v1766 = vmul.f32 %v1758, %v1764
    %v1767 = vmul.f32 %v1759, %v1764
    %v1769 = vlaneseq
    %v1770 = vshrl.u32 %v1769, 7
    %v1771 = vsub.s32 0, %v1770
    %v1772 = vrot.slane %v1733, %v1771
    %v1774 = vadd.f32 %v1766, %v1772
    %v1775 = vadd.f32 %v1767, %v1772
    %v1776 = vld [vmem:[%s16] sm:$0xff]
    %v1777 = vld [vmem:[%s16 + $0x8] sm:$0xff]
    %v1778 = vld [vmem:[%s16 + $0x10] sm:$0xff]
    %v1779 = vld [vmem:[%s16 + $0x18] sm:$0xff]
    %v1780 = vld [vmem:[%s18] sm:$0xff]
    %v1781 = vld [vmem:[%s18 + $0x8] sm:$0xff]
    %v1782 = vld [vmem:[%s18 + $0x10] sm:$0xff]
    %v1783 = vld [vmem:[%s18 + $0x18] sm:$0xff]
    %v1784 = vmul.f32 %v182, %v1780
    %v1785 = vmul.f32 %v182, %v1781
    %v1786 = vmul.f32 %v182, %v1782
    %v1787 = vmul.f32 %v182, %v1783
    %v1788 = vadd.f32 %v1784, 0.0
    %v1789 = vadd.f32 %v1785, 0.0
    %v1790 = vadd.f32 %v1786, 0.0
    %v1791 = vadd.f32 %v1787, 0.0
    %s1792 = scalar_lea.vmem %s18, 32
    %v1793 = vld [vmem:[%s1792] sm:$0xff]
    %v1794 = vld [vmem:[%s1792 + $0x8] sm:$0xff]
    %v1795 = vld [vmem:[%s1792 + $0x10] sm:$0xff]
    %v1796 = vld [vmem:[%s1792 + $0x18] sm:$0xff]
    %v1797 = vmul.f32 %v197, %v1793
    %v1798 = vmul.f32 %v197, %v1794
    %v1799 = vmul.f32 %v197, %v1795
    %v1800 = vmul.f32 %v197, %v1796
    %v1801 = vadd.f32 %v1788, %v1797
    %v1802 = vadd.f32 %v1789, %v1798
    %v1803 = vadd.f32 %v1790, %v1799
    %v1804 = vadd.f32 %v1791, %v1800
    %s1805 = scalar_lea.vmem %s18, 64
    %v1806 = vld [vmem:[%s1805] sm:$0xff]
    %v1807 = vld [vmem:[%s1805 + $0x8] sm:$0xff]
    %v1808 = vld [vmem:[%s1805 + $0x10] sm:$0xff]
    %v1809 = vld [vmem:[%s1805 + $0x18] sm:$0xff]
    %v1810 = vmul.f32 %v212, %v1806
    %v1811 = vmul.f32 %v212, %v1807
    %v1812 = vmul.f32 %v212, %v1808
    %v1813 = vmul.f32 %v212, %v1809
    %v1814 = vadd.f32 %v1801, %v1810
    %v1815 = vadd.f32 %v1802, %v1811
    %v1816 = vadd.f32 %v1803, %v1812
    %v1817 = vadd.f32 %v1804, %v1813
    %s1818 = scalar_lea.vmem %s18, 96
    %v1819 = vld [vmem:[%s1818] sm:$0xff]
    %v1820 = vld [vmem:[%s1818 + $0x8] sm:$0xff]
    %v1821 = vld [vmem:[%s1818 + $0x10] sm:$0xff]
    %v1822 = vld [vmem:[%s1818 + $0x18] sm:$0xff]
    %v1823 = vmul.f32 %v227, %v1819
    %v1824 = vmul.f32 %v227, %v1820
    %v1825 = vmul.f32 %v227, %v1821
    %v1826 = vmul.f32 %v227, %v1822
    %v1827 = vadd.f32 %v1814, %v1823
    %v1828 = vadd.f32 %v1815, %v1824
    %v1829 = vadd.f32 %v1816, %v1825
    %v1830 = vadd.f32 %v1817, %v1826
    %s1831 = scalar_lea.vmem %s18, 128
    %v1832 = vld [vmem:[%s1831] sm:$0xff]
    %v1833 = vld [vmem:[%s1831 + $0x8] sm:$0xff]
    %v1834 = vld [vmem:[%s1831 + $0x10] sm:$0xff]
    %v1835 = vld [vmem:[%s1831 + $0x18] sm:$0xff]
    %v1836 = vmul.f32 %v242, %v1832
    %v1837 = vmul.f32 %v242, %v1833
    %v1838 = vmul.f32 %v242, %v1834
    %v1839 = vmul.f32 %v242, %v1835
    %v1840 = vadd.f32 %v1827, %v1836
    %v1841 = vadd.f32 %v1828, %v1837
    %v1842 = vadd.f32 %v1829, %v1838
    %v1843 = vadd.f32 %v1830, %v1839
    %s1844 = scalar_lea.vmem %s18, 160
    %v1845 = vld [vmem:[%s1844] sm:$0xff]
    %v1846 = vld [vmem:[%s1844 + $0x8] sm:$0xff]
    %v1847 = vld [vmem:[%s1844 + $0x10] sm:$0xff]
    %v1848 = vld [vmem:[%s1844 + $0x18] sm:$0xff]
    %v1849 = vmul.f32 %v257, %v1845
    %v1850 = vmul.f32 %v257, %v1846
    %v1851 = vmul.f32 %v257, %v1847
    %v1852 = vmul.f32 %v257, %v1848
    %v1853 = vadd.f32 %v1840, %v1849
    %v1854 = vadd.f32 %v1841, %v1850
    %v1855 = vadd.f32 %v1842, %v1851
    %v1856 = vadd.f32 %v1843, %v1852
    %s1857 = scalar_lea.vmem %s18, 192
    %v1858 = vld [vmem:[%s1857] sm:$0xff]
    %v1859 = vld [vmem:[%s1857 + $0x8] sm:$0xff]
    %v1860 = vld [vmem:[%s1857 + $0x10] sm:$0xff]
    %v1861 = vld [vmem:[%s1857 + $0x18] sm:$0xff]
    %v1862 = vmul.f32 %v272, %v1858
    %v1863 = vmul.f32 %v272, %v1859
    %v1864 = vmul.f32 %v272, %v1860
    %v1865 = vmul.f32 %v272, %v1861
    %v1866 = vadd.f32 %v1853, %v1862
    %v1867 = vadd.f32 %v1854, %v1863
    %v1868 = vadd.f32 %v1855, %v1864
    %v1869 = vadd.f32 %v1856, %v1865
    %s1870 = scalar_lea.vmem %s18, 224
    %v1871 = vld [vmem:[%s1870] sm:$0xff]
    %v1872 = vld [vmem:[%s1870 + $0x8] sm:$0xff]
    %v1873 = vld [vmem:[%s1870 + $0x10] sm:$0xff]
    %v1874 = vld [vmem:[%s1870 + $0x18] sm:$0xff]
    %v1875 = vmul.f32 %v287, %v1871
    %v1876 = vmul.f32 %v287, %v1872
    %v1877 = vmul.f32 %v287, %v1873
    %v1878 = vmul.f32 %v287, %v1874
    %v1879 = vadd.f32 %v1866, %v1875
    %v1880 = vadd.f32 %v1867, %v1876
    %v1881 = vadd.f32 %v1868, %v1877
    %v1882 = vadd.f32 %v1869, %v1878
    %s1883 = scalar_lea.vmem %s18, 256
    %v1884 = vld [vmem:[%s1883] sm:$0xff]
    %v1885 = vld [vmem:[%s1883 + $0x8] sm:$0xff]
    %v1886 = vld [vmem:[%s1883 + $0x10] sm:$0xff]
    %v1887 = vld [vmem:[%s1883 + $0x18] sm:$0xff]
    %v1888 = vmul.f32 %v302, %v1884
    %v1889 = vmul.f32 %v302, %v1885
    %v1890 = vmul.f32 %v302, %v1886
    %v1891 = vmul.f32 %v302, %v1887
    %v1892 = vadd.f32 %v1879, %v1888
    %v1893 = vadd.f32 %v1880, %v1889
    %v1894 = vadd.f32 %v1881, %v1890
    %v1895 = vadd.f32 %v1882, %v1891
    %s1896 = scalar_lea.vmem %s18, 288
    %v1897 = vld [vmem:[%s1896] sm:$0xff]
    %v1898 = vld [vmem:[%s1896 + $0x8] sm:$0xff]
    %v1899 = vld [vmem:[%s1896 + $0x10] sm:$0xff]
    %v1900 = vld [vmem:[%s1896 + $0x18] sm:$0xff]
    %v1901 = vmul.f32 %v317, %v1897
    %v1902 = vmul.f32 %v317, %v1898
    %v1903 = vmul.f32 %v317, %v1899
    %v1904 = vmul.f32 %v317, %v1900
    %v1905 = vadd.f32 %v1892, %v1901
    %v1906 = vadd.f32 %v1893, %v1902
    %v1907 = vadd.f32 %v1894, %v1903
    %v1908 = vadd.f32 %v1895, %v1904
    %s1909 = scalar_lea.vmem %s18, 320
    %v1910 = vld [vmem:[%s1909] sm:$0xff]
    %v1911 = vld [vmem:[%s1909 + $0x8] sm:$0xff]
    %v1912 = vld [vmem:[%s1909 + $0x10] sm:$0xff]
    %v1913 = vld [vmem:[%s1909 + $0x18] sm:$0xff]
    %v1914 = vmul.f32 %v332, %v1910
    %v1915 = vmul.f32 %v332, %v1911
    %v1916 = vmul.f32 %v332, %v1912
    %v1917 = vmul.f32 %v332, %v1913
    %v1918 = vadd.f32 %v1905, %v1914
    %v1919 = vadd.f32 %v1906, %v1915
    %v1920 = vadd.f32 %v1907, %v1916
    %v1921 = vadd.f32 %v1908, %v1917
    %s1922 = scalar_lea.vmem %s18, 352
    %v1923 = vld [vmem:[%s1922] sm:$0xff]
    %v1924 = vld [vmem:[%s1922 + $0x8] sm:$0xff]
    %v1925 = vld [vmem:[%s1922 + $0x10] sm:$0xff]
    %v1926 = vld [vmem:[%s1922 + $0x18] sm:$0xff]
    %v1927 = vmul.f32 %v347, %v1923
    %v1928 = vmul.f32 %v347, %v1924
    %v1929 = vmul.f32 %v347, %v1925
    %v1930 = vmul.f32 %v347, %v1926
    %v1931 = vadd.f32 %v1918, %v1927
    %v1932 = vadd.f32 %v1919, %v1928
    %v1933 = vadd.f32 %v1920, %v1929
    %v1934 = vadd.f32 %v1921, %v1930
    %s1935 = scalar_lea.vmem %s18, 384
    %v1936 = vld [vmem:[%s1935] sm:$0xff]
    %v1937 = vld [vmem:[%s1935 + $0x8] sm:$0xff]
    %v1938 = vld [vmem:[%s1935 + $0x10] sm:$0xff]
    %v1939 = vld [vmem:[%s1935 + $0x18] sm:$0xff]
    %v1940 = vmul.f32 %v362, %v1936
    %v1941 = vmul.f32 %v362, %v1937
    %v1942 = vmul.f32 %v362, %v1938
    %v1943 = vmul.f32 %v362, %v1939
    %v1944 = vadd.f32 %v1931, %v1940
    %v1945 = vadd.f32 %v1932, %v1941
    %v1946 = vadd.f32 %v1933, %v1942
    %v1947 = vadd.f32 %v1934, %v1943
    %s1948 = scalar_lea.vmem %s18, 416
    %v1949 = vld [vmem:[%s1948] sm:$0xff]
    %v1950 = vld [vmem:[%s1948 + $0x8] sm:$0xff]
    %v1951 = vld [vmem:[%s1948 + $0x10] sm:$0xff]
    %v1952 = vld [vmem:[%s1948 + $0x18] sm:$0xff]
    %v1953 = vmul.f32 %v377, %v1949
    %v1954 = vmul.f32 %v377, %v1950
    %v1955 = vmul.f32 %v377, %v1951
    %v1956 = vmul.f32 %v377, %v1952
    %v1957 = vadd.f32 %v1944, %v1953
    %v1958 = vadd.f32 %v1945, %v1954
    %v1959 = vadd.f32 %v1946, %v1955
    %v1960 = vadd.f32 %v1947, %v1956
    %s1961 = scalar_lea.vmem %s18, 448
    %v1962 = vld [vmem:[%s1961] sm:$0xff]
    %v1963 = vld [vmem:[%s1961 + $0x8] sm:$0xff]
    %v1964 = vld [vmem:[%s1961 + $0x10] sm:$0xff]
    %v1965 = vld [vmem:[%s1961 + $0x18] sm:$0xff]
    %v1966 = vmul.f32 %v392, %v1962
    %v1967 = vmul.f32 %v392, %v1963
    %v1968 = vmul.f32 %v392, %v1964
    %v1969 = vmul.f32 %v392, %v1965
    %v1970 = vadd.f32 %v1957, %v1966
    %v1971 = vadd.f32 %v1958, %v1967
    %v1972 = vadd.f32 %v1959, %v1968
    %v1973 = vadd.f32 %v1960, %v1969
    %s1974 = scalar_lea.vmem %s18, 480
    %v1975 = vld [vmem:[%s1974] sm:$0xff]
    %v1976 = vld [vmem:[%s1974 + $0x8] sm:$0xff]
    %v1977 = vld [vmem:[%s1974 + $0x10] sm:$0xff]
    %v1978 = vld [vmem:[%s1974 + $0x18] sm:$0xff]
    %v1979 = vmul.f32 %v407, %v1975
    %v1980 = vmul.f32 %v407, %v1976
    %v1981 = vmul.f32 %v407, %v1977
    %v1982 = vmul.f32 %v407, %v1978
    %v1983 = vadd.f32 %v1970, %v1979
    %v1984 = vadd.f32 %v1971, %v1980
    %v1985 = vadd.f32 %v1972, %v1981
    %v1986 = vadd.f32 %v1973, %v1982
    %s1987 = scalar_lea.vmem %s18, 512
    %v1988 = vld [vmem:[%s1987] sm:$0xff]
    %v1989 = vld [vmem:[%s1987 + $0x8] sm:$0xff]
    %v1990 = vld [vmem:[%s1987 + $0x10] sm:$0xff]
    %v1991 = vld [vmem:[%s1987 + $0x18] sm:$0xff]
    %v1992 = vmul.f32 %v422, %v1988
    %v1993 = vmul.f32 %v422, %v1989
    %v1994 = vmul.f32 %v422, %v1990
    %v1995 = vmul.f32 %v422, %v1991
    %v1996 = vadd.f32 %v1983, %v1992
    %v1997 = vadd.f32 %v1984, %v1993
    %v1998 = vadd.f32 %v1985, %v1994
    %v1999 = vadd.f32 %v1986, %v1995
    %s2000 = scalar_lea.vmem %s18, 544
    %v2001 = vld [vmem:[%s2000] sm:$0xff]
    %v2002 = vld [vmem:[%s2000 + $0x8] sm:$0xff]
    %v2003 = vld [vmem:[%s2000 + $0x10] sm:$0xff]
    %v2004 = vld [vmem:[%s2000 + $0x18] sm:$0xff]
    %v2005 = vmul.f32 %v437, %v2001
    %v2006 = vmul.f32 %v437, %v2002
    %v2007 = vmul.f32 %v437, %v2003
    %v2008 = vmul.f32 %v437, %v2004
    %v2009 = vadd.f32 %v1996, %v2005
    %v2010 = vadd.f32 %v1997, %v2006
    %v2011 = vadd.f32 %v1998, %v2007
    %v2012 = vadd.f32 %v1999, %v2008
    %v2013 = vstv %s165
    %v2014 = vmul.f32 %v2013, %v2009
    %v2015 = vmul.f32 %v2013, %v2010
    %v2016 = vmul.f32 %v2013, %v2011
    %v2017 = vmul.f32 %v2013, %v2012
    %v2018 = vadd.f32 %v1776, %v2014
    %v2019 = vadd.f32 %v1777, %v2015
    %v2020 = vadd.f32 %v1778, %v2016
    %v2021 = vadd.f32 %v1779, %v2017
    %v2022 = vld [vmem:[%s17] sm:$0x1]
    %v2023 = vld [vmem:[%s19] sm:$0xff]
    %v2024 = vld [vmem:[%s19 + $0x8] sm:$0xff]
    %v2025 = vld [vmem:[%s19 + $0x10] sm:$0x3]
    %v2027 = vsel %vm466, %v2025, 0
    %2029 = vmatprep.subr.mxu0 0.0
    %2030 = vmatpush1.msra.mxu0 %v2023
    %2031 = vmatprep.subr.mxu0 0.0
    %2032 = vmatpush1.msra.mxu0 %v2024
    %2033 = vmatprep.subr.mxu0 0.0
    %2034 = vmatpush1.msra.mxu0 %v2027
    %2035 = vmatprep.subr.mxu0 0.0
    %2036 = vmatpush1.msra.mxu0 0.0
    %2037 = vmatprep.subr.mxu0 0.0
    %2038 = vmatpush1.msra.mxu0 0.0
    %2039 = vmatprep.subr.mxu0 0.0
    %2040 = vmatpush1.msra.mxu0 0.0
    %2041 = vmatprep.subr.mxu0 0.0
    %2042 = vmatpush1.msra.mxu0 0.0
    %2043 = vmatprep.subr.mxu0 0.0
    %2044 = vmatpush1.msra.mxu0 0.0
    %2045 = vmatprep.subr.mxu0 0.0
    %2046 = vmatpush1.msra.mxu0 0.0
    %2047 = vmatprep.subr.mxu0 0.0
    %2048 = vmatpush1.msra.mxu0 0.0
    %2049 = vmatprep.subr.mxu0 0.0
    %2050 = vmatpush1.msra.mxu0 0.0
    %2051 = vmatprep.subr.mxu0 0.0
    %2052 = vmatpush1.msra.mxu0 0.0
    %2053 = vmatprep.subr.mxu0 0.0
    %2054 = vmatpush1.msra.mxu0 0.0
    %2055 = vmatprep.subr.mxu0 0.0
    %2056 = vmatpush1.msra.mxu0 0.0
    %2057 = vmatprep.subr.mxu0 0.0
    %2058 = vmatpush1.msra.mxu0 0.0
    %2059 = vmatprep.subr.mxu0 0.0
    %2060 = vmatpush1.msra.mxu0 0.0
    %2061 = vmatprep.subr.mxu0 0.0
    %2062 = vmatpush1.msra.mxu0 0.0
    %2063 = vmatprep.subr.mxu0 0.0
    %2064 = vmatpush1.msra.mxu0 0.0
    %2065 = vmatprep.subr.mxu0 0.0
    %2066 = vmatpush1.msra.mxu0 0.0
    %2067 = vmatprep.subr.mxu0 0.0
    %2068 = vmatpush1.msra.mxu0 0.0
    %2069 = vmatprep.subr.mxu0 0.0
    %2070 = vmatpush1.msra.mxu0 0.0
    %2071 = vmatprep.subr.mxu0 0.0
    %2072 = vmatpush1.msra.mxu0 0.0
    %2073 = vmatprep.subr.mxu0 0.0
    %2074 = vmatpush1.msra.mxu0 0.0
    %2075 = vmatprep.subr.mxu0 0.0
    %2076 = vmatpush1.msra.mxu0 0.0
    %2077 = vmatprep.subr.mxu0 0.0
    %2078 = vmatpush1.msra.mxu0 0.0
    %2079 = vmatprep.subr.mxu0 0.0
    %2080 = vmatpush1.msra.mxu0 0.0
    %2081 = vmatprep.subr.mxu0 0.0
    %2082 = vmatpush1.msra.mxu0 0.0
    %2083 = vmatprep.subr.mxu0 0.0
    %2084 = vmatpush1.msra.mxu0 0.0
    %2085 = vmatprep.subr.mxu0 0.0
    %2086 = vmatpush1.msra.mxu0 0.0
    %2087 = vmatprep.subr.mxu0 0.0
    %2088 = vmatpush1.msra.mxu0 0.0
    %2089 = vmatprep.subr.mxu0 0.0
    %2090 = vmatpush1.msra.mxu0 0.0
    %2091 = vmatprep.subr.mxu0 0.0
    %2092 = vmatpush1.msra.mxu0 0.0
    %2093 = vmatprep.mubr.f32.mxu0 0.0
    %2094 = vmatmul.mubr.f32.gmra.mrb[0].mxu0 %v464
    %v2095 = vpop.f32.mrb[0].mxu0
    %v2096 = vadd.f32 0.0, %v2095
    %v2097 = vpop.f32.mrb[0].mxu0
    %2098 = vdwg.mxu0
    %v2099 = vmul.f32 %v2013, %v2096
    %v2100 = vadd.f32 %v2022, %v2099
    %v2102 = vlaneseq
    %v2103 = vshrl.u32 %v2102, 7
    %v2104 = vsub.s32 0, %v2103
    %v2105 = vrot.slane %v2100, %v2104
    %v2108 = vsel %vm116, %v1774, 0
    %v2111 = vsel %vm116, %v1775, 0
    %2113 = vmatprep.subr.mxu0 0.0
    %2114 = vmatpush1.msra.mxu0 %v2018
    %2115 = vmatprep.subr.mxu0 0.0
    %2116 = vmatpush1.msra.mxu0 %v2019
    %2117 = vmatprep.subr.mxu0 0.0
    %2118 = vmatpush1.msra.mxu0 %v2020
    %2119 = vmatprep.subr.mxu0 0.0
    %2120 = vmatpush1.msra.mxu0 %v2021
    %2121 = vmatprep.subr.mxu0 0.0
    %2122 = vmatpush1.msra.mxu0 0.0
    %2123 = vmatprep.subr.mxu0 0.0
    %2124 = vmatpush1.msra.mxu0 0.0
    %2125 = vmatprep.subr.mxu0 0.0
    %2126 = vmatpush1.msra.mxu0 0.0
    %2127 = vmatprep.subr.mxu0 0.0
    %2128 = vmatpush1.msra.mxu0 0.0
    %2129 = vmatprep.subr.mxu0 0.0
    %2130 = vmatpush1.msra.mxu0 0.0
    %2131 = vmatprep.subr.mxu0 0.0
    %2132 = vmatpush1.msra.mxu0 0.0
    %2133 = vmatprep.subr.mxu0 0.0
    %2134 = vmatpush1.msra.mxu0 0.0
    %2135 = vmatprep.subr.mxu0 0.0
    %2136 = vmatpush1.msra.mxu0 0.0
    %2137 = vmatprep.subr.mxu0 0.0
    %2138 = vmatpush1.msra.mxu0 0.0
    %2139 = vmatprep.subr.mxu0 0.0
    %2140 = vmatpush1.msra.mxu0 0.0
    %2141 = vmatprep.subr.mxu0 0.0
    %2142 = vmatpush1.msra.mxu0 0.0
    %2143 = vmatprep.subr.mxu0 0.0
    %2144 = vmatpush1.msra.mxu0 0.0
    %2145 = vmatprep.subr.mxu0 0.0
    %2146 = vmatpush1.msra.mxu0 0.0
    %2147 = vmatprep.subr.mxu0 0.0
    %2148 = vmatpush1.msra.mxu0 0.0
    %2149 = vmatprep.subr.mxu0 0.0
    %2150 = vmatpush1.msra.mxu0 0.0
    %2151 = vmatprep.subr.mxu0 0.0
    %2152 = vmatpush1.msra.mxu0 0.0
    %2153 = vmatprep.subr.mxu0 0.0
    %2154 = vmatpush1.msra.mxu0 0.0
    %2155 = vmatprep.subr.mxu0 0.0
    %2156 = vmatpush1.msra.mxu0 0.0
    %2157 = vmatprep.subr.mxu0 0.0
    %2158 = vmatpush1.msra.mxu0 0.0
    %2159 = vmatprep.subr.mxu0 0.0
    %2160 = vmatpush1.msra.mxu0 0.0
    %2161 = vmatprep.subr.mxu0 0.0
    %2162 = vmatpush1.msra.mxu0 0.0
    %2163 = vmatprep.subr.mxu0 0.0
    %2164 = vmatpush1.msra.mxu0 0.0
    %2165 = vmatprep.subr.mxu0 0.0
    %2166 = vmatpush1.msra.mxu0 0.0
    %2167 = vmatprep.subr.mxu0 0.0
    %2168 = vmatpush1.msra.mxu0 0.0
    %2169 = vmatprep.subr.mxu0 0.0
    %2170 = vmatpush1.msra.mxu0 0.0
    %2171 = vmatprep.subr.mxu0 0.0
    %2172 = vmatpush1.msra.mxu0 0.0
    %2173 = vmatprep.subr.mxu0 0.0
    %2174 = vmatpush1.msra.mxu0 0.0
    %2175 = vmatprep.subr.mxu0 0.0
    %2176 = vmatpush1.msra.mxu0 0.0
    %2177 = vmatprep.mubr.f32.mxu0 0.0
    %2178 = vmatmul.mubr.f32.gmra.mrb[0].mxu0 %v2108
    %v2179 = vpop.f32.mrb[0].mxu0
    %v2180 = vadd.f32 %v2105, %v2179
    %v2181 = vpop.f32.mrb[0].mxu0
    %2182 = vmatprep.mubr.f32.mxu0 0.0
    %2183 = vmatmul.mubr.f32.gmra.mrb[0].mxu0 %v2111
    %v2184 = vpop.f32.mrb[0].mxu0
    %v2185 = vadd.f32 %v2105, %v2184
    %v2186 = vpop.f32.mrb[0].mxu0
    %2187 = vdwg.mxu0
    %v2188 = vmul.f32 %v2180, 0.5
    %v2189 = vmul.f32 %v2185, 0.5
    %v2190 = vmul.f32 %v2180, 0.044715
    %v2191 = vmul.f32 %v2185, 0.044715
    %v2192 = vmul.f32 %v2190, %v2180
    %v2193 = vmul.f32 %v2191, %v2185
    %v2194 = vmul.f32 %v2192, %v2180
    %v2195 = vmul.f32 %v2193, %v2185
    %v2196 = vadd.f32 %v2180, %v2194
    %v2197 = vadd.f32 %v2185, %v2195
    %v2198 = vmul.f32 %v2196, 0.7978846
    %v2199 = vmul.f32 %v2197, 0.7978846
    %v2200 = vtanh.pop %v2198
    %v2201 = vtanh.pop %v2199
    %v2202 = vadd.f32 %v2200, 1.0
    %v2203 = vadd.f32 %v2201, 1.0
    %v2204 = vmul.f32 %v2188, %v2202
    %v2205 = vmul.f32 %v2189, %v2203
    %v2206 = vld [vmem:[%s20] sm:$0xff]
    %v2207 = vld [vmem:[%s20 + $0x8] sm:$0xff]
    %v2208 = vld [vmem:[%s20 + $0x10] sm:$0xff]
    %v2209 = vld [vmem:[%s20 + $0x18] sm:$0xff]
    %v2210 = vld [vmem:[%s20 + $0x20] sm:$0xff]
    %v2211 = vld [vmem:[%s20 + $0x28] sm:$0xff]
    %v2212 = vld [vmem:[%s20 + $0x30] sm:$0xff]
    %v2213 = vld [vmem:[%s20 + $0x38] sm:$0xff]
    %v2214 = vld [vmem:[%s20 + $0x40] sm:$0xff]
    %v2215 = vld [vmem:[%s20 + $0x48] sm:$0xff]
    %v2216 = vld [vmem:[%s20 + $0x50] sm:$0xff]
    %v2217 = vld [vmem:[%s20 + $0x58] sm:$0xff]
    %v2218 = vld [vmem:[%s20 + $0x60] sm:$0xff]
    %v2219 = vld [vmem:[%s20 + $0x68] sm:$0xff]
    %v2220 = vld [vmem:[%s20 + $0x70] sm:$0xff]
    %v2221 = vld [vmem:[%s20 + $0x78] sm:$0xff]
    %v2222 = vld [vmem:[%s22] sm:$0xff]
    %v2223 = vld [vmem:[%s22 + $0x8] sm:$0xff]
    %v2224 = vld [vmem:[%s22 + $0x10] sm:$0xff]
    %v2225 = vld [vmem:[%s22 + $0x18] sm:$0xff]
    %v2226 = vld [vmem:[%s22 + $0x20] sm:$0xff]
    %v2227 = vld [vmem:[%s22 + $0x28] sm:$0xff]
    %v2228 = vld [vmem:[%s22 + $0x30] sm:$0xff]
    %v2229 = vld [vmem:[%s22 + $0x38] sm:$0xff]
    %v2230 = vld [vmem:[%s22 + $0x40] sm:$0xff]
    %v2231 = vld [vmem:[%s22 + $0x48] sm:$0xff]
    %v2232 = vld [vmem:[%s22 + $0x50] sm:$0xff]
    %v2233 = vld [vmem:[%s22 + $0x58] sm:$0xff]
    %v2234 = vld [vmem:[%s22 + $0x60] sm:$0xff]
    %v2235 = vld [vmem:[%s22 + $0x68] sm:$0xff]
    %v2236 = vld [vmem:[%s22 + $0x70] sm:$0xff]
    %v2237 = vld [vmem:[%s22 + $0x78] sm:$0xff]
    %v2238 = vmul.f32 %v182, %v2222
    %v2239 = vmul.f32 %v182, %v2223
    %v2240 = vmul.f32 %v182, %v2224
    %v2241 = vmul.f32 %v182, %v2225
    %v2242 = vmul.f32 %v182, %v2226
    %v2243 = vmul.f32 %v182, %v2227
    %v2244 = vmul.f32 %v182, %v2228
    %v2245 = vmul.f32 %v182, %v2229
    %v2246 = vmul.f32 %v182, %v2230
    %v2247 = vmul.f32 %v182, %v2231
    %v2248 = vmul.f32 %v182, %v2232
    %v2249 = vmul.f32 %v182, %v2233
    %v2250 = vmul.f32 %v182, %v2234
    %v2251 = vmul.f32 %v182, %v2235
    %v2252 = vmul.f32 %v182, %v2236
    %v2253 = vmul.f32 %v182, %v2237
    %v2254 = vadd.f32 %v2238, 0.0
    %v2255 = vadd.f32 %v2239, 0.0
    %v2256 = vadd.f32 %v2240, 0.0
    %v2257 = vadd.f32 %v2241, 0.0
    %v2258 = vadd.f32 %v2242, 0.0
    %v2259 = vadd.f32 %v2243, 0.0
    %v2260 = vadd.f32 %v2244, 0.0
    %v2261 = vadd.f32 %v2245, 0.0
    %v2262 = vadd.f32 %v2246, 0.0
    %v2263 = vadd.f32 %v2247, 0.0
    %v2264 = vadd.f32 %v2248, 0.0
    %v2265 = vadd.f32 %v2249, 0.0
    %v2266 = vadd.f32 %v2250, 0.0
    %v2267 = vadd.f32 %v2251, 0.0
    %v2268 = vadd.f32 %v2252, 0.0
    %v2269 = vadd.f32 %v2253, 0.0
    %s2270 = scalar_lea.vmem %s22, 128
    %v2271 = vld [vmem:[%s2270] sm:$0xff]
    %v2272 = vld [vmem:[%s2270 + $0x8] sm:$0xff]
    %v2273 = vld [vmem:[%s2270 + $0x10] sm:$0xff]
    %v2274 = vld [vmem:[%s2270 + $0x18] sm:$0xff]
    %v2275 = vld [vmem:[%s2270 + $0x20] sm:$0xff]
    %v2276 = vld [vmem:[%s2270 + $0x28] sm:$0xff]
    %v2277 = vld [vmem:[%s2270 + $0x30] sm:$0xff]
    %v2278 = vld [vmem:[%s2270 + $0x38] sm:$0xff]
    %v2279 = vld [vmem:[%s2270 + $0x40] sm:$0xff]
    %v2280 = vld [vmem:[%s2270 + $0x48] sm:$0xff]
    %v2281 = vld [vmem:[%s2270 + $0x50] sm:$0xff]
    %v2282 = vld [vmem:[%s2270 + $0x58] sm:$0xff]
    %v2283 = vld [vmem:[%s2270 + $0x60] sm:$0xff]
    %v2284 = vld [vmem:[%s2270 + $0x68] sm:$0xff]
    %v2285 = vld [vmem:[%s2270 + $0x70] sm:$0xff]
    %v2286 = vld [vmem:[%s2270 + $0x78] sm:$0xff]
    %v2287 = vmul.f32 %v197, %v2271
    %v2288 = vmul.f32 %v197, %v2272
    %v2289 = vmul.f32 %v197, %v2273
    %v2290 = vmul.f32 %v197, %v2274
    %v2291 = vmul.f32 %v197, %v2275
    %v2292 = vmul.f32 %v197, %v2276
    %v2293 = vmul.f32 %v197, %v2277
    %v2294 = vmul.f32 %v197, %v2278
    %v2295 = vmul.f32 %v197, %v2279
    %v2296 = vmul.f32 %v197, %v2280
    %v2297 = vmul.f32 %v197, %v2281
    %v2298 = vmul.f32 %v197, %v2282
    %v2299 = vmul.f32 %v197, %v2283
    %v2300 = vmul.f32 %v197, %v2284
    %v2301 = vmul.f32 %v197, %v2285
    %v2302 = vmul.f32 %v197, %v2286
    %v2303 = vadd.f32 %v2254, %v2287
    %v2304 = vadd.f32 %v2255, %v2288
    %v2305 = vadd.f32 %v2256, %v2289
    %v2306 = vadd.f32 %v2257, %v2290
    %v2307 = vadd.f32 %v2258, %v2291
    %v2308 = vadd.f32 %v2259, %v2292
    %v2309 = vadd.f32 %v2260, %v2293
    %v2310 = vadd.f32 %v2261, %v2294
    %v2311 = vadd.f32 %v2262, %v2295
    %v2312 = vadd.f32 %v2263, %v2296
    %v2313 = vadd.f32 %v2264, %v2297
    %v2314 = vadd.f32 %v2265, %v2298
    %v2315 = vadd.f32 %v2266, %v2299
    %v2316 = vadd.f32 %v2267, %v2300
    %v2317 = vadd.f32 %v2268, %v2301
    %v2318 = vadd.f32 %v2269, %v2302
    %s2319 = scalar_lea.vmem %s22, 256
    %v2320 = vld [vmem:[%s2319] sm:$0xff]
    %v2321 = vld [vmem:[%s2319 + $0x8] sm:$0xff]
    %v2322 = vld [vmem:[%s2319 + $0x10] sm:$0xff]
    %v2323 = vld [vmem:[%s2319 + $0x18] sm:$0xff]
    %v2324 = vld [vmem:[%s2319 + $0x20] sm:$0xff]
    %v2325 = vld [vmem:[%s2319 + $0x28] sm:$0xff]
    %v2326 = vld [vmem:[%s2319 + $0x30] sm:$0xff]
    %v2327 = vld [vmem:[%s2319 + $0x38] sm:$0xff]
    %v2328 = vld [vmem:[%s2319 + $0x40] sm:$0xff]
    %v2329 = vld [vmem:[%s2319 + $0x48] sm:$0xff]
    %v2330 = vld [vmem:[%s2319 + $0x50] sm:$0xff]
    %v2331 = vld [vmem:[%s2319 + $0x58] sm:$0xff]
    %v2332 = vld [vmem:[%s2319 + $0x60] sm:$0xff]
    %v2333 = vld [vmem:[%s2319 + $0x68] sm:$0xff]
    %v2334 = vld [vmem:[%s2319 + $0x70] sm:$0xff]
    %v2335 = vld [vmem:[%s2319 + $0x78] sm:$0xff]
    %v2336 = vmul.f32 %v212, %v2320
    %v2337 = vmul.f32 %v212, %v2321
    %v2338 = vmul.f32 %v212, %v2322
    %v2339 = vmul.f32 %v212, %v2323
    %v2340 = vmul.f32 %v212, %v2324
    %v2341 = vmul.f32 %v212, %v2325
    %v2342 = vmul.f32 %v212, %v2326
    %v2343 = vmul.f32 %v212, %v2327
    %v2344 = vmul.f32 %v212, %v2328
    %v2345 = vmul.f32 %v212, %v2329
    %v2346 = vmul.f32 %v212, %v2330
    %v2347 = vmul.f32 %v212, %v2331
    %v2348 = vmul.f32 %v212, %v2332
    %v2349 = vmul.f32 %v212, %v2333
    %v2350 = vmul.f32 %v212, %v2334
    %v2351 = vmul.f32 %v212, %v2335
    %v2352 = vadd.f32 %v2303, %v2336
    %v2353 = vadd.f32 %v2304, %v2337
    %v2354 = vadd.f32 %v2305, %v2338
    %v2355 = vadd.f32 %v2306, %v2339
    %v2356 = vadd.f32 %v2307, %v2340
    %v2357 = vadd.f32 %v2308, %v2341
    %v2358 = vadd.f32 %v2309, %v2342
    %v2359 = vadd.f32 %v2310, %v2343
    %v2360 = vadd.f32 %v2311, %v2344
    %v2361 = vadd.f32 %v2312, %v2345
    %v2362 = vadd.f32 %v2313, %v2346
    %v2363 = vadd.f32 %v2314, %v2347
    %v2364 = vadd.f32 %v2315, %v2348
    %v2365 = vadd.f32 %v2316, %v2349
    %v2366 = vadd.f32 %v2317, %v2350
    %v2367 = vadd.f32 %v2318, %v2351
    %s2368 = scalar_lea.vmem %s22, 384
    %v2369 = vld [vmem:[%s2368] sm:$0xff]
    %v2370 = vld [vmem:[%s2368 + $0x8] sm:$0xff]
    %v2371 = vld [vmem:[%s2368 + $0x10] sm:$0xff]
    %v2372 = vld [vmem:[%s2368 + $0x18] sm:$0xff]
    %v2373 = vld [vmem:[%s2368 + $0x20] sm:$0xff]
    %v2374 = vld [vmem:[%s2368 + $0x28] sm:$0xff]
    %v2375 = vld [vmem:[%s2368 + $0x30] sm:$0xff]
    %v2376 = vld [vmem:[%s2368 + $0x38] sm:$0xff]
    %v2377 = vld [vmem:[%s2368 + $0x40] sm:$0xff]
    %v2378 = vld [vmem:[%s2368 + $0x48] sm:$0xff]
    %v2379 = vld [vmem:[%s2368 + $0x50] sm:$0xff]
    %v2380 = vld [vmem:[%s2368 + $0x58] sm:$0xff]
    %v2381 = vld [vmem:[%s2368 + $0x60] sm:$0xff]
    %v2382 = vld [vmem:[%s2368 + $0x68] sm:$0xff]
    %v2383 = vld [vmem:[%s2368 + $0x70] sm:$0xff]
    %v2384 = vld [vmem:[%s2368 + $0x78] sm:$0xff]
    %v2385 = vmul.f32 %v227, %v2369
    %v2386 = vmul.f32 %v227, %v2370
    %v2387 = vmul.f32 %v227, %v2371
    %v2388 = vmul.f32 %v227, %v2372
    %v2389 = vmul.f32 %v227, %v2373
    %v2390 = vmul.f32 %v227, %v2374
    %v2391 = vmul.f32 %v227, %v2375
    %v2392 = vmul.f32 %v227, %v2376
    %v2393 = vmul.f32 %v227, %v2377
    %v2394 = vmul.f32 %v227, %v2378
    %v2395 = vmul.f32 %v227, %v2379
    %v2396 = vmul.f32 %v227, %v2380
    %v2397 = vmul.f32 %v227, %v2381
    %v2398 = vmul.f32 %v227, %v2382
    %v2399 = vmul.f32 %v227, %v2383
    %v2400 = vmul.f32 %v227, %v2384
    %v2401 = vadd.f32 %v2352, %v2385
    %v2402 = vadd.f32 %v2353, %v2386
    %v2403 = vadd.f32 %v2354, %v2387
    %v2404 = vadd.f32 %v2355, %v2388
    %v2405 = vadd.f32 %v2356, %v2389
    %v2406 = vadd.f32 %v2357, %v2390
    %v2407 = vadd.f32 %v2358, %v2391
    %v2408 = vadd.f32 %v2359, %v2392
    %v2409 = vadd.f32 %v2360, %v2393
    %v2410 = vadd.f32 %v2361, %v2394
    %v2411 = vadd.f32 %v2362, %v2395
    %v2412 = vadd.f32 %v2363, %v2396
    %v2413 = vadd.f32 %v2364, %v2397
    %v2414 = vadd.f32 %v2365, %v2398
    %v2415 = vadd.f32 %v2366, %v2399
    %v2416 = vadd.f32 %v2367, %v2400
    %s2417 = scalar_lea.vmem %s22, 512
    %v2418 = vld [vmem:[%s2417] sm:$0xff]
    %v2419 = vld [vmem:[%s2417 + $0x8] sm:$0xff]
    %v2420 = vld [vmem:[%s2417 + $0x10] sm:$0xff]
    %v2421 = vld [vmem:[%s2417 + $0x18] sm:$0xff]
    %v2422 = vld [vmem:[%s2417 + $0x20] sm:$0xff]
    %v2423 = vld [vmem:[%s2417 + $0x28] sm:$0xff]
    %v2424 = vld [vmem:[%s2417 + $0x30] sm:$0xff]
    %v2425 = vld [vmem:[%s2417 + $0x38] sm:$0xff]
    %v2426 = vld [vmem:[%s2417 + $0x40] sm:$0xff]
    %v2427 = vld [vmem:[%s2417 + $0x48] sm:$0xff]
    %v2428 = vld [vmem:[%s2417 + $0x50] sm:$0xff]
    %v2429 = vld [vmem:[%s2417 + $0x58] sm:$0xff]
    %v2430 = vld [vmem:[%s2417 + $0x60] sm:$0xff]
    %v2431 = vld [vmem:[%s2417 + $0x68] sm:$0xff]
    %v2432 = vld [vmem:[%s2417 + $0x70] sm:$0xff]
    %v2433 = vld [vmem:[%s2417 + $0x78] sm:$0xff]
    %v2434 = vmul.f32 %v242, %v2418
    %v2435 = vmul.f32 %v242, %v2419
    %v2436 = vmul.f32 %v242, %v2420
    %v2437 = vmul.f32 %v242, %v2421
    %v2438 = vmul.f32 %v242, %v2422
    %v2439 = vmul.f32 %v242, %v2423
    %v2440 = vmul.f32 %v242, %v2424
    %v2441 = vmul.f32 %v242, %v2425
    %v2442 = vmul.f32 %v242, %v2426
    %v2443 = vmul.f32 %v242, %v2427
    %v2444 = vmul.f32 %v242, %v2428
    %v2445 = vmul.f32 %v242, %v2429
    %v2446 = vmul.f32 %v242, %v2430
    %v2447 = vmul.f32 %v242, %v2431
    %v2448 = vmul.f32 %v242, %v2432
    %v2449 = vmul.f32 %v242, %v2433
    %v2450 = vadd.f32 %v2401, %v2434
    %v2451 = vadd.f32 %v2402, %v2435
    %v2452 = vadd.f32 %v2403, %v2436
    %v2453 = vadd.f32 %v2404, %v2437
    %v2454 = vadd.f32 %v2405, %v2438
    %v2455 = vadd.f32 %v2406, %v2439
    %v2456 = vadd.f32 %v2407, %v2440
    %v2457 = vadd.f32 %v2408, %v2441
    %v2458 = vadd.f32 %v2409, %v2442
    %v2459 = vadd.f32 %v2410, %v2443
    %v2460 = vadd.f32 %v2411, %v2444
    %v2461 = vadd.f32 %v2412, %v2445
    %v2462 = vadd.f32 %v2413, %v2446
    %v2463 = vadd.f32 %v2414, %v2447
    %v2464 = vadd.f32 %v2415, %v2448
    %v2465 = vadd.f32 %v2416, %v2449
    %s2466 = scalar_lea.vmem %s22, 640
    %v2467 = vld [vmem:[%s2466] sm:$0xff]
    %v2468 = vld [vmem:[%s2466 + $0x8] sm:$0xff]
    %v2469 = vld [vmem:[%s2466 + $0x10] sm:$0xff]
    %v2470 = vld [vmem:[%s2466 + $0x18] sm:$0xff]
    %v2471 = vld [vmem:[%s2466 + $0x20] sm:$0xff]
    %v2472 = vld [vmem:[%s2466 + $0x28] sm:$0xff]
    %v2473 = vld [vmem:[%s2466 + $0x30] sm:$0xff]
    %v2474 = vld [vmem:[%s2466 + $0x38] sm:$0xff]
    %v2475 = vld [vmem:[%s2466 + $0x40] sm:$0xff]
    %v2476 = vld [vmem:[%s2466 + $0x48] sm:$0xff]
    %v2477 = vld [vmem:[%s2466 + $0x50] sm:$0xff]
    %v2478 = vld [vmem:[%s2466 + $0x58] sm:$0xff]
    %v2479 = vld [vmem:[%s2466 + $0x60] sm:$0xff]
    %v2480 = vld [vmem:[%s2466 + $0x68] sm:$0xff]
    %v2481 = vld [vmem:[%s2466 + $0x70] sm:$0xff]
    %v2482 = vld [vmem:[%s2466 + $0x78] sm:$0xff]
    %v2483 = vmul.f32 %v257, %v2467
    %v2484 = vmul.f32 %v257, %v2468
    %v2485 = vmul.f32 %v257, %v2469
    %v2486 = vmul.f32 %v257, %v2470
    %v2487 = vmul.f32 %v257, %v2471
    %v2488 = vmul.f32 %v257, %v2472
    %v2489 = vmul.f32 %v257, %v2473
    %v2490 = vmul.f32 %v257, %v2474
    %v2491 = vmul.f32 %v257, %v2475
    %v2492 = vmul.f32 %v257, %v2476
    %v2493 = vmul.f32 %v257, %v2477
    %v2494 = vmul.f32 %v257, %v2478
    %v2495 = vmul.f32 %v257, %v2479
    %v2496 = vmul.f32 %v257, %v2480
    %v2497 = vmul.f32 %v257, %v2481
    %v2498 = vmul.f32 %v257, %v2482
    %v2499 = vadd.f32 %v2450, %v2483
    %v2500 = vadd.f32 %v2451, %v2484
    %v2501 = vadd.f32 %v2452, %v2485
    %v2502 = vadd.f32 %v2453, %v2486
    %v2503 = vadd.f32 %v2454, %v2487
    %v2504 = vadd.f32 %v2455, %v2488
    %v2505 = vadd.f32 %v2456, %v2489
    %v2506 = vadd.f32 %v2457, %v2490
    %v2507 = vadd.f32 %v2458, %v2491
    %v2508 = vadd.f32 %v2459, %v2492
    %v2509 = vadd.f32 %v2460, %v2493
    %v2510 = vadd.f32 %v2461, %v2494
    %v2511 = vadd.f32 %v2462, %v2495
    %v2512 = vadd.f32 %v2463, %v2496
    %v2513 = vadd.f32 %v2464, %v2497
    %v2514 = vadd.f32 %v2465, %v2498
    %s2515 = scalar_lea.vmem %s22, 768
    %v2516 = vld [vmem:[%s2515] sm:$0xff]
    %v2517 = vld [vmem:[%s2515 + $0x8] sm:$0xff]
    %v2518 = vld [vmem:[%s2515 + $0x10] sm:$0xff]
    %v2519 = vld [vmem:[%s2515 + $0x18] sm:$0xff]
    %v2520 = vld [vmem:[%s2515 + $0x20] sm:$0xff]
    %v2521 = vld [vmem:[%s2515 + $0x28] sm:$0xff]
    %v2522 = vld [vmem:[%s2515 + $0x30] sm:$0xff]
    %v2523 = vld [vmem:[%s2515 + $0x38] sm:$0xff]
    %v2524 = vld [vmem:[%s2515 + $0x40] sm:$0xff]
    %v2525 = vld [vmem:[%s2515 + $0x48] sm:$0xff]
    %v2526 = vld [vmem:[%s2515 + $0x50] sm:$0xff]
    %v2527 = vld [vmem:[%s2515 + $0x58] sm:$0xff]
    %v2528 = vld [vmem:[%s2515 + $0x60] sm:$0xff]
    %v2529 = vld [vmem:[%s2515 + $0x68] sm:$0xff]
    %v2530 = vld [vmem:[%s2515 + $0x70] sm:$0xff]
    %v2531 = vld [vmem:[%s2515 + $0x78] sm:$0xff]
    %v2532 = vmul.f32 %v272, %v2516
    %v2533 = vmul.f32 %v272, %v2517
    %v2534 = vmul.f32 %v272, %v2518
    %v2535 = vmul.f32 %v272, %v2519
    %v2536 = vmul.f32 %v272, %v2520
    %v2537 = vmul.f32 %v272, %v2521
    %v2538 = vmul.f32 %v272, %v2522
    %v2539 = vmul.f32 %v272, %v2523
    %v2540 = vmul.f32 %v272, %v2524
    %v2541 = vmul.f32 %v272, %v2525
    %v2542 = vmul.f32 %v272, %v2526
    %v2543 = vmul.f32 %v272, %v2527
    %v2544 = vmul.f32 %v272, %v2528
    %v2545 = vmul.f32 %v272, %v2529
    %v2546 = vmul.f32 %v272, %v2530
    %v2547 = vmul.f32 %v272, %v2531
    %v2548 = vadd.f32 %v2499, %v2532
    %v2549 = vadd.f32 %v2500, %v2533
    %v2550 = vadd.f32 %v2501, %v2534
    %v2551 = vadd.f32 %v2502, %v2535
    %v2552 = vadd.f32 %v2503, %v2536
    %v2553 = vadd.f32 %v2504, %v2537
    %v2554 = vadd.f32 %v2505, %v2538
    %v2555 = vadd.f32 %v2506, %v2539
    %v2556 = vadd.f32 %v2507, %v2540
    %v2557 = vadd.f32 %v2508, %v2541
    %v2558 = vadd.f32 %v2509, %v2542
    %v2559 = vadd.f32 %v2510, %v2543
    %v2560 = vadd.f32 %v2511, %v2544
    %v2561 = vadd.f32 %v2512, %v2545
    %v2562 = vadd.f32 %v2513, %v2546
    %v2563 = vadd.f32 %v2514, %v2547
    %s2564 = scalar_lea.vmem %s22, 896
    %v2565 = vld [vmem:[%s2564] sm:$0xff]
    %v2566 = vld [vmem:[%s2564 + $0x8] sm:$0xff]
    %v2567 = vld [vmem:[%s2564 + $0x10] sm:$0xff]
    %v2568 = vld [vmem:[%s2564 + $0x18] sm:$0xff]
    %v2569 = vld [vmem:[%s2564 + $0x20] sm:$0xff]
    %v2570 = vld [vmem:[%s2564 + $0x28] sm:$0xff]
    %v2571 = vld [vmem:[%s2564 + $0x30] sm:$0xff]
    %v2572 = vld [vmem:[%s2564 + $0x38] sm:$0xff]
    %v2573 = vld [vmem:[%s2564 + $0x40] sm:$0xff]
    %v2574 = vld [vmem:[%s2564 + $0x48] sm:$0xff]
    %v2575 = vld [vmem:[%s2564 + $0x50] sm:$0xff]
    %v2576 = vld [vmem:[%s2564 + $0x58] sm:$0xff]
    %v2577 = vld [vmem:[%s2564 + $0x60] sm:$0xff]
    %v2578 = vld [vmem:[%s2564 + $0x68] sm:$0xff]
    %v2579 = vld [vmem:[%s2564 + $0x70] sm:$0xff]
    %v2580 = vld [vmem:[%s2564 + $0x78] sm:$0xff]
    %v2581 = vmul.f32 %v287, %v2565
    %v2582 = vmul.f32 %v287, %v2566
    %v2583 = vmul.f32 %v287, %v2567
    %v2584 = vmul.f32 %v287, %v2568
    %v2585 = vmul.f32 %v287, %v2569
    %v2586 = vmul.f32 %v287, %v2570
    %v2587 = vmul.f32 %v287, %v2571
    %v2588 = vmul.f32 %v287, %v2572
    %v2589 = vmul.f32 %v287, %v2573
    %v2590 = vmul.f32 %v287, %v2574
    %v2591 = vmul.f32 %v287, %v2575
    %v2592 = vmul.f32 %v287, %v2576
    %v2593 = vmul.f32 %v287, %v2577
    %v2594 = vmul.f32 %v287, %v2578
    %v2595 = vmul.f32 %v287, %v2579
    %v2596 = vmul.f32 %v287, %v2580
    %v2597 = vadd.f32 %v2548, %v2581
    %v2598 = vadd.f32 %v2549, %v2582
    %v2599 = vadd.f32 %v2550, %v2583
    %v2600 = vadd.f32 %v2551, %v2584
    %v2601 = vadd.f32 %v2552, %v2585
    %v2602 = vadd.f32 %v2553, %v2586
    %v2603 = vadd.f32 %v2554, %v2587
    %v2604 = vadd.f32 %v2555, %v2588
    %v2605 = vadd.f32 %v2556, %v2589
    %v2606 = vadd.f32 %v2557, %v2590
    %v2607 = vadd.f32 %v2558, %v2591
    %v2608 = vadd.f32 %v2559, %v2592
    %v2609 = vadd.f32 %v2560, %v2593
    %v2610 = vadd.f32 %v2561, %v2594
    %v2611 = vadd.f32 %v2562, %v2595
    %v2612 = vadd.f32 %v2563, %v2596
    %s2613 = scalar_lea.vmem %s22, 1024
    %v2614 = vld [vmem:[%s2613] sm:$0xff]
    %v2615 = vld [vmem:[%s2613 + $0x8] sm:$0xff]
    %v2616 = vld [vmem:[%s2613 + $0x10] sm:$0xff]
    %v2617 = vld [vmem:[%s2613 + $0x18] sm:$0xff]
    %v2618 = vld [vmem:[%s2613 + $0x20] sm:$0xff]
    %v2619 = vld [vmem:[%s2613 + $0x28] sm:$0xff]
    %v2620 = vld [vmem:[%s2613 + $0x30] sm:$0xff]
    %v2621 = vld [vmem:[%s2613 + $0x38] sm:$0xff]
    %v2622 = vld [vmem:[%s2613 + $0x40] sm:$0xff]
    %v2623 = vld [vmem:[%s2613 + $0x48] sm:$0xff]
    %v2624 = vld [vmem:[%s2613 + $0x50] sm:$0xff]
    %v2625 = vld [vmem:[%s2613 + $0x58] sm:$0xff]
    %v2626 = vld [vmem:[%s2613 + $0x60] sm:$0xff]
    %v2627 = vld [vmem:[%s2613 + $0x68] sm:$0xff]
    %v2628 = vld [vmem:[%s2613 + $0x70] sm:$0xff]
    %v2629 = vld [vmem:[%s2613 + $0x78] sm:$0xff]
    %v2630 = vmul.f32 %v302, %v2614
    %v2631 = vmul.f32 %v302, %v2615
    %v2632 = vmul.f32 %v302, %v2616
    %v2633 = vmul.f32 %v302, %v2617
    %v2634 = vmul.f32 %v302, %v2618
    %v2635 = vmul.f32 %v302, %v2619
    %v2636 = vmul.f32 %v302, %v2620
    %v2637 = vmul.f32 %v302, %v2621
    %v2638 = vmul.f32 %v302, %v2622
    %v2639 = vmul.f32 %v302, %v2623
    %v2640 = vmul.f32 %v302, %v2624
    %v2641 = vmul.f32 %v302, %v2625
    %v2642 = vmul.f32 %v302, %v2626
    %v2643 = vmul.f32 %v302, %v2627
    %v2644 = vmul.f32 %v302, %v2628
    %v2645 = vmul.f32 %v302, %v2629
    %v2646 = vadd.f32 %v2597, %v2630
    %v2647 = vadd.f32 %v2598, %v2631
    %v2648 = vadd.f32 %v2599, %v2632
    %v2649 = vadd.f32 %v2600, %v2633
    %v2650 = vadd.f32 %v2601, %v2634
    %v2651 = vadd.f32 %v2602, %v2635
    %v2652 = vadd.f32 %v2603, %v2636
    %v2653 = vadd.f32 %v2604, %v2637
    %v2654 = vadd.f32 %v2605, %v2638
    %v2655 = vadd.f32 %v2606, %v2639
    %v2656 = vadd.f32 %v2607, %v2640
    %v2657 = vadd.f32 %v2608, %v2641
    %v2658 = vadd.f32 %v2609, %v2642
    %v2659 = vadd.f32 %v2610, %v2643
    %v2660 = vadd.f32 %v2611, %v2644
    %v2661 = vadd.f32 %v2612, %v2645
    %s2662 = scalar_lea.vmem %s22, 1152
    %v2663 = vld [vmem:[%s2662] sm:$0xff]
    %v2664 = vld [vmem:[%s2662 + $0x8] sm:$0xff]
    %v2665 = vld [vmem:[%s2662 + $0x10] sm:$0xff]
    %v2666 = vld [vmem:[%s2662 + $0x18] sm:$0xff]
    %v2667 = vld [vmem:[%s2662 + $0x20] sm:$0xff]
    %v2668 = vld [vmem:[%s2662 + $0x28] sm:$0xff]
    %v2669 = vld [vmem:[%s2662 + $0x30] sm:$0xff]
    %v2670 = vld [vmem:[%s2662 + $0x38] sm:$0xff]
    %v2671 = vld [vmem:[%s2662 + $0x40] sm:$0xff]
    %v2672 = vld [vmem:[%s2662 + $0x48] sm:$0xff]
    %v2673 = vld [vmem:[%s2662 + $0x50] sm:$0xff]
    %v2674 = vld [vmem:[%s2662 + $0x58] sm:$0xff]
    %v2675 = vld [vmem:[%s2662 + $0x60] sm:$0xff]
    %v2676 = vld [vmem:[%s2662 + $0x68] sm:$0xff]
    %v2677 = vld [vmem:[%s2662 + $0x70] sm:$0xff]
    %v2678 = vld [vmem:[%s2662 + $0x78] sm:$0xff]
    %v2679 = vmul.f32 %v317, %v2663
    %v2680 = vmul.f32 %v317, %v2664
    %v2681 = vmul.f32 %v317, %v2665
    %v2682 = vmul.f32 %v317, %v2666
    %v2683 = vmul.f32 %v317, %v2667
    %v2684 = vmul.f32 %v317, %v2668
    %v2685 = vmul.f32 %v317, %v2669
    %v2686 = vmul.f32 %v317, %v2670
    %v2687 = vmul.f32 %v317, %v2671
    %v2688 = vmul.f32 %v317, %v2672
    %v2689 = vmul.f32 %v317, %v2673
    %v2690 = vmul.f32 %v317, %v2674
    %v2691 = vmul.f32 %v317, %v2675
    %v2692 = vmul.f32 %v317, %v2676
    %v2693 = vmul.f32 %v317, %v2677
    %v2694 = vmul.f32 %v317, %v2678
    %v2695 = vadd.f32 %v2646, %v2679
    %v2696 = vadd.f32 %v2647, %v2680
    %v2697 = vadd.f32 %v2648, %v2681
    %v2698 = vadd.f32 %v2649, %v2682
    %v2699 = vadd.f32 %v2650, %v2683
    %v2700 = vadd.f32 %v2651, %v2684
    %v2701 = vadd.f32 %v2652, %v2685
    %v2702 = vadd.f32 %v2653, %v2686
    %v2703 = vadd.f32 %v2654, %v2687
    %v2704 = vadd.f32 %v2655, %v2688
    %v2705 = vadd.f32 %v2656, %v2689
    %v2706 = vadd.f32 %v2657, %v2690
    %v2707 = vadd.f32 %v2658, %v2691
    %v2708 = vadd.f32 %v2659, %v2692
    %v2709 = vadd.f32 %v2660, %v2693
    %v2710 = vadd.f32 %v2661, %v2694
    %s2711 = scalar_lea.vmem %s22, 1280
    %v2712 = vld [vmem:[%s2711] sm:$0xff]
    %v2713 = vld [vmem:[%s2711 + $0x8] sm:$0xff]
    %v2714 = vld [vmem:[%s2711 + $0x10] sm:$0xff]
    %v2715 = vld [vmem:[%s2711 + $0x18] sm:$0xff]
    %v2716 = vld [vmem:[%s2711 + $0x20] sm:$0xff]
    %v2717 = vld [vmem:[%s2711 + $0x28] sm:$0xff]
    %v2718 = vld [vmem:[%s2711 + $0x30] sm:$0xff]
    %v2719 = vld [vmem:[%s2711 + $0x38] sm:$0xff]
    %v2720 = vld [vmem:[%s2711 + $0x40] sm:$0xff]
    %v2721 = vld [vmem:[%s2711 + $0x48] sm:$0xff]
    %v2722 = vld [vmem:[%s2711 + $0x50] sm:$0xff]
    %v2723 = vld [vmem:[%s2711 + $0x58] sm:$0xff]
    %v2724 = vld [vmem:[%s2711 + $0x60] sm:$0xff]
    %v2725 = vld [vmem:[%s2711 + $0x68] sm:$0xff]
    %v2726 = vld [vmem:[%s2711 + $0x70] sm:$0xff]
    %v2727 = vld [vmem:[%s2711 + $0x78] sm:$0xff]
    %v2728 = vmul.f32 %v332, %v2712
    %v2729 = vmul.f32 %v332, %v2713
    %v2730 = vmul.f32 %v332, %v2714
    %v2731 = vmul.f32 %v332, %v2715
    %v2732 = vmul.f32 %v332, %v2716
    %v2733 = vmul.f32 %v332, %v2717
    %v2734 = vmul.f32 %v332, %v2718
    %v2735 = vmul.f32 %v332, %v2719
    %v2736 = vmul.f32 %v332, %v2720
    %v2737 = vmul.f32 %v332, %v2721
    %v2738 = vmul.f32 %v332, %v2722
    %v2739 = vmul.f32 %v332, %v2723
    %v2740 = vmul.f32 %v332, %v2724
    %v2741 = vmul.f32 %v332, %v2725
    %v2742 = vmul.f32 %v332, %v2726
    %v2743 = vmul.f32 %v332, %v2727
    %v2744 = vadd.f32 %v2695, %v2728
    %v2745 = vadd.f32 %v2696, %v2729
    %v2746 = vadd.f32 %v2697, %v2730
    %v2747 = vadd.f32 %v2698, %v2731
    %v2748 = vadd.f32 %v2699, %v2732
    %v2749 = vadd.f32 %v2700, %v2733
    %v2750 = vadd.f32 %v2701, %v2734
    %v2751 = vadd.f32 %v2702, %v2735
    %v2752 = vadd.f32 %v2703, %v2736
    %v2753 = vadd.f32 %v2704, %v2737
    %v2754 = vadd.f32 %v2705, %v2738
    %v2755 = vadd.f32 %v2706, %v2739
    %v2756 = vadd.f32 %v2707, %v2740
    %v2757 = vadd.f32 %v2708, %v2741
    %v2758 = vadd.f32 %v2709, %v2742
    %v2759 = vadd.f32 %v2710, %v2743
    %s2760 = scalar_lea.vmem %s22, 1408
    %v2761 = vld [vmem:[%s2760] sm:$0xff]
    %v2762 = vld [vmem:[%s2760 + $0x8] sm:$0xff]
    %v2763 = vld [vmem:[%s2760 + $0x10] sm:$0xff]
    %v2764 = vld [vmem:[%s2760 + $0x18] sm:$0xff]
    %v2765 = vld [vmem:[%s2760 + $0x20] sm:$0xff]
    %v2766 = vld [vmem:[%s2760 + $0x28] sm:$0xff]
    %v2767 = vld [vmem:[%s2760 + $0x30] sm:$0xff]
    %v2768 = vld [vmem:[%s2760 + $0x38] sm:$0xff]
    %v2769 = vld [vmem:[%s2760 + $0x40] sm:$0xff]
    %v2770 = vld [vmem:[%s2760 + $0x48] sm:$0xff]
    %v2771 = vld [vmem:[%s2760 + $0x50] sm:$0xff]
    %v2772 = vld [vmem:[%s2760 + $0x58] sm:$0xff]
    %v2773 = vld [vmem:[%s2760 + $0x60] sm:$0xff]
    %v2774 = vld [vmem:[%s2760 + $0x68] sm:$0xff]
    %v2775 = vld [vmem:[%s2760 + $0x70] sm:$0xff]
    %v2776 = vld [vmem:[%s2760 + $0x78] sm:$0xff]
    %v2777 = vmul.f32 %v347, %v2761
    %v2778 = vmul.f32 %v347, %v2762
    %v2779 = vmul.f32 %v347, %v2763
    %v2780 = vmul.f32 %v347, %v2764
    %v2781 = vmul.f32 %v347, %v2765
    %v2782 = vmul.f32 %v347, %v2766
    %v2783 = vmul.f32 %v347, %v2767
    %v2784 = vmul.f32 %v347, %v2768
    %v2785 = vmul.f32 %v347, %v2769
    %v2786 = vmul.f32 %v347, %v2770
    %v2787 = vmul.f32 %v347, %v2771
    %v2788 = vmul.f32 %v347, %v2772
    %v2789 = vmul.f32 %v347, %v2773
    %v2790 = vmul.f32 %v347, %v2774
    %v2791 = vmul.f32 %v347, %v2775
    %v2792 = vmul.f32 %v347, %v2776
    %v2793 = vadd.f32 %v2744, %v2777
    %v2794 = vadd.f32 %v2745, %v2778
    %v2795 = vadd.f32 %v2746, %v2779
    %v2796 = vadd.f32 %v2747, %v2780
    %v2797 = vadd.f32 %v2748, %v2781
    %v2798 = vadd.f32 %v2749, %v2782
    %v2799 = vadd.f32 %v2750, %v2783
    %v2800 = vadd.f32 %v2751, %v2784
    %v2801 = vadd.f32 %v2752, %v2785
    %v2802 = vadd.f32 %v2753, %v2786
    %v2803 = vadd.f32 %v2754, %v2787
    %v2804 = vadd.f32 %v2755, %v2788
    %v2805 = vadd.f32 %v2756, %v2789
    %v2806 = vadd.f32 %v2757, %v2790
    %v2807 = vadd.f32 %v2758, %v2791
    %v2808 = vadd.f32 %v2759, %v2792
    %s2809 = scalar_lea.vmem %s22, 1536
    %v2810 = vld [vmem:[%s2809] sm:$0xff]
    %v2811 = vld [vmem:[%s2809 + $0x8] sm:$0xff]
    %v2812 = vld [vmem:[%s2809 + $0x10] sm:$0xff]
    %v2813 = vld [vmem:[%s2809 + $0x18] sm:$0xff]
    %v2814 = vld [vmem:[%s2809 + $0x20] sm:$0xff]
    %v2815 = vld [vmem:[%s2809 + $0x28] sm:$0xff]
    %v2816 = vld [vmem:[%s2809 + $0x30] sm:$0xff]
    %v2817 = vld [vmem:[%s2809 + $0x38] sm:$0xff]
    %v2818 = vld [vmem:[%s2809 + $0x40] sm:$0xff]
    %v2819 = vld [vmem:[%s2809 + $0x48] sm:$0xff]
    %v2820 = vld [vmem:[%s2809 + $0x50] sm:$0xff]
    %v2821 = vld [vmem:[%s2809 + $0x58] sm:$0xff]
    %v2822 = vld [vmem:[%s2809 + $0x60] sm:$0xff]
    %v2823 = vld [vmem:[%s2809 + $0x68] sm:$0xff]
    %v2824 = vld [vmem:[%s2809 + $0x70] sm:$0xff]
    %v2825 = vld [vmem:[%s2809 + $0x78] sm:$0xff]
    %v2826 = vmul.f32 %v362, %v2810
    %v2827 = vmul.f32 %v362, %v2811
    %v2828 = vmul.f32 %v362, %v2812
    %v2829 = vmul.f32 %v362, %v2813
    %v2830 = vmul.f32 %v362, %v2814
    %v2831 = vmul.f32 %v362, %v2815
    %v2832 = vmul.f32 %v362, %v2816
    %v2833 = vmul.f32 %v362, %v2817
    %v2834 = vmul.f32 %v362, %v2818
    %v2835 = vmul.f32 %v362, %v2819
    %v2836 = vmul.f32 %v362, %v2820
    %v2837 = vmul.f32 %v362, %v2821
    %v2838 = vmul.f32 %v362, %v2822
    %v2839 = vmul.f32 %v362, %v2823
    %v2840 = vmul.f32 %v362, %v2824
    %v2841 = vmul.f32 %v362, %v2825
    %v2842 = vadd.f32 %v2793, %v2826
    %v2843 = vadd.f32 %v2794, %v2827
    %v2844 = vadd.f32 %v2795, %v2828
    %v2845 = vadd.f32 %v2796, %v2829
    %v2846 = vadd.f32 %v2797, %v2830
    %v2847 = vadd.f32 %v2798, %v2831
    %v2848 = vadd.f32 %v2799, %v2832
    %v2849 = vadd.f32 %v2800, %v2833
    %v2850 = vadd.f32 %v2801, %v2834
    %v2851 = vadd.f32 %v2802, %v2835
    %v2852 = vadd.f32 %v2803, %v2836
    %v2853 = vadd.f32 %v2804, %v2837
    %v2854 = vadd.f32 %v2805, %v2838
    %v2855 = vadd.f32 %v2806, %v2839
    %v2856 = vadd.f32 %v2807, %v2840
    %v2857 = vadd.f32 %v2808, %v2841
    %s2858 = scalar_lea.vmem %s22, 1664
    %v2859 = vld [vmem:[%s2858] sm:$0xff]
    %v2860 = vld [vmem:[%s2858 + $0x8] sm:$0xff]
    %v2861 = vld [vmem:[%s2858 + $0x10] sm:$0xff]
    %v2862 = vld [vmem:[%s2858 + $0x18] sm:$0xff]
    %v2863 = vld [vmem:[%s2858 + $0x20] sm:$0xff]
    %v2864 = vld [vmem:[%s2858 + $0x28] sm:$0xff]
    %v2865 = vld [vmem:[%s2858 + $0x30] sm:$0xff]
    %v2866 = vld [vmem:[%s2858 + $0x38] sm:$0xff]
    %v2867 = vld [vmem:[%s2858 + $0x40] sm:$0xff]
    %v2868 = vld [vmem:[%s2858 + $0x48] sm:$0xff]
    %v2869 = vld [vmem:[%s2858 + $0x50] sm:$0xff]
    %v2870 = vld [vmem:[%s2858 + $0x58] sm:$0xff]
    %v2871 = vld [vmem:[%s2858 + $0x60] sm:$0xff]
    %v2872 = vld [vmem:[%s2858 + $0x68] sm:$0xff]
    %v2873 = vld [vmem:[%s2858 + $0x70] sm:$0xff]
    %v2874 = vld [vmem:[%s2858 + $0x78] sm:$0xff]
    %v2875 = vmul.f32 %v377, %v2859
    %v2876 = vmul.f32 %v377, %v2860
    %v2877 = vmul.f32 %v377, %v2861
    %v2878 = vmul.f32 %v377, %v2862
    %v2879 = vmul.f32 %v377, %v2863
    %v2880 = vmul.f32 %v377, %v2864
    %v2881 = vmul.f32 %v377, %v2865
    %v2882 = vmul.f32 %v377, %v2866
    %v2883 = vmul.f32 %v377, %v2867
    %v2884 = vmul.f32 %v377, %v2868
    %v2885 = vmul.f32 %v377, %v2869
    %v2886 = vmul.f32 %v377, %v2870
    %v2887 = vmul.f32 %v377, %v2871
    %v2888 = vmul.f32 %v377, %v2872
    %v2889 = vmul.f32 %v377, %v2873
    %v2890 = vmul.f32 %v377, %v2874
    %v2891 = vadd.f32 %v2842, %v2875
    %v2892 = vadd.f32 %v2843, %v2876
    %v2893 = vadd.f32 %v2844, %v2877
    %v2894 = vadd.f32 %v2845, %v2878
    %v2895 = vadd.f32 %v2846, %v2879
    %v2896 = vadd.f32 %v2847, %v2880
    %v2897 = vadd.f32 %v2848, %v2881
    %v2898 = vadd.f32 %v2849, %v2882
    %v2899 = vadd.f32 %v2850, %v2883
    %v2900 = vadd.f32 %v2851, %v2884
    %v2901 = vadd.f32 %v2852, %v2885
    %v2902 = vadd.f32 %v2853, %v2886
    %v2903 = vadd.f32 %v2854, %v2887
    %v2904 = vadd.f32 %v2855, %v2888
    %v2905 = vadd.f32 %v2856, %v2889
    %v2906 = vadd.f32 %v2857, %v2890
    %s2907 = scalar_lea.vmem %s22, 1792
    %v2908 = vld [vmem:[%s2907] sm:$0xff]
    %v2909 = vld [vmem:[%s2907 + $0x8] sm:$0xff]
    %v2910 = vld [vmem:[%s2907 + $0x10] sm:$0xff]
    %v2911 = vld [vmem:[%s2907 + $0x18] sm:$0xff]
    %v2912 = vld [vmem:[%s2907 + $0x20] sm:$0xff]
    %v2913 = vld [vmem:[%s2907 + $0x28] sm:$0xff]
    %v2914 = vld [vmem:[%s2907 + $0x30] sm:$0xff]
    %v2915 = vld [vmem:[%s2907 + $0x38] sm:$0xff]
    %v2916 = vld [vmem:[%s2907 + $0x40] sm:$0xff]
    %v2917 = vld [vmem:[%s2907 + $0x48] sm:$0xff]
    %v2918 = vld [vmem:[%s2907 + $0x50] sm:$0xff]
    %v2919 = vld [vmem:[%s2907 + $0x58] sm:$0xff]
    %v2920 = vld [vmem:[%s2907 + $0x60] sm:$0xff]
    %v2921 = vld [vmem:[%s2907 + $0x68] sm:$0xff]
    %v2922 = vld [vmem:[%s2907 + $0x70] sm:$0xff]
    %v2923 = vld [vmem:[%s2907 + $0x78] sm:$0xff]
    %v2924 = vmul.f32 %v392, %v2908
    %v2925 = vmul.f32 %v392, %v2909
    %v2926 = vmul.f32 %v392, %v2910
    %v2927 = vmul.f32 %v392, %v2911
    %v2928 = vmul.f32 %v392, %v2912
    %v2929 = vmul.f32 %v392, %v2913
    %v2930 = vmul.f32 %v392, %v2914
    %v2931 = vmul.f32 %v392, %v2915
    %v2932 = vmul.f32 %v392, %v2916
    %v2933 = vmul.f32 %v392, %v2917
    %v2934 = vmul.f32 %v392, %v2918
    %v2935 = vmul.f32 %v392, %v2919
    %v2936 = vmul.f32 %v392, %v2920
    %v2937 = vmul.f32 %v392, %v2921
    %v2938 = vmul.f32 %v392, %v2922
    %v2939 = vmul.f32 %v392, %v2923
    %v2940 = vadd.f32 %v2891, %v2924
    %v2941 = vadd.f32 %v2892, %v2925
    %v2942 = vadd.f32 %v2893, %v2926
    %v2943 = vadd.f32 %v2894, %v2927
    %v2944 = vadd.f32 %v2895, %v2928
    %v2945 = vadd.f32 %v2896, %v2929
    %v2946 = vadd.f32 %v2897, %v2930
    %v2947 = vadd.f32 %v2898, %v2931
    %v2948 = vadd.f32 %v2899, %v2932
    %v2949 = vadd.f32 %v2900, %v2933
    %v2950 = vadd.f32 %v2901, %v2934
    %v2951 = vadd.f32 %v2902, %v2935
    %v2952 = vadd.f32 %v2903, %v2936
    %v2953 = vadd.f32 %v2904, %v2937
    %v2954 = vadd.f32 %v2905, %v2938
    %v2955 = vadd.f32 %v2906, %v2939
    %s2956 = scalar_lea.vmem %s22, 1920
    %v2957 = vld [vmem:[%s2956] sm:$0xff]
    %v2958 = vld [vmem:[%s2956 + $0x8] sm:$0xff]
    %v2959 = vld [vmem:[%s2956 + $0x10] sm:$0xff]
    %v2960 = vld [vmem:[%s2956 + $0x18] sm:$0xff]
    %v2961 = vld [vmem:[%s2956 + $0x20] sm:$0xff]
    %v2962 = vld [vmem:[%s2956 + $0x28] sm:$0xff]
    %v2963 = vld [vmem:[%s2956 + $0x30] sm:$0xff]
    %v2964 = vld [vmem:[%s2956 + $0x38] sm:$0xff]
    %v2965 = vld [vmem:[%s2956 + $0x40] sm:$0xff]
    %v2966 = vld [vmem:[%s2956 + $0x48] sm:$0xff]
    %v2967 = vld [vmem:[%s2956 + $0x50] sm:$0xff]
    %v2968 = vld [vmem:[%s2956 + $0x58] sm:$0xff]
    %v2969 = vld [vmem:[%s2956 + $0x60] sm:$0xff]
    %v2970 = vld [vmem:[%s2956 + $0x68] sm:$0xff]
    %v2971 = vld [vmem:[%s2956 + $0x70] sm:$0xff]
    %v2972 = vld [vmem:[%s2956 + $0x78] sm:$0xff]
    %v2973 = vmul.f32 %v407, %v2957
    %v2974 = vmul.f32 %v407, %v2958
    %v2975 = vmul.f32 %v407, %v2959
    %v2976 = vmul.f32 %v407, %v2960
    %v2977 = vmul.f32 %v407, %v2961
    %v2978 = vmul.f32 %v407, %v2962
    %v2979 = vmul.f32 %v407, %v2963
    %v2980 = vmul.f32 %v407, %v2964
    %v2981 = vmul.f32 %v407, %v2965
    %v2982 = vmul.f32 %v407, %v2966
    %v2983 = vmul.f32 %v407, %v2967
    %v2984 = vmul.f32 %v407, %v2968
    %v2985 = vmul.f32 %v407, %v2969
    %v2986 = vmul.f32 %v407, %v2970
    %v2987 = vmul.f32 %v407, %v2971
    %v2988 = vmul.f32 %v407, %v2972
    %v2989 = vadd.f32 %v2940, %v2973
    %v2990 = vadd.f32 %v2941, %v2974
    %v2991 = vadd.f32 %v2942, %v2975
    %v2992 = vadd.f32 %v2943, %v2976
    %v2993 = vadd.f32 %v2944, %v2977
    %v2994 = vadd.f32 %v2945, %v2978
    %v2995 = vadd.f32 %v2946, %v2979
    %v2996 = vadd.f32 %v2947, %v2980
    %v2997 = vadd.f32 %v2948, %v2981
    %v2998 = vadd.f32 %v2949, %v2982
    %v2999 = vadd.f32 %v2950, %v2983
    %v3000 = vadd.f32 %v2951, %v2984
    %v3001 = vadd.f32 %v2952, %v2985
    %v3002 = vadd.f32 %v2953, %v2986
    %v3003 = vadd.f32 %v2954, %v2987
    %v3004 = vadd.f32 %v2955, %v2988
    %s3005 = scalar_lea.vmem %s22, 2048
    %v3006 = vld [vmem:[%s3005] sm:$0xff]
    %v3007 = vld [vmem:[%s3005 + $0x8] sm:$0xff]
    %v3008 = vld [vmem:[%s3005 + $0x10] sm:$0xff]
    %v3009 = vld [vmem:[%s3005 + $0x18] sm:$0xff]
    %v3010 = vld [vmem:[%s3005 + $0x20] sm:$0xff]
    %v3011 = vld [vmem:[%s3005 + $0x28] sm:$0xff]
    %v3012 = vld [vmem:[%s3005 + $0x30] sm:$0xff]
    %v3013 = vld [vmem:[%s3005 + $0x38] sm:$0xff]
    %v3014 = vld [vmem:[%s3005 + $0x40] sm:$0xff]
    %v3015 = vld [vmem:[%s3005 + $0x48] sm:$0xff]
    %v3016 = vld [vmem:[%s3005 + $0x50] sm:$0xff]
    %v3017 = vld [vmem:[%s3005 + $0x58] sm:$0xff]
    %v3018 = vld [vmem:[%s3005 + $0x60] sm:$0xff]
    %v3019 = vld [vmem:[%s3005 + $0x68] sm:$0xff]
    %v3020 = vld [vmem:[%s3005 + $0x70] sm:$0xff]
    %v3021 = vld [vmem:[%s3005 + $0x78] sm:$0xff]
    %v3022 = vmul.f32 %v422, %v3006
    %v3023 = vmul.f32 %v422, %v3007
    %v3024 = vmul.f32 %v422, %v3008
    %v3025 = vmul.f32 %v422, %v3009
    %v3026 = vmul.f32 %v422, %v3010
    %v3027 = vmul.f32 %v422, %v3011
    %v3028 = vmul.f32 %v422, %v3012
    %v3029 = vmul.f32 %v422, %v3013
    %v3030 = vmul.f32 %v422, %v3014
    %v3031 = vmul.f32 %v422, %v3015
    %v3032 = vmul.f32 %v422, %v3016
    %v3033 = vmul.f32 %v422, %v3017
    %v3034 = vmul.f32 %v422, %v3018
    %v3035 = vmul.f32 %v422, %v3019
    %v3036 = vmul.f32 %v422, %v3020
    %v3037 = vmul.f32 %v422, %v3021
    %v3038 = vadd.f32 %v2989, %v3022
    %v3039 = vadd.f32 %v2990, %v3023
    %v3040 = vadd.f32 %v2991, %v3024
    %v3041 = vadd.f32 %v2992, %v3025
    %v3042 = vadd.f32 %v2993, %v3026
    %v3043 = vadd.f32 %v2994, %v3027
    %v3044 = vadd.f32 %v2995, %v3028
    %v3045 = vadd.f32 %v2996, %v3029
    %v3046 = vadd.f32 %v2997, %v3030
    %v3047 = vadd.f32 %v2998, %v3031
    %v3048 = vadd.f32 %v2999, %v3032
    %v3049 = vadd.f32 %v3000, %v3033
    %v3050 = vadd.f32 %v3001, %v3034
    %v3051 = vadd.f32 %v3002, %v3035
    %v3052 = vadd.f32 %v3003, %v3036
    %v3053 = vadd.f32 %v3004, %v3037
    %s3054 = scalar_lea.vmem %s22, 2176
    %v3055 = vld [vmem:[%s3054] sm:$0xff]
    %v3056 = vld [vmem:[%s3054 + $0x8] sm:$0xff]
    %v3057 = vld [vmem:[%s3054 + $0x10] sm:$0xff]
    %v3058 = vld [vmem:[%s3054 + $0x18] sm:$0xff]
    %v3059 = vld [vmem:[%s3054 + $0x20] sm:$0xff]
    %v3060 = vld [vmem:[%s3054 + $0x28] sm:$0xff]
    %v3061 = vld [vmem:[%s3054 + $0x30] sm:$0xff]
    %v3062 = vld [vmem:[%s3054 + $0x38] sm:$0xff]
    %v3063 = vld [vmem:[%s3054 + $0x40] sm:$0xff]
    %v3064 = vld [vmem:[%s3054 + $0x48] sm:$0xff]
    %v3065 = vld [vmem:[%s3054 + $0x50] sm:$0xff]
    %v3066 = vld [vmem:[%s3054 + $0x58] sm:$0xff]
    %v3067 = vld [vmem:[%s3054 + $0x60] sm:$0xff]
    %v3068 = vld [vmem:[%s3054 + $0x68] sm:$0xff]
    %v3069 = vld [vmem:[%s3054 + $0x70] sm:$0xff]
    %v3070 = vld [vmem:[%s3054 + $0x78] sm:$0xff]
    %v3071 = vmul.f32 %v437, %v3055
    %v3072 = vmul.f32 %v437, %v3056
    %v3073 = vmul.f32 %v437, %v3057
    %v3074 = vmul.f32 %v437, %v3058
    %v3075 = vmul.f32 %v437, %v3059
    %v3076 = vmul.f32 %v437, %v3060
    %v3077 = vmul.f32 %v437, %v3061
    %v3078 = vmul.f32 %v437, %v3062
    %v3079 = vmul.f32 %v437, %v3063
    %v3080 = vmul.f32 %v437, %v3064
    %v3081 = vmul.f32 %v437, %v3065
    %v3082 = vmul.f32 %v437, %v3066
    %v3083 = vmul.f32 %v437, %v3067
    %v3084 = vmul.f32 %v437, %v3068
    %v3085 = vmul.f32 %v437, %v3069
    %v3086 = vmul.f32 %v437, %v3070
    %v3087 = vadd.f32 %v3038, %v3071
    %v3088 = vadd.f32 %v3039, %v3072
    %v3089 = vadd.f32 %v3040, %v3073
    %v3090 = vadd.f32 %v3041, %v3074
    %v3091 = vadd.f32 %v3042, %v3075
    %v3092 = vadd.f32 %v3043, %v3076
    %v3093 = vadd.f32 %v3044, %v3077
    %v3094 = vadd.f32 %v3045, %v3078
    %v3095 = vadd.f32 %v3046, %v3079
    %v3096 = vadd.f32 %v3047, %v3080
    %v3097 = vadd.f32 %v3048, %v3081
    %v3098 = vadd.f32 %v3049, %v3082
    %v3099 = vadd.f32 %v3050, %v3083
    %v3100 = vadd.f32 %v3051, %v3084
    %v3101 = vadd.f32 %v3052, %v3085
    %v3102 = vadd.f32 %v3053, %v3086
    %v3103 = vstv %s166
    %v3104 = vmul.f32 %v3103, %v3087
    %v3105 = vmul.f32 %v3103, %v3088
    %v3106 = vmul.f32 %v3103, %v3089
    %v3107 = vmul.f32 %v3103, %v3090
    %v3108 = vmul.f32 %v3103, %v3091
    %v3109 = vmul.f32 %v3103, %v3092
    %v3110 = vmul.f32 %v3103, %v3093
    %v3111 = vmul.f32 %v3103, %v3094
    %v3112 = vmul.f32 %v3103, %v3095
    %v3113 = vmul.f32 %v3103, %v3096
    %v3114 = vmul.f32 %v3103, %v3097
    %v3115 = vmul.f32 %v3103, %v3098
    %v3116 = vmul.f32 %v3103, %v3099
    %v3117 = vmul.f32 %v3103, %v3100
    %v3118 = vmul.f32 %v3103, %v3101
    %v3119 = vmul.f32 %v3103, %v3102
    %v3120 = vadd.f32 %v2206, %v3104
    %v3121 = vadd.f32 %v2207, %v3105
    %v3122 = vadd.f32 %v2208, %v3106
    %v3123 = vadd.f32 %v2209, %v3107
    %v3124 = vadd.f32 %v2210, %v3108
    %v3125 = vadd.f32 %v2211, %v3109
    %v3126 = vadd.f32 %v2212, %v3110
    %v3127 = vadd.f32 %v2213, %v3111
    %v3128 = vadd.f32 %v2214, %v3112
    %v3129 = vadd.f32 %v2215, %v3113
    %v3130 = vadd.f32 %v2216, %v3114
    %v3131 = vadd.f32 %v2217, %v3115
    %v3132 = vadd.f32 %v2218, %v3116
    %v3133 = vadd.f32 %v2219, %v3117
    %v3134 = vadd.f32 %v2220, %v3118
    %v3135 = vadd.f32 %v2221, %v3119
    %v3136 = vld [vmem:[%s21] sm:$0x1]
    %v3137 = vld [vmem:[%s23] sm:$0xff]
    %v3138 = vld [vmem:[%s23 + $0x8] sm:$0xff]
    %v3139 = vld [vmem:[%s23 + $0x10] sm:$0x3]
    %v3141 = vsel %vm466, %v3139, 0
    %3143 = vmatprep.subr.mxu0 0.0
    %3144 = vmatpush1.msra.mxu0 %v3137
    %3145 = vmatprep.subr.mxu0 0.0
    %3146 = vmatpush1.msra.mxu0 %v3138
    %3147 = vmatprep.subr.mxu0 0.0
    %3148 = vmatpush1.msra.mxu0 %v3141
    %3149 = vmatprep.subr.mxu0 0.0
    %3150 = vmatpush1.msra.mxu0 0.0
    %3151 = vmatprep.subr.mxu0 0.0
    %3152 = vmatpush1.msra.mxu0 0.0
    %3153 = vmatprep.subr.mxu0 0.0
    %3154 = vmatpush1.msra.mxu0 0.0
    %3155 = vmatprep.subr.mxu0 0.0
    %3156 = vmatpush1.msra.mxu0 0.0
    %3157 = vmatprep.subr.mxu0 0.0
    %3158 = vmatpush1.msra.mxu0 0.0
    %3159 = vmatprep.subr.mxu0 0.0
    %3160 = vmatpush1.msra.mxu0 0.0
    %3161 = vmatprep.subr.mxu0 0.0
    %3162 = vmatpush1.msra.mxu0 0.0
    %3163 = vmatprep.subr.mxu0 0.0
    %3164 = vmatpush1.msra.mxu0 0.0
    %3165 = vmatprep.subr.mxu0 0.0
    %3166 = vmatpush1.msra.mxu0 0.0
    %3167 = vmatprep.subr.mxu0 0.0
    %3168 = vmatpush1.msra.mxu0 0.0
    %3169 = vmatprep.subr.mxu0 0.0
    %3170 = vmatpush1.msra.mxu0 0.0
    %3171 = vmatprep.subr.mxu0 0.0
    %3172 = vmatpush1.msra.mxu0 0.0
    %3173 = vmatprep.subr.mxu0 0.0
    %3174 = vmatpush1.msra.mxu0 0.0
    %3175 = vmatprep.subr.mxu0 0.0
    %3176 = vmatpush1.msra.mxu0 0.0
    %3177 = vmatprep.subr.mxu0 0.0
    %3178 = vmatpush1.msra.mxu0 0.0
    %3179 = vmatprep.subr.mxu0 0.0
    %3180 = vmatpush1.msra.mxu0 0.0
    %3181 = vmatprep.subr.mxu0 0.0
    %3182 = vmatpush1.msra.mxu0 0.0
    %3183 = vmatprep.subr.mxu0 0.0
    %3184 = vmatpush1.msra.mxu0 0.0
    %3185 = vmatprep.subr.mxu0 0.0
    %3186 = vmatpush1.msra.mxu0 0.0
    %3187 = vmatprep.subr.mxu0 0.0
    %3188 = vmatpush1.msra.mxu0 0.0
    %3189 = vmatprep.subr.mxu0 0.0
    %3190 = vmatpush1.msra.mxu0 0.0
    %3191 = vmatprep.subr.mxu0 0.0
    %3192 = vmatpush1.msra.mxu0 0.0
    %3193 = vmatprep.subr.mxu0 0.0
    %3194 = vmatpush1.msra.mxu0 0.0
    %3195 = vmatprep.subr.mxu0 0.0
    %3196 = vmatpush1.msra.mxu0 0.0
    %3197 = vmatprep.subr.mxu0 0.0
    %3198 = vmatpush1.msra.mxu0 0.0
    %3199 = vmatprep.subr.mxu0 0.0
    %3200 = vmatpush1.msra.mxu0 0.0
    %3201 = vmatprep.subr.mxu0 0.0
    %3202 = vmatpush1.msra.mxu0 0.0
    %3203 = vmatprep.subr.mxu0 0.0
    %3204 = vmatpush1.msra.mxu0 0.0
    %3205 = vmatprep.subr.mxu0 0.0
    %3206 = vmatpush1.msra.mxu0 0.0
    %3207 = vmatprep.mubr.f32.mxu0 0.0
    %3208 = vmatmul.mubr.f32.gmra.mrb[0].mxu0 %v464
    %v3209 = vpop.f32.mrb[0].mxu0
    %v3210 = vadd.f32 0.0, %v3209
    %v3211 = vpop.f32.mrb[0].mxu0
    %3212 = vdwg.mxu0
    %v3213 = vmul.f32 %v3103, %v3210
    %v3214 = vadd.f32 %v3136, %v3213
    %v3216 = vlaneseq
    %v3217 = vshrl.u32 %v3216, 7
    %v3218 = vsub.s32 0, %v3217
    %v3219 = vrot.slane %v3214, %v3218
    %3221 = vmatprep.subr.mxu0 0.0
    %3222 = vmatpush1.msra.mxu0 %v3120
    %3223 = vmatprep.subr.mxu0 0.0
    %3224 = vmatpush1.msra.mxu0 %v3121
    %3225 = vmatprep.subr.mxu0 0.0
    %3226 = vmatpush1.msra.mxu0 %v3122
    %3227 = vmatprep.subr.mxu0 0.0
    %3228 = vmatpush1.msra.mxu0 %v3123
    %3229 = vmatprep.subr.mxu0 0.0
    %3230 = vmatpush1.msra.mxu0 %v3124
    %3231 = vmatprep.subr.mxu0 0.0
    %3232 = vmatpush1.msra.mxu0 %v3125
    %3233 = vmatprep.subr.mxu0 0.0
    %3234 = vmatpush1.msra.mxu0 %v3126
    %3235 = vmatprep.subr.mxu0 0.0
    %3236 = vmatpush1.msra.mxu0 %v3127
    %3237 = vmatprep.subr.mxu0 0.0
    %3238 = vmatpush1.msra.mxu0 %v3128
    %3239 = vmatprep.subr.mxu0 0.0
    %3240 = vmatpush1.msra.mxu0 %v3129
    %3241 = vmatprep.subr.mxu0 0.0
    %3242 = vmatpush1.msra.mxu0 %v3130
    %3243 = vmatprep.subr.mxu0 0.0
    %3244 = vmatpush1.msra.mxu0 %v3131
    %3245 = vmatprep.subr.mxu0 0.0
    %3246 = vmatpush1.msra.mxu0 %v3132
    %3247 = vmatprep.subr.mxu0 0.0
    %3248 = vmatpush1.msra.mxu0 %v3133
    %3249 = vmatprep.subr.mxu0 0.0
    %3250 = vmatpush1.msra.mxu0 %v3134
    %3251 = vmatprep.subr.mxu0 0.0
    %3252 = vmatpush1.msra.mxu0 %v3135
    %3253 = vmatprep.subr.mxu0 0.0
    %3254 = vmatpush1.msra.mxu0 0.0
    %3255 = vmatprep.subr.mxu0 0.0
    %3256 = vmatpush1.msra.mxu0 0.0
    %3257 = vmatprep.subr.mxu0 0.0
    %3258 = vmatpush1.msra.mxu0 0.0
    %3259 = vmatprep.subr.mxu0 0.0
    %3260 = vmatpush1.msra.mxu0 0.0
    %3261 = vmatprep.subr.mxu0 0.0
    %3262 = vmatpush1.msra.mxu0 0.0
    %3263 = vmatprep.subr.mxu0 0.0
    %3264 = vmatpush1.msra.mxu0 0.0
    %3265 = vmatprep.subr.mxu0 0.0
    %3266 = vmatpush1.msra.mxu0 0.0
    %3267 = vmatprep.subr.mxu0 0.0
    %3268 = vmatpush1.msra.mxu0 0.0
    %3269 = vmatprep.subr.mxu0 0.0
    %3270 = vmatpush1.msra.mxu0 0.0
    %3271 = vmatprep.subr.mxu0 0.0
    %3272 = vmatpush1.msra.mxu0 0.0
    %3273 = vmatprep.subr.mxu0 0.0
    %3274 = vmatpush1.msra.mxu0 0.0
    %3275 = vmatprep.subr.mxu0 0.0
    %3276 = vmatpush1.msra.mxu0 0.0
    %3277 = vmatprep.subr.mxu0 0.0
    %3278 = vmatpush1.msra.mxu0 0.0
    %3279 = vmatprep.subr.mxu0 0.0
    %3280 = vmatpush1.msra.mxu0 0.0
    %3281 = vmatprep.subr.mxu0 0.0
    %3282 = vmatpush1.msra.mxu0 0.0
    %3283 = vmatprep.subr.mxu0 0.0
    %3284 = vmatpush1.msra.mxu0 0.0
    %3285 = vmatprep.mubr.f32.mxu0 0.0
    %3286 = vmatmul.mubr.f32.gmra.mrb[0].mxu0 %v2204
    %v3287 = vpop.f32.mrb[0].mxu0
    %v3288 = vadd.f32 %v3219, %v3287
    %v3289 = vpop.f32.mrb[0].mxu0
    %3290 = vmatprep.mubr.f32.mxu0 0.0
    %3291 = vmatmul.mubr.f32.gmra.mrb[0].mxu0 %v2205
    %v3292 = vpop.f32.mrb[0].mxu0
    %v3293 = vadd.f32 %v3219, %v3292
    %v3294 = vpop.f32.mrb[0].mxu0
    %3295 = vdwg.mxu0
    %v3296 = vadd.f32 %v1774, %v3288
    %v3297 = vadd.f32 %v1775, %v3293
    %v3298 = vld [vmem:[%s6] sm:$0x1]
    %v3299 = vld [vmem:[%s7] sm:$0x1]
    %v3300 = vsel %vm116, %v3296, 0.0
    %3301 = vadd.xlane.f32.xlu0 %v3300
    %v3302 = vpop.xlane.xlu0 %3301
    %v3303 = vsel %vm116, %v3297, 0.0
    %3304 = vadd.xlane.f32.xlu0 %v3303
    %v3305 = vpop.xlane.xlu0 %3304
    %v3306 = vmul.f32 %v3302, %v123
    %v3307 = vmul.f32 %v3305, %v123
    %v3308 = vsub.f32 %v3296, %v3306
    %v3309 = vsub.f32 %v3297, %v3307
    %v3310 = vmul.f32 %v3308, %v3308
    %v3311 = vmul.f32 %v3309, %v3309
    %v3312 = vsel %vm116, %v3310, 0.0
    %3313 = vadd.xlane.f32.xlu0 %v3312
    %v3314 = vpop.xlane.xlu0 %3313
    %v3315 = vsel %vm116, %v3311, 0.0
    %3316 = vadd.xlane.f32.xlu0 %v3315
    %v3317 = vpop.xlane.xlu0 %3316
    %v3318 = vmul.f32 %v3314, %v123
    %v3319 = vmul.f32 %v3317, %v123
    %v3320 = vadd.f32 %v3318, 1e-05
    %v3321 = vadd.f32 %v3319, 1e-05
    %v3322 = vrsqrt.pop %v3320
    %v3323 = vrsqrt.pop %v3321
    %v3324 = vmul.f32 %v3308, %v3322
    %v3325 = vmul.f32 %v3309, %v3323
    %v3327 = vlaneseq
    %v3328 = vshrl.u32 %v3327, 7
    %v3329 = vsub.s32 0, %v3328
    %v3330 = vrot.slane %v3298, %v3329
    %v3332 = vmul.f32 %v3324, %v3330
    %v3333 = vmul.f32 %v3325, %v3330
    %v3335 = vlaneseq
    %v3336 = vshrl.u32 %v3335, 7
    %v3337 = vsub.s32 0, %v3336
    %v3338 = vrot.slane %v3299, %v3337
    %v3340 = vadd.f32 %v3332, %v3338
    %v3341 = vadd.f32 %v3333, %v3338
    %3342 = vst.msk [vmem:[#allocation7] sm:$0xff] %vm116, %v3340
    %3343 = vst.msk [vmem:[#allocation7 + $0x8] sm:$0xff] %vm116, %v3341
    // Predicated region
    $region118: #{transformer_subspace_forward.1} parent=1 // pred_check
      _
    $region119: #{transformer_subspace_forward.1} parent=1 // pred_check_branch
      %3345 = sbr.rel (0) target = $region121
    $region120: #{transformer_subspace_forward.1} parent=1 // pred_region
      %s3347 = ssub.s32 256, 256
      %3348 = vsyncadd [#allocation3], %s3347
      %s3349 = sshll.u32 [#allocation7], 4
      %s3350 = int_to_ptr.vmem [resolvable:$true] %s3349
      %3355 = dma.vmem_to_hbm [thread:$0]  %s3350, 256, %s27, [#allocation3], 128, 128, 8
    $region121: #{transformer_subspace_forward.1} parent=1 // pred_fallthru
      _
    // Predicated region
    $region122: #{transformer_subspace_forward.1} parent=1 // pred_check
      _
    $region123: #{transformer_subspace_forward.1} parent=1 // pred_check_branch
      %3357 = sbr.rel (0) target = $region125
    $region124: #{transformer_subspace_forward.1} parent=1 // pred_region
      %3358 = dma.done [#allocation3], 256
    $region125: #{transformer_subspace_forward.1} parent=1 // pred_fallthru
      _
    %3359 = vsyncpa [#allocation3], 1
    %3360 = vsyncpa [#allocation4], 1
    %3361 = vsyncpa [#allocation6], 1

</llo_original>
